<compile_context>
chip_gen: v5e
topology: v5e:2x2
jax: 0.10.0
libtpu: 0.0.40
codegen_flags: <defaults>
</compile_context>

<pallas_src>
import functools

import jax
import jax.numpy as jnp
from jax.experimental import pallas as pl
from jax.experimental.pallas import tpu as pltpu


def _round_up(v, m):
    return (v + m - 1) // m * m


# ----------------------------- Pallas kernel ------------------------------- #
def _lstm_fc_kernel(x_ref,       # (T*Bp, Dp)   time-major, batch/feature padded
                    wih0_ref,    # (Dp, 4Hp)    layer-0 input->gates (padded)
                    whh0_ref,    # (Hp, 4Hp)    layer-0 hidden->gates (padded)
                    b0_ref,      # (1, 4Hp)     layer-0 combined bias (padded)
                    w1_ref,      # (2Hp, 4Hp)   fused layer-1 [wih1; whh1] (padded)
                    b1_ref,      # (1, 4Hp)     layer-1 combined bias (padded)
                    fcw_ref,     # (Hp, Op)     fc weight (padded)
                    fcb_ref,     # (1, Op)      fc bias (padded)
                    out_ref,     # (Bp, Op)
                    *, T, Bp, Hp):
    # Hoisted layer-0 input projection: ONE big MXU matmul over all timesteps
    # (removes T tiny matmuls from the serial h->gates->h dependency chain).
    xp = (jnp.dot(x_ref[...], wih0_ref[...], preferred_element_type=jnp.float32)
          + b0_ref[...])                                        # (T*Bp, 4Hp)

    # Weights / bias broadcasts hoisted once; they stay resident for the loop.
    whh0 = whh0_ref[...]                                        # (Hp, 4Hp)
    w1 = w1_ref[...]                                            # (2Hp, 4Hp)
    b1 = jnp.broadcast_to(b1_ref[...], (Bp, 4 * Hp))            # (Bp, 4Hp)

    def gate_act(gates, c):
        # PyTorch gate order i, f, g, o; each gate is a whole 128-lane group.
        i = jax.nn.sigmoid(gates[:, 0 * Hp:1 * Hp])
        f = jax.nn.sigmoid(gates[:, 1 * Hp:2 * Hp])
        g = jnp.tanh(gates[:, 2 * Hp:3 * Hp])
        o = jax.nn.sigmoid(gates[:, 3 * Hp:4 * Hp])
        c_new = f * c + i * g
        h_new = o * jnp.tanh(c_new)
        return h_new, c_new

    z = jnp.zeros((Bp, Hp), jnp.float32)
    h0, c0, h1, c1 = z, z, z, z

    # Fully unrolled static time loop (T is a compile-time constant).
    for t in range(T):
        # Layer 0: input projection precomputed -> only the recurrent matmul here.
        g0 = xp[t * Bp:(t + 1) * Bp, :] + jnp.dot(
            h0, whh0, preferred_element_type=jnp.float32)
        h0, c0 = gate_act(g0, c0)
        # Layer 1: single fused (Bp, 2Hp) @ (2Hp, 4Hp) matmul per step.
        g1 = jnp.dot(jnp.concatenate([h0, h1], axis=1), w1,
                     preferred_element_type=jnp.float32) + b1
        h1, c1 = gate_act(g1, c1)

    # fc(out[:, -1, :]) == fc(top-layer h at the last timestep).
    out_ref[...] = (jnp.dot(h1, fcw_ref[...], preferred_element_type=jnp.float32)
                    + fcb_ref[...])


# ------------------------------ Wrapper ------------------------------------ #
def lstm_predictor_forward(x, params):
    """x: (B, T, D) float32 (batch_first, like the torch module). Returns (B, O)."""
    B, T, D = x.shape
    H = params["whh0"].shape[1]
    O = params["fc_w"].shape[0]

    # Padded sizes: sublane-full batch, lane-group-aligned gates/output.
    Bp = _round_up(B, 8)
    Dp = _round_up(D, 8)
    Hp = _round_up(H, 128)
    Op = _round_up(O, 128)

    # Time-major, batch- and feature-padded, flattened input: (T*Bp, Dp).
    x_tbd = jnp.transpose(x, (1, 0, 2))                               # (T, B, D)
    x_tbd = jnp.pad(x_tbd, ((0, 0), (0, Bp - B), (0, Dp - D)))
    x2d = x_tbd.reshape(T * Bp, Dp)

    def pad_gate_cols(w4h):
        # (rows, 4H) -> (rows, 4Hp): each gate block zero-padded to Hp lanes.
        blocks = [jnp.pad(w4h[:, g * H:(g + 1) * H], ((0, 0), (0, Hp - H)))
                  for g in range(4)]
        return jnp.concatenate(blocks, axis=1)

    # Layer 0 (pre-transposed, zero-padded; padded lanes never perturb valid ones).
    wih0_p = pad_gate_cols(jnp.pad(params["wih0"].T, ((0, Dp - D), (0, 0))))  # (Dp, 4Hp)
    whh0_p = pad_gate_cols(jnp.pad(params["whh0"].T, ((0, Hp - H), (0, 0))))  # (Hp, 4Hp)
    b0_p = pad_gate_cols((params["bih0"] + params["bhh0"]).reshape(1, 4 * H))  # (1, 4Hp)

    # Layer 1: fuse [wih1; whh1] so concat([h0, h1]) needs one matmul per step.
    wih1_t = jnp.pad(params["wih1"].T, ((0, Hp - H), (0, 0)))                  # (Hp, 4H)
    whh1_t = jnp.pad(params["whh1"].T, ((0, Hp - H), (0, 0)))                  # (Hp, 4H)
    w1_p = pad_gate_cols(jnp.concatenate([wih1_t, whh1_t], axis=0))            # (2Hp, 4Hp)
    b1_p = pad_gate_cols((params["bih1"] + params["bhh1"]).reshape(1, 4 * H))  # (1, 4Hp)

    # FC head (lane-dense padded output -> unmasked store; sliced back below).
    fcw_p = jnp.pad(params["fc_w"].T, ((0, Hp - H), (0, Op - O)))              # (Hp, Op)
    fcb_p = jnp.pad(params["fc_b"].reshape(1, O), ((0, 0), (0, Op - O)))       # (1, Op)

    vmem = pl.BlockSpec(memory_space=pltpu.MemorySpace.VMEM)
    out_p = pl.pallas_call(
        functools.partial(_lstm_fc_kernel, T=T, Bp=Bp, Hp=Hp),
        out_shape=jax.ShapeDtypeStruct((Bp, Op), jnp.float32),
        in_specs=[vmem] * 8,
        out_specs=vmem,
    )(x2d, wih0_p, whh0_p, b0_p, w1_p, b1_p, fcw_p, fcb_p)
    # TODO(synk): for large H (v7x 64 MiB VMEM) cast MXU operands to bf16 and/or
    # tile the 4H dim with a BlockSpec grid; for long T, tile T with an
    # "arbitrary" grid axis and carry h/c in VMEM scratch instead of holding x
    # resident; for large B on v7x, add a "parallel" batch grid axis for 2 TCs.
    return out_p[:B, :O]


# --------------------------- Parameter init --------------------------------- #
def init_params(key, input_dim, hidden_dim, output_dim):
    """Deterministic init mirroring nn.LSTM / nn.Linear shapes (U(-1/sqrt(H), 1/sqrt(H)))."""
    H = hidden_dim
    k = 1.0 / jnp.sqrt(jnp.float32(H))
    keys = jax.random.split(key, 10)

    def u(kk, shape):
        return jax.random.uniform(kk, shape, jnp.float32, -k, k)

    return {
        # layer 0
        "wih0": u(keys[0], (4 * H, input_dim)),
        "whh0": u(keys[1], (4 * H, H)),
        "bih0": u(keys[2], (4 * H,)),
        "bhh0": u(keys[3], (4 * H,)),
        # layer 1
        "wih1": u(keys[4], (4 * H, H)),
        "whh1": u(keys[5], (4 * H, H)),
        "bih1": u(keys[6], (4 * H,)),
        "bhh1": u(keys[7], (4 * H,)),
        # fc
        "fc_w": u(keys[8], (output_dim, H)),
        "fc_b": u(keys[9], (output_dim,)),
    }


# ------------------------- Pure-JAX reference ------------------------------- #
def reference_forward(x, params):
    B, T, D = x.shape
    H = params["whh0"].shape[1]

    def cell(x_t, h, c, wih, whh, bih, bhh):
        g = x_t @ wih.T + bih + h @ whh.T + bhh
        i = jax.nn.sigmoid(g[:, 0 * H:1 * H])
        f = jax.nn.sigmoid(g[:, 1 * H:2 * H])
        gg = jnp.tanh(g[:, 2 * H:3 * H])
        o = jax.nn.sigmoid(g[:, 3 * H:4 * H])
        c = f * c + i * gg
        h = o * jnp.tanh(c)
        return h, c

    h0 = c0 = h1 = c1 = jnp.zeros((B, H), jnp.float32)
    for t in range(T):
        h0, c0 = cell(x[:, t, :], h0, c0, params["wih0"], params["whh0"],
                      params["bih0"], params["bhh0"])
        h1, c1 = cell(h0, h1, c1, params["wih1"], params["whh1"],
                      params["bih1"], params["bhh1"])
    return h1 @ params["fc_w"].T + params["fc_b"]


# --------------------------------- Main -------------------------------------- #
if __name__ == "__main__":
    # Small shapes consistent with the module:
    #   input_dim=4 features, hidden_dim=32, num_layers=2, output_dim=1,
    #   batch=2, sequence length=8.
    B, T, D, H, O = 2, 8, 4, 32, 1

    key = jax.random.PRNGKey(0)
    k_x, k_p = jax.random.split(key)
    x = jax.random.normal(k_x, (B, T, D), jnp.float32)
    params = init_params(k_p, D, H, O)

    out = lstm_predictor_forward(x, params)
    out = jax.block_until_ready(out)

    ref = reference_forward(x, params)
    assert out.shape == (B, O)
    assert jnp.allclose(out, ref, atol=1e-5, rtol=1e-5), (out, ref)

    print("KERNEL_OK")
</pallas_src>

<mosaic_0001>
module attributes {stable_mosaic.version = 11 : i64} {
  func.func @_lstm_fc_kernel(%arg0: memref<64x8xf32, #tpu.memory_space<vmem>>, %arg1: memref<8x512xf32, #tpu.memory_space<vmem>>, %arg2: memref<128x512xf32, #tpu.memory_space<vmem>>, %arg3: memref<1x512xf32, #tpu.memory_space<vmem>>, %arg4: memref<256x512xf32, #tpu.memory_space<vmem>>, %arg5: memref<1x512xf32, #tpu.memory_space<vmem>>, %arg6: memref<128x128xf32, #tpu.memory_space<vmem>>, %arg7: memref<1x128xf32, #tpu.memory_space<vmem>>, %arg8: memref<8x128xf32, #tpu.memory_space<vmem>>) attributes {dimension_semantics = [], scalar_prefetch = 0 : i64, scratch_operands = 0 : i64, tpu.core_type = #tpu.core_type<tc>} {
    %c0 = arith.constant 0 : index
    %c0_0 = arith.constant 0 : index
    %0 = vector.load %arg0[%c0, %c0_0] : memref<64x8xf32, #tpu.memory_space<vmem>>, vector<64x8xf32>
    %c0_1 = arith.constant 0 : index
    %c0_2 = arith.constant 0 : index
    %1 = vector.load %arg1[%c0_1, %c0_2] : memref<8x512xf32, #tpu.memory_space<vmem>>, vector<8x512xf32>
    %cst = arith.constant dense<0.000000e+00> : vector<64x512xf32>
    %2 = tpu.matmul %0, %1, %cst {dimension_numbers = #tpu.dot_dimension_numbers<[1], [0], [0], [1], [0, 0, 1, 1], [], []>} : vector<64x8xf32>, vector<8x512xf32>, vector<64x512xf32> -> vector<64x512xf32>
    %c0_3 = arith.constant 0 : index
    %c0_4 = arith.constant 0 : index
    %3 = vector.load %arg3[%c0_3, %c0_4] : memref<1x512xf32, #tpu.memory_space<vmem>>, vector<1x512xf32>
    %4 = vector.broadcast %3 : vector<1x512xf32> to vector<64x512xf32>
    %5 = arith.addf %2, %4 : vector<64x512xf32>
    %c0_5 = arith.constant 0 : index
    %c0_6 = arith.constant 0 : index
    %6 = vector.load %arg2[%c0_5, %c0_6] : memref<128x512xf32, #tpu.memory_space<vmem>>, vector<128x512xf32>
    %c0_7 = arith.constant 0 : index
    %c0_8 = arith.constant 0 : index
    %7 = vector.load %arg4[%c0_7, %c0_8] : memref<256x512xf32, #tpu.memory_space<vmem>>, vector<256x512xf32>
    %c0_9 = arith.constant 0 : index
    %c0_10 = arith.constant 0 : index
    %8 = vector.load %arg5[%c0_9, %c0_10] : memref<1x512xf32, #tpu.memory_space<vmem>>, vector<1x512xf32>
    %9 = vector.shape_cast %8 : vector<1x512xf32> to vector<1x512xf32>
    %10 = vector.broadcast %9 : vector<1x512xf32> to vector<8x512xf32>
    %cst_11 = arith.constant 0.000000e+00 : f32
    %11 = vector.broadcast %cst_11 : f32 to vector<8x128xf32>
    %12 = vector.extract_strided_slice %5 {offsets = [0, 0], sizes = [8, 512], strides = [1, 1]} : vector<64x512xf32> to vector<8x512xf32>
    %cst_12 = arith.constant dense<0.000000e+00> : vector<8x512xf32>
    %13 = tpu.matmul %11, %6, %cst_12 {dimension_numbers = #tpu.dot_dimension_numbers<[1], [0], [0], [1], [0, 0, 1, 1], [], []>} : vector<8x128xf32>, vector<128x512xf32>, vector<8x512xf32> -> vector<8x512xf32>
    %14 = arith.addf %12, %13 : vector<8x512xf32>
    %15 = vector.extract_strided_slice %14 {offsets = [0, 0], sizes = [8, 128], strides = [1, 1]} : vector<8x512xf32> to vector<8x128xf32>
    %16 = arith.negf %15 : vector<8x128xf32>
    %17 = math.exp %16 : vector<8x128xf32>
    %cst_13 = arith.constant 1.000000e+00 : f32
    %18 = vector.broadcast %cst_13 : f32 to vector<8x128xf32>
    %19 = arith.addf %18, %17 : vector<8x128xf32>
    %20 = arith.divf %18, %19 : vector<8x128xf32>
    %21 = vector.extract_strided_slice %14 {offsets = [0, 128], sizes = [8, 128], strides = [1, 1]} : vector<8x512xf32> to vector<8x128xf32>
    %22 = arith.negf %21 : vector<8x128xf32>
    %23 = math.exp %22 : vector<8x128xf32>
    %cst_14 = arith.constant 1.000000e+00 : f32
    %24 = vector.broadcast %cst_14 : f32 to vector<8x128xf32>
    %25 = arith.addf %24, %23 : vector<8x128xf32>
    %26 = arith.divf %24, %25 : vector<8x128xf32>
    %27 = vector.extract_strided_slice %14 {offsets = [0, 256], sizes = [8, 128], strides = [1, 1]} : vector<8x512xf32> to vector<8x128xf32>
    %28 = math.tanh %27 : vector<8x128xf32>
    %29 = vector.extract_strided_slice %14 {offsets = [0, 384], sizes = [8, 128], strides = [1, 1]} : vector<8x512xf32> to vector<8x128xf32>
    %30 = arith.negf %29 : vector<8x128xf32>
    %31 = math.exp %30 : vector<8x128xf32>
    %cst_15 = arith.constant 1.000000e+00 : f32
    %32 = vector.broadcast %cst_15 : f32 to vector<8x128xf32>
    %33 = arith.addf %32, %31 : vector<8x128xf32>
    %34 = arith.divf %32, %33 : vector<8x128xf32>
    %35 = arith.mulf %26, %11 : vector<8x128xf32>
    %36 = arith.mulf %20, %28 : vector<8x128xf32>
    %37 = arith.addf %35, %36 : vector<8x128xf32>
    %38 = math.tanh %37 : vector<8x128xf32>
    %39 = arith.mulf %34, %38 : vector<8x128xf32>
    %40 = tpu.concatenate %39, %11 in 1 : vector<8x128xf32>, vector<8x128xf32> -> vector<8x256xf32>
    %cst_16 = arith.constant dense<0.000000e+00> : vector<8x512xf32>
    %41 = tpu.matmul %40, %7, %cst_16 {dimension_numbers = #tpu.dot_dimension_numbers<[1], [0], [0], [1], [0, 0, 1, 1], [], []>} : vector<8x256xf32>, vector<256x512xf32>, vector<8x512xf32> -> vector<8x512xf32>
    %42 = arith.addf %41, %10 : vector<8x512xf32>
    %43 = vector.extract_strided_slice %42 {offsets = [0, 0], sizes = [8, 128], strides = [1, 1]} : vector<8x512xf32> to vector<8x128xf32>
    %44 = arith.negf %43 : vector<8x128xf32>
    %45 = math.exp %44 : vector<8x128xf32>
    %cst_17 = arith.constant 1.000000e+00 : f32
    %46 = vector.broadcast %cst_17 : f32 to vector<8x128xf32>
    %47 = arith.addf %46, %45 : vector<8x128xf32>
    %48 = arith.divf %46, %47 : vector<8x128xf32>
    %49 = vector.extract_strided_slice %42 {offsets = [0, 128], sizes = [8, 128], strides = [1, 1]} : vector<8x512xf32> to vector<8x128xf32>
    %50 = arith.negf %49 : vector<8x128xf32>
    %51 = math.exp %50 : vector<8x128xf32>
    %cst_18 = arith.constant 1.000000e+00 : f32
    %52 = vector.broadcast %cst_18 : f32 to vector<8x128xf32>
    %53 = arith.addf %52, %51 : vector<8x128xf32>
    %54 = arith.divf %52, %53 : vector<8x128xf32>
    %55 = vector.extract_strided_slice %42 {offsets = [0, 256], sizes = [8, 128], strides = [1, 1]} : vector<8x512xf32> to vector<8x128xf32>
    %56 = math.tanh %55 : vector<8x128xf32>
    %57 = vector.extract_strided_slice %42 {offsets = [0, 384], sizes = [8, 128], strides = [1, 1]} : vector<8x512xf32> to vector<8x128xf32>
    %58 = arith.negf %57 : vector<8x128xf32>
    %59 = math.exp %58 : vector<8x128xf32>
    %cst_19 = arith.constant 1.000000e+00 : f32
    %60 = vector.broadcast %cst_19 : f32 to vector<8x128xf32>
    %61 = arith.addf %60, %59 : vector<8x128xf32>
    %62 = arith.divf %60, %61 : vector<8x128xf32>
    %63 = arith.mulf %54, %11 : vector<8x128xf32>
    %64 = arith.mulf %48, %56 : vector<8x128xf32>
    %65 = arith.addf %63, %64 : vector<8x128xf32>
    %66 = math.tanh %65 : vector<8x128xf32>
    %67 = arith.mulf %62, %66 : vector<8x128xf32>
    %68 = vector.extract_strided_slice %5 {offsets = [8, 0], sizes = [8, 512], strides = [1, 1]} : vector<64x512xf32> to vector<8x512xf32>
    %cst_20 = arith.constant dense<0.000000e+00> : vector<8x512xf32>
    %69 = tpu.matmul %39, %6, %cst_20 {dimension_numbers = #tpu.dot_dimension_numbers<[1], [0], [0], [1], [0, 0, 1, 1], [], []>} : vector<8x128xf32>, vector<128x512xf32>, vector<8x512xf32> -> vector<8x512xf32>
    %70 = arith.addf %68, %69 : vector<8x512xf32>
    %71 = vector.extract_strided_slice %70 {offsets = [0, 0], sizes = [8, 128], strides = [1, 1]} : vector<8x512xf32> to vector<8x128xf32>
    %72 = arith.negf %71 : vector<8x128xf32>
    %73 = math.exp %72 : vector<8x128xf32>
    %cst_21 = arith.constant 1.000000e+00 : f32
    %74 = vector.broadcast %cst_21 : f32 to vector<8x128xf32>
    %75 = arith.addf %74, %73 : vector<8x128xf32>
    %76 = arith.divf %74, %75 : vector<8x128xf32>
    %77 = vector.extract_strided_slice %70 {offsets = [0, 128], sizes = [8, 128], strides = [1, 1]} : vector<8x512xf32> to vector<8x128xf32>
    %78 = arith.negf %77 : vector<8x128xf32>
    %79 = math.exp %78 : vector<8x128xf32>
    %cst_22 = arith.constant 1.000000e+00 : f32
    %80 = vector.broadcast %cst_22 : f32 to vector<8x128xf32>
    %81 = arith.addf %80, %79 : vector<8x128xf32>
    %82 = arith.divf %80, %81 : vector<8x128xf32>
    %83 = vector.extract_strided_slice %70 {offsets = [0, 256], sizes = [8, 128], strides = [1, 1]} : vector<8x512xf32> to vector<8x128xf32>
    %84 = math.tanh %83 : vector<8x128xf32>
    %85 = vector.extract_strided_slice %70 {offsets = [0, 384], sizes = [8, 128], strides = [1, 1]} : vector<8x512xf32> to vector<8x128xf32>
    %86 = arith.negf %85 : vector<8x128xf32>
    %87 = math.exp %86 : vector<8x128xf32>
    %cst_23 = arith.constant 1.000000e+00 : f32
    %88 = vector.broadcast %cst_23 : f32 to vector<8x128xf32>
    %89 = arith.addf %88, %87 : vector<8x128xf32>
    %90 = arith.divf %88, %89 : vector<8x128xf32>
    %91 = arith.mulf %82, %37 : vector<8x128xf32>
    %92 = arith.mulf %76, %84 : vector<8x128xf32>
    %93 = arith.addf %91, %92 : vector<8x128xf32>
    %94 = math.tanh %93 : vector<8x128xf32>
    %95 = arith.mulf %90, %94 : vector<8x128xf32>
    %96 = tpu.concatenate %95, %67 in 1 : vector<8x128xf32>, vector<8x128xf32> -> vector<8x256xf32>
    %cst_24 = arith.constant dense<0.000000e+00> : vector<8x512xf32>
    %97 = tpu.matmul %96, %7, %cst_24 {dimension_numbers = #tpu.dot_dimension_numbers<[1], [0], [0], [1], [0, 0, 1, 1], [], []>} : vector<8x256xf32>, vector<256x512xf32>, vector<8x512xf32> -> vector<8x512xf32>
    %98 = arith.addf %97, %10 : vector<8x512xf32>
    %99 = vector.extract_strided_slice %98 {offsets = [0, 0], sizes = [8, 128], strides = [1, 1]} : vector<8x512xf32> to vector<8x128xf32>
    %100 = arith.negf %99 : vector<8x128xf32>
    %101 = math.exp %100 : vector<8x128xf32>
    %cst_25 = arith.constant 1.000000e+00 : f32
    %102 = vector.broadcast %cst_25 : f32 to vector<8x128xf32>
    %103 = arith.addf %102, %101 : vector<8x128xf32>
    %104 = arith.divf %102, %103 : vector<8x128xf32>
    %105 = vector.extract_strided_slice %98 {offsets = [0, 128], sizes = [8, 128], strides = [1, 1]} : vector<8x512xf32> to vector<8x128xf32>
    %106 = arith.negf %105 : vector<8x128xf32>
    %107 = math.exp %106 : vector<8x128xf32>
    %cst_26 = arith.constant 1.000000e+00 : f32
    %108 = vector.broadcast %cst_26 : f32 to vector<8x128xf32>
    %109 = arith.addf %108, %107 : vector<8x128xf32>
    %110 = arith.divf %108, %109 : vector<8x128xf32>
    %111 = vector.extract_strided_slice %98 {offsets = [0, 256], sizes = [8, 128], strides = [1, 1]} : vector<8x512xf32> to vector<8x128xf32>
    %112 = math.tanh %111 : vector<8x128xf32>
    %113 = vector.extract_strided_slice %98 {offsets = [0, 384], sizes = [8, 128], strides = [1, 1]} : vector<8x512xf32> to vector<8x128xf32>
    %114 = arith.negf %113 : vector<8x128xf32>
    %115 = math.exp %114 : vector<8x128xf32>
    %cst_27 = arith.constant 1.000000e+00 : f32
    %116 = vector.broadcast %cst_27 : f32 to vector<8x128xf32>
    %117 = arith.addf %116, %115 : vector<8x128xf32>
    %118 = arith.divf %116, %117 : vector<8x128xf32>
    %119 = arith.mulf %110, %65 : vector<8x128xf32>
    %120 = arith.mulf %104, %112 : vector<8x128xf32>
    %121 = arith.addf %119, %120 : vector<8x128xf32>
    %122 = math.tanh %121 : vector<8x128xf32>
    %123 = arith.mulf %118, %122 : vector<8x128xf32>
    %124 = vector.extract_strided_slice %5 {offsets = [16, 0], sizes = [8, 512], strides = [1, 1]} : vector<64x512xf32> to vector<8x512xf32>
    %cst_28 = arith.constant dense<0.000000e+00> : vector<8x512xf32>
    %125 = tpu.matmul %95, %6, %cst_28 {dimension_numbers = #tpu.dot_dimension_numbers<[1], [0], [0], [1], [0, 0, 1, 1], [], []>} : vector<8x128xf32>, vector<128x512xf32>, vector<8x512xf32> -> vector<8x512xf32>
    %126 = arith.addf %124, %125 : vector<8x512xf32>
    %127 = vector.extract_strided_slice %126 {offsets = [0, 0], sizes = [8, 128], strides = [1, 1]} : vector<8x512xf32> to vector<8x128xf32>
    %128 = arith.negf %127 : vector<8x128xf32>
    %129 = math.exp %128 : vector<8x128xf32>
    %cst_29 = arith.constant 1.000000e+00 : f32
    %130 = vector.broadcast %cst_29 : f32 to vector<8x128xf32>
    %131 = arith.addf %130, %129 : vector<8x128xf32>
    %132 = arith.divf %130, %131 : vector<8x128xf32>
    %133 = vector.extract_strided_slice %126 {offsets = [0, 128], sizes = [8, 128], strides = [1, 1]} : vector<8x512xf32> to vector<8x128xf32>
    %134 = arith.negf %133 : vector<8x128xf32>
    %135 = math.exp %134 : vector<8x128xf32>
    %cst_30 = arith.constant 1.000000e+00 : f32
    %136 = vector.broadcast %cst_30 : f32 to vector<8x128xf32>
    %137 = arith.addf %136, %135 : vector<8x128xf32>
    %138 = arith.divf %136, %137 : vector<8x128xf32>
    %139 = vector.extract_strided_slice %126 {offsets = [0, 256], sizes = [8, 128], strides = [1, 1]} : vector<8x512xf32> to vector<8x128xf32>
    %140 = math.tanh %139 : vector<8x128xf32>
    %141 = vector.extract_strided_slice %126 {offsets = [0, 384], sizes = [8, 128], strides = [1, 1]} : vector<8x512xf32> to vector<8x128xf32>
    %142 = arith.negf %141 : vector<8x128xf32>
    %143 = math.exp %142 : vector<8x128xf32>
    %cst_31 = arith.constant 1.000000e+00 : f32
    %144 = vector.broadcast %cst_31 : f32 to vector<8x128xf32>
    %145 = arith.addf %144, %143 : vector<8x128xf32>
    %146 = arith.divf %144, %145 : vector<8x128xf32>
    %147 = arith.mulf %138, %93 : vector<8x128xf32>
    %148 = arith.mulf %132, %140 : vector<8x128xf32>
    %149 = arith.addf %147, %148 : vector<8x128xf32>
    %150 = math.tanh %149 : vector<8x128xf32>
    %151 = arith.mulf %146, %150 : vector<8x128xf32>
    %152 = tpu.concatenate %151, %123 in 1 : vector<8x128xf32>, vector<8x128xf32> -> vector<8x256xf32>
    %cst_32 = arith.constant dense<0.000000e+00> : vector<8x512xf32>
    %153 = tpu.matmul %152, %7, %cst_32 {dimension_numbers = #tpu.dot_dimension_numbers<[1], [0], [0], [1], [0, 0, 1, 1], [], []>} : vector<8x256xf32>, vector<256x512xf32>, vector<8x512xf32> -> vector<8x512xf32>
    %154 = arith.addf %153, %10 : vector<8x512xf32>
    %155 = vector.extract_strided_slice %154 {offsets = [0, 0], sizes = [8, 128], strides = [1, 1]} : vector<8x512xf32> to vector<8x128xf32>
    %156 = arith.negf %155 : vector<8x128xf32>
    %157 = math.exp %156 : vector<8x128xf32>
    %cst_33 = arith.constant 1.000000e+00 : f32
    %158 = vector.broadcast %cst_33 : f32 to vector<8x128xf32>
    %159 = arith.addf %158, %157 : vector<8x128xf32>
    %160 = arith.divf %158, %159 : vector<8x128xf32>
    %161 = vector.extract_strided_slice %154 {offsets = [0, 128], sizes = [8, 128], strides = [1, 1]} : vector<8x512xf32> to vector<8x128xf32>
    %162 = arith.negf %161 : vector<8x128xf32>
    %163 = math.exp %162 : vector<8x128xf32>
    %cst_34 = arith.constant 1.000000e+00 : f32
    %164 = vector.broadcast %cst_34 : f32 to vector<8x128xf32>
    %165 = arith.addf %164, %163 : vector<8x128xf32>
    %166 = arith.divf %164, %165 : vector<8x128xf32>
    %167 = vector.extract_strided_slice %154 {offsets = [0, 256], sizes = [8, 128], strides = [1, 1]} : vector<8x512xf32> to vector<8x128xf32>
    %168 = math.tanh %167 : vector<8x128xf32>
    %169 = vector.extract_strided_slice %154 {offsets = [0, 384], sizes = [8, 128], strides = [1, 1]} : vector<8x512xf32> to vector<8x128xf32>
    %170 = arith.negf %169 : vector<8x128xf32>
    %171 = math.exp %170 : vector<8x128xf32>
    %cst_35 = arith.constant 1.000000e+00 : f32
    %172 = vector.broadcast %cst_35 : f32 to vector<8x128xf32>
    %173 = arith.addf %172, %171 : vector<8x128xf32>
    %174 = arith.divf %172, %173 : vector<8x128xf32>
    %175 = arith.mulf %166, %121 : vector<8x128xf32>
    %176 = arith.mulf %160, %168 : vector<8x128xf32>
    %177 = arith.addf %175, %176 : vector<8x128xf32>
    %178 = math.tanh %177 : vector<8x128xf32>
    %179 = arith.mulf %174, %178 : vector<8x128xf32>
    %180 = vector.extract_strided_slice %5 {offsets = [24, 0], sizes = [8, 512], strides = [1, 1]} : vector<64x512xf32> to vector<8x512xf32>
    %cst_36 = arith.constant dense<0.000000e+00> : vector<8x512xf32>
    %181 = tpu.matmul %151, %6, %cst_36 {dimension_numbers = #tpu.dot_dimension_numbers<[1], [0], [0], [1], [0, 0, 1, 1], [], []>} : vector<8x128xf32>, vector<128x512xf32>, vector<8x512xf32> -> vector<8x512xf32>
    %182 = arith.addf %180, %181 : vector<8x512xf32>
    %183 = vector.extract_strided_slice %182 {offsets = [0, 0], sizes = [8, 128], strides = [1, 1]} : vector<8x512xf32> to vector<8x128xf32>
    %184 = arith.negf %183 : vector<8x128xf32>
    %185 = math.exp %184 : vector<8x128xf32>
    %cst_37 = arith.constant 1.000000e+00 : f32
    %186 = vector.broadcast %cst_37 : f32 to vector<8x128xf32>
    %187 = arith.addf %186, %185 : vector<8x128xf32>
    %188 = arith.divf %186, %187 : vector<8x128xf32>
    %189 = vector.extract_strided_slice %182 {offsets = [0, 128], sizes = [8, 128], strides = [1, 1]} : vector<8x512xf32> to vector<8x128xf32>
    %190 = arith.negf %189 : vector<8x128xf32>
    %191 = math.exp %190 : vector<8x128xf32>
    %cst_38 = arith.constant 1.000000e+00 : f32
    %192 = vector.broadcast %cst_38 : f32 to vector<8x128xf32>
    %193 = arith.addf %192, %191 : vector<8x128xf32>
    %194 = arith.divf %192, %193 : vector<8x128xf32>
    %195 = vector.extract_strided_slice %182 {offsets = [0, 256], sizes = [8, 128], strides = [1, 1]} : vector<8x512xf32> to vector<8x128xf32>
    %196 = math.tanh %195 : vector<8x128xf32>
    %197 = vector.extract_strided_slice %182 {offsets = [0, 384], sizes = [8, 128], strides = [1, 1]} : vector<8x512xf32> to vector<8x128xf32>
    %198 = arith.negf %197 : vector<8x128xf32>
    %199 = math.exp %198 : vector<8x128xf32>
    %cst_39 = arith.constant 1.000000e+00 : f32
    %200 = vector.broadcast %cst_39 : f32 to vector<8x128xf32>
    %201 = arith.addf %200, %199 : vector<8x128xf32>
    %202 = arith.divf %200, %201 : vector<8x128xf32>
    %203 = arith.mulf %194, %149 : vector<8x128xf32>
    %204 = arith.mulf %188, %196 : vector<8x128xf32>
    %205 = arith.addf %203, %204 : vector<8x128xf32>
    %206 = math.tanh %205 : vector<8x128xf32>
    %207 = arith.mulf %202, %206 : vector<8x128xf32>
    %208 = tpu.concatenate %207, %179 in 1 : vector<8x128xf32>, vector<8x128xf32> -> vector<8x256xf32>
    %cst_40 = arith.constant dense<0.000000e+00> : vector<8x512xf32>
    %209 = tpu.matmul %208, %7, %cst_40 {dimension_numbers = #tpu.dot_dimension_numbers<[1], [0], [0], [1], [0, 0, 1, 1], [], []>} : vector<8x256xf32>, vector<256x512xf32>, vector<8x512xf32> -> vector<8x512xf32>
    %210 = arith.addf %209, %10 : vector<8x512xf32>
    %211 = vector.extract_strided_slice %210 {offsets = [0, 0], sizes = [8, 128], strides = [1, 1]} : vector<8x512xf32> to vector<8x128xf32>
    %212 = arith.negf %211 : vector<8x128xf32>
    %213 = math.exp %212 : vector<8x128xf32>
    %cst_41 = arith.constant 1.000000e+00 : f32
    %214 = vector.broadcast %cst_41 : f32 to vector<8x128xf32>
    %215 = arith.addf %214, %213 : vector<8x128xf32>
    %216 = arith.divf %214, %215 : vector<8x128xf32>
    %217 = vector.extract_strided_slice %210 {offsets = [0, 128], sizes = [8, 128], strides = [1, 1]} : vector<8x512xf32> to vector<8x128xf32>
    %218 = arith.negf %217 : vector<8x128xf32>
    %219 = math.exp %218 : vector<8x128xf32>
    %cst_42 = arith.constant 1.000000e+00 : f32
    %220 = vector.broadcast %cst_42 : f32 to vector<8x128xf32>
    %221 = arith.addf %220, %219 : vector<8x128xf32>
    %222 = arith.divf %220, %221 : vector<8x128xf32>
    %223 = vector.extract_strided_slice %210 {offsets = [0, 256], sizes = [8, 128], strides = [1, 1]} : vector<8x512xf32> to vector<8x128xf32>
    %224 = math.tanh %223 : vector<8x128xf32>
    %225 = vector.extract_strided_slice %210 {offsets = [0, 384], sizes = [8, 128], strides = [1, 1]} : vector<8x512xf32> to vector<8x128xf32>
    %226 = arith.negf %225 : vector<8x128xf32>
    %227 = math.exp %226 : vector<8x128xf32>
    %cst_43 = arith.constant 1.000000e+00 : f32
    %228 = vector.broadcast %cst_43 : f32 to vector<8x128xf32>
    %229 = arith.addf %228, %227 : vector<8x128xf32>
    %230 = arith.divf %228, %229 : vector<8x128xf32>
    %231 = arith.mulf %222, %177 : vector<8x128xf32>
    %232 = arith.mulf %216, %224 : vector<8x128xf32>
    %233 = arith.addf %231, %232 : vector<8x128xf32>
    %234 = math.tanh %233 : vector<8x128xf32>
    %235 = arith.mulf %230, %234 : vector<8x128xf32>
    %236 = vector.extract_strided_slice %5 {offsets = [32, 0], sizes = [8, 512], strides = [1, 1]} : vector<64x512xf32> to vector<8x512xf32>
    %cst_44 = arith.constant dense<0.000000e+00> : vector<8x512xf32>
    %237 = tpu.matmul %207, %6, %cst_44 {dimension_numbers = #tpu.dot_dimension_numbers<[1], [0], [0], [1], [0, 0, 1, 1], [], []>} : vector<8x128xf32>, vector<128x512xf32>, vector<8x512xf32> -> vector<8x512xf32>
    %238 = arith.addf %236, %237 : vector<8x512xf32>
    %239 = vector.extract_strided_slice %238 {offsets = [0, 0], sizes = [8, 128], strides = [1, 1]} : vector<8x512xf32> to vector<8x128xf32>
    %240 = arith.negf %239 : vector<8x128xf32>
    %241 = math.exp %240 : vector<8x128xf32>
    %cst_45 = arith.constant 1.000000e+00 : f32
    %242 = vector.broadcast %cst_45 : f32 to vector<8x128xf32>
    %243 = arith.addf %242, %241 : vector<8x128xf32>
    %244 = arith.divf %242, %243 : vector<8x128xf32>
    %245 = vector.extract_strided_slice %238 {offsets = [0, 128], sizes = [8, 128], strides = [1, 1]} : vector<8x512xf32> to vector<8x128xf32>
    %246 = arith.negf %245 : vector<8x128xf32>
    %247 = math.exp %246 : vector<8x128xf32>
    %cst_46 = arith.constant 1.000000e+00 : f32
    %248 = vector.broadcast %cst_46 : f32 to vector<8x128xf32>
    %249 = arith.addf %248, %247 : vector<8x128xf32>
    %250 = arith.divf %248, %249 : vector<8x128xf32>
    %251 = vector.extract_strided_slice %238 {offsets = [0, 256], sizes = [8, 128], strides = [1, 1]} : vector<8x512xf32> to vector<8x128xf32>
    %252 = math.tanh %251 : vector<8x128xf32>
    %253 = vector.extract_strided_slice %238 {offsets = [0, 384], sizes = [8, 128], strides = [1, 1]} : vector<8x512xf32> to vector<8x128xf32>
    %254 = arith.negf %253 : vector<8x128xf32>
    %255 = math.exp %254 : vector<8x128xf32>
    %cst_47 = arith.constant 1.000000e+00 : f32
    %256 = vector.broadcast %cst_47 : f32 to vector<8x128xf32>
    %257 = arith.addf %256, %255 : vector<8x128xf32>
    %258 = arith.divf %256, %257 : vector<8x128xf32>
    %259 = arith.mulf %250, %205 : vector<8x128xf32>
    %260 = arith.mulf %244, %252 : vector<8x128xf32>
    %261 = arith.addf %259, %260 : vector<8x128xf32>
    %262 = math.tanh %261 : vector<8x128xf32>
    %263 = arith.mulf %258, %262 : vector<8x128xf32>
    %264 = tpu.concatenate %263, %235 in 1 : vector<8x128xf32>, vector<8x128xf32> -> vector<8x256xf32>
    %cst_48 = arith.constant dense<0.000000e+00> : vector<8x512xf32>
    %265 = tpu.matmul %264, %7, %cst_48 {dimension_numbers = #tpu.dot_dimension_numbers<[1], [0], [0], [1], [0, 0, 1, 1], [], []>} : vector<8x256xf32>, vector<256x512xf32>, vector<8x512xf32> -> vector<8x512xf32>
    %266 = arith.addf %265, %10 : vector<8x512xf32>
    %267 = vector.extract_strided_slice %266 {offsets = [0, 0], sizes = [8, 128], strides = [1, 1]} : vector<8x512xf32> to vector<8x128xf32>
    %268 = arith.negf %267 : vector<8x128xf32>
    %269 = math.exp %268 : vector<8x128xf32>
    %cst_49 = arith.constant 1.000000e+00 : f32
    %270 = vector.broadcast %cst_49 : f32 to vector<8x128xf32>
    %271 = arith.addf %270, %269 : vector<8x128xf32>
    %272 = arith.divf %270, %271 : vector<8x128xf32>
    %273 = vector.extract_strided_slice %266 {offsets = [0, 128], sizes = [8, 128], strides = [1, 1]} : vector<8x512xf32> to vector<8x128xf32>
    %274 = arith.negf %273 : vector<8x128xf32>
    %275 = math.exp %274 : vector<8x128xf32>
    %cst_50 = arith.constant 1.000000e+00 : f32
    %276 = vector.broadcast %cst_50 : f32 to vector<8x128xf32>
    %277 = arith.addf %276, %275 : vector<8x128xf32>
    %278 = arith.divf %276, %277 : vector<8x128xf32>
    %279 = vector.extract_strided_slice %266 {offsets = [0, 256], sizes = [8, 128], strides = [1, 1]} : vector<8x512xf32> to vector<8x128xf32>
    %280 = math.tanh %279 : vector<8x128xf32>
    %281 = vector.extract_strided_slice %266 {offsets = [0, 384], sizes = [8, 128], strides = [1, 1]} : vector<8x512xf32> to vector<8x128xf32>
    %282 = arith.negf %281 : vector<8x128xf32>
    %283 = math.exp %282 : vector<8x128xf32>
    %cst_51 = arith.constant 1.000000e+00 : f32
    %284 = vector.broadcast %cst_51 : f32 to vector<8x128xf32>
    %285 = arith.addf %284, %283 : vector<8x128xf32>
    %286 = arith.divf %284, %285 : vector<8x128xf32>
    %287 = arith.mulf %278, %233 : vector<8x128xf32>
    %288 = arith.mulf %272, %280 : vector<8x128xf32>
    %289 = arith.addf %287, %288 : vector<8x128xf32>
    %290 = math.tanh %289 : vector<8x128xf32>
    %291 = arith.mulf %286, %290 : vector<8x128xf32>
    %292 = vector.extract_strided_slice %5 {offsets = [40, 0], sizes = [8, 512], strides = [1, 1]} : vector<64x512xf32> to vector<8x512xf32>
    %cst_52 = arith.constant dense<0.000000e+00> : vector<8x512xf32>
    %293 = tpu.matmul %263, %6, %cst_52 {dimension_numbers = #tpu.dot_dimension_numbers<[1], [0], [0], [1], [0, 0, 1, 1], [], []>} : vector<8x128xf32>, vector<128x512xf32>, vector<8x512xf32> -> vector<8x512xf32>
    %294 = arith.addf %292, %293 : vector<8x512xf32>
    %295 = vector.extract_strided_slice %294 {offsets = [0, 0], sizes = [8, 128], strides = [1, 1]} : vector<8x512xf32> to vector<8x128xf32>
    %296 = arith.negf %295 : vector<8x128xf32>
    %297 = math.exp %296 : vector<8x128xf32>
    %cst_53 = arith.constant 1.000000e+00 : f32
    %298 = vector.broadcast %cst_53 : f32 to vector<8x128xf32>
    %299 = arith.addf %298, %297 : vector<8x128xf32>
    %300 = arith.divf %298, %299 : vector<8x128xf32>
    %301 = vector.extract_strided_slice %294 {offsets = [0, 128], sizes = [8, 128], strides = [1, 1]} : vector<8x512xf32> to vector<8x128xf32>
    %302 = arith.negf %301 : vector<8x128xf32>
    %303 = math.exp %302 : vector<8x128xf32>
    %cst_54 = arith.constant 1.000000e+00 : f32
    %304 = vector.broadcast %cst_54 : f32 to vector<8x128xf32>
    %305 = arith.addf %304, %303 : vector<8x128xf32>
    %306 = arith.divf %304, %305 : vector<8x128xf32>
    %307 = vector.extract_strided_slice %294 {offsets = [0, 256], sizes = [8, 128], strides = [1, 1]} : vector<8x512xf32> to vector<8x128xf32>
    %308 = math.tanh %307 : vector<8x128xf32>
    %309 = vector.extract_strided_slice %294 {offsets = [0, 384], sizes = [8, 128], strides = [1, 1]} : vector<8x512xf32> to vector<8x128xf32>
    %310 = arith.negf %309 : vector<8x128xf32>
    %311 = math.exp %310 : vector<8x128xf32>
    %cst_55 = arith.constant 1.000000e+00 : f32
    %312 = vector.broadcast %cst_55 : f32 to vector<8x128xf32>
    %313 = arith.addf %312, %311 : vector<8x128xf32>
    %314 = arith.divf %312, %313 : vector<8x128xf32>
    %315 = arith.mulf %306, %261 : vector<8x128xf32>
    %316 = arith.mulf %300, %308 : vector<8x128xf32>
    %317 = arith.addf %315, %316 : vector<8x128xf32>
    %318 = math.tanh %317 : vector<8x128xf32>
    %319 = arith.mulf %314, %318 : vector<8x128xf32>
    %320 = tpu.concatenate %319, %291 in 1 : vector<8x128xf32>, vector<8x128xf32> -> vector<8x256xf32>
    %cst_56 = arith.constant dense<0.000000e+00> : vector<8x512xf32>
    %321 = tpu.matmul %320, %7, %cst_56 {dimension_numbers = #tpu.dot_dimension_numbers<[1], [0], [0], [1], [0, 0, 1, 1], [], []>} : vector<8x256xf32>, vector<256x512xf32>, vector<8x512xf32> -> vector<8x512xf32>
    %322 = arith.addf %321, %10 : vector<8x512xf32>
    %323 = vector.extract_strided_slice %322 {offsets = [0, 0], sizes = [8, 128], strides = [1, 1]} : vector<8x512xf32> to vector<8x128xf32>
    %324 = arith.negf %323 : vector<8x128xf32>
    %325 = math.exp %324 : vector<8x128xf32>
    %cst_57 = arith.constant 1.000000e+00 : f32
    %326 = vector.broadcast %cst_57 : f32 to vector<8x128xf32>
    %327 = arith.addf %326, %325 : vector<8x128xf32>
    %328 = arith.divf %326, %327 : vector<8x128xf32>
    %329 = vector.extract_strided_slice %322 {offsets = [0, 128], sizes = [8, 128], strides = [1, 1]} : vector<8x512xf32> to vector<8x128xf32>
    %330 = arith.negf %329 : vector<8x128xf32>
    %331 = math.exp %330 : vector<8x128xf32>
    %cst_58 = arith.constant 1.000000e+00 : f32
    %332 = vector.broadcast %cst_58 : f32 to vector<8x128xf32>
    %333 = arith.addf %332, %331 : vector<8x128xf32>
    %334 = arith.divf %332, %333 : vector<8x128xf32>
    %335 = vector.extract_strided_slice %322 {offsets = [0, 256], sizes = [8, 128], strides = [1, 1]} : vector<8x512xf32> to vector<8x128xf32>
    %336 = math.tanh %335 : vector<8x128xf32>
    %337 = vector.extract_strided_slice %322 {offsets = [0, 384], sizes = [8, 128], strides = [1, 1]} : vector<8x512xf32> to vector<8x128xf32>
    %338 = arith.negf %337 : vector<8x128xf32>
    %339 = math.exp %338 : vector<8x128xf32>
    %cst_59 = arith.constant 1.000000e+00 : f32
    %340 = vector.broadcast %cst_59 : f32 to vector<8x128xf32>
    %341 = arith.addf %340, %339 : vector<8x128xf32>
    %342 = arith.divf %340, %341 : vector<8x128xf32>
    %343 = arith.mulf %334, %289 : vector<8x128xf32>
    %344 = arith.mulf %328, %336 : vector<8x128xf32>
    %345 = arith.addf %343, %344 : vector<8x128xf32>
    %346 = math.tanh %345 : vector<8x128xf32>
    %347 = arith.mulf %342, %346 : vector<8x128xf32>
    %348 = vector.extract_strided_slice %5 {offsets = [48, 0], sizes = [8, 512], strides = [1, 1]} : vector<64x512xf32> to vector<8x512xf32>
    %cst_60 = arith.constant dense<0.000000e+00> : vector<8x512xf32>
    %349 = tpu.matmul %319, %6, %cst_60 {dimension_numbers = #tpu.dot_dimension_numbers<[1], [0], [0], [1], [0, 0, 1, 1], [], []>} : vector<8x128xf32>, vector<128x512xf32>, vector<8x512xf32> -> vector<8x512xf32>
    %350 = arith.addf %348, %349 : vector<8x512xf32>
    %351 = vector.extract_strided_slice %350 {offsets = [0, 0], sizes = [8, 128], strides = [1, 1]} : vector<8x512xf32> to vector<8x128xf32>
    %352 = arith.negf %351 : vector<8x128xf32>
    %353 = math.exp %352 : vector<8x128xf32>
    %cst_61 = arith.constant 1.000000e+00 : f32
    %354 = vector.broadcast %cst_61 : f32 to vector<8x128xf32>
    %355 = arith.addf %354, %353 : vector<8x128xf32>
    %356 = arith.divf %354, %355 : vector<8x128xf32>
    %357 = vector.extract_strided_slice %350 {offsets = [0, 128], sizes = [8, 128], strides = [1, 1]} : vector<8x512xf32> to vector<8x128xf32>
    %358 = arith.negf %357 : vector<8x128xf32>
    %359 = math.exp %358 : vector<8x128xf32>
    %cst_62 = arith.constant 1.000000e+00 : f32
    %360 = vector.broadcast %cst_62 : f32 to vector<8x128xf32>
    %361 = arith.addf %360, %359 : vector<8x128xf32>
    %362 = arith.divf %360, %361 : vector<8x128xf32>
    %363 = vector.extract_strided_slice %350 {offsets = [0, 256], sizes = [8, 128], strides = [1, 1]} : vector<8x512xf32> to vector<8x128xf32>
    %364 = math.tanh %363 : vector<8x128xf32>
    %365 = vector.extract_strided_slice %350 {offsets = [0, 384], sizes = [8, 128], strides = [1, 1]} : vector<8x512xf32> to vector<8x128xf32>
    %366 = arith.negf %365 : vector<8x128xf32>
    %367 = math.exp %366 : vector<8x128xf32>
    %cst_63 = arith.constant 1.000000e+00 : f32
    %368 = vector.broadcast %cst_63 : f32 to vector<8x128xf32>
    %369 = arith.addf %368, %367 : vector<8x128xf32>
    %370 = arith.divf %368, %369 : vector<8x128xf32>
    %371 = arith.mulf %362, %317 : vector<8x128xf32>
    %372 = arith.mulf %356, %364 : vector<8x128xf32>
    %373 = arith.addf %371, %372 : vector<8x128xf32>
    %374 = math.tanh %373 : vector<8x128xf32>
    %375 = arith.mulf %370, %374 : vector<8x128xf32>
    %376 = tpu.concatenate %375, %347 in 1 : vector<8x128xf32>, vector<8x128xf32> -> vector<8x256xf32>
    %cst_64 = arith.constant dense<0.000000e+00> : vector<8x512xf32>
    %377 = tpu.matmul %376, %7, %cst_64 {dimension_numbers = #tpu.dot_dimension_numbers<[1], [0], [0], [1], [0, 0, 1, 1], [], []>} : vector<8x256xf32>, vector<256x512xf32>, vector<8x512xf32> -> vector<8x512xf32>
    %378 = arith.addf %377, %10 : vector<8x512xf32>
    %379 = vector.extract_strided_slice %378 {offsets = [0, 0], sizes = [8, 128], strides = [1, 1]} : vector<8x512xf32> to vector<8x128xf32>
    %380 = arith.negf %379 : vector<8x128xf32>
    %381 = math.exp %380 : vector<8x128xf32>
    %cst_65 = arith.constant 1.000000e+00 : f32
    %382 = vector.broadcast %cst_65 : f32 to vector<8x128xf32>
    %383 = arith.addf %382, %381 : vector<8x128xf32>
    %384 = arith.divf %382, %383 : vector<8x128xf32>
    %385 = vector.extract_strided_slice %378 {offsets = [0, 128], sizes = [8, 128], strides = [1, 1]} : vector<8x512xf32> to vector<8x128xf32>
    %386 = arith.negf %385 : vector<8x128xf32>
    %387 = math.exp %386 : vector<8x128xf32>
    %cst_66 = arith.constant 1.000000e+00 : f32
    %388 = vector.broadcast %cst_66 : f32 to vector<8x128xf32>
    %389 = arith.addf %388, %387 : vector<8x128xf32>
    %390 = arith.divf %388, %389 : vector<8x128xf32>
    %391 = vector.extract_strided_slice %378 {offsets = [0, 256], sizes = [8, 128], strides = [1, 1]} : vector<8x512xf32> to vector<8x128xf32>
    %392 = math.tanh %391 : vector<8x128xf32>
    %393 = vector.extract_strided_slice %378 {offsets = [0, 384], sizes = [8, 128], strides = [1, 1]} : vector<8x512xf32> to vector<8x128xf32>
    %394 = arith.negf %393 : vector<8x128xf32>
    %395 = math.exp %394 : vector<8x128xf32>
    %cst_67 = arith.constant 1.000000e+00 : f32
    %396 = vector.broadcast %cst_67 : f32 to vector<8x128xf32>
    %397 = arith.addf %396, %395 : vector<8x128xf32>
    %398 = arith.divf %396, %397 : vector<8x128xf32>
    %399 = arith.mulf %390, %345 : vector<8x128xf32>
    %400 = arith.mulf %384, %392 : vector<8x128xf32>
    %401 = arith.addf %399, %400 : vector<8x128xf32>
    %402 = math.tanh %401 : vector<8x128xf32>
    %403 = arith.mulf %398, %402 : vector<8x128xf32>
    %404 = vector.extract_strided_slice %5 {offsets = [56, 0], sizes = [8, 512], strides = [1, 1]} : vector<64x512xf32> to vector<8x512xf32>
    %cst_68 = arith.constant dense<0.000000e+00> : vector<8x512xf32>
    %405 = tpu.matmul %375, %6, %cst_68 {dimension_numbers = #tpu.dot_dimension_numbers<[1], [0], [0], [1], [0, 0, 1, 1], [], []>} : vector<8x128xf32>, vector<128x512xf32>, vector<8x512xf32> -> vector<8x512xf32>
    %406 = arith.addf %404, %405 : vector<8x512xf32>
    %407 = vector.extract_strided_slice %406 {offsets = [0, 0], sizes = [8, 128], strides = [1, 1]} : vector<8x512xf32> to vector<8x128xf32>
    %408 = arith.negf %407 : vector<8x128xf32>
    %409 = math.exp %408 : vector<8x128xf32>
    %cst_69 = arith.constant 1.000000e+00 : f32
    %410 = vector.broadcast %cst_69 : f32 to vector<8x128xf32>
    %411 = arith.addf %410, %409 : vector<8x128xf32>
    %412 = arith.divf %410, %411 : vector<8x128xf32>
    %413 = vector.extract_strided_slice %406 {offsets = [0, 128], sizes = [8, 128], strides = [1, 1]} : vector<8x512xf32> to vector<8x128xf32>
    %414 = arith.negf %413 : vector<8x128xf32>
    %415 = math.exp %414 : vector<8x128xf32>
    %cst_70 = arith.constant 1.000000e+00 : f32
    %416 = vector.broadcast %cst_70 : f32 to vector<8x128xf32>
    %417 = arith.addf %416, %415 : vector<8x128xf32>
    %418 = arith.divf %416, %417 : vector<8x128xf32>
    %419 = vector.extract_strided_slice %406 {offsets = [0, 256], sizes = [8, 128], strides = [1, 1]} : vector<8x512xf32> to vector<8x128xf32>
    %420 = math.tanh %419 : vector<8x128xf32>
    %421 = vector.extract_strided_slice %406 {offsets = [0, 384], sizes = [8, 128], strides = [1, 1]} : vector<8x512xf32> to vector<8x128xf32>
    %422 = arith.negf %421 : vector<8x128xf32>
    %423 = math.exp %422 : vector<8x128xf32>
    %cst_71 = arith.constant 1.000000e+00 : f32
    %424 = vector.broadcast %cst_71 : f32 to vector<8x128xf32>
    %425 = arith.addf %424, %423 : vector<8x128xf32>
    %426 = arith.divf %424, %425 : vector<8x128xf32>
    %427 = arith.mulf %418, %373 : vector<8x128xf32>
    %428 = arith.mulf %412, %420 : vector<8x128xf32>
    %429 = arith.addf %427, %428 : vector<8x128xf32>
    %430 = math.tanh %429 : vector<8x128xf32>
    %431 = arith.mulf %426, %430 : vector<8x128xf32>
    %432 = tpu.concatenate %431, %403 in 1 : vector<8x128xf32>, vector<8x128xf32> -> vector<8x256xf32>
    %cst_72 = arith.constant dense<0.000000e+00> : vector<8x512xf32>
    %433 = tpu.matmul %432, %7, %cst_72 {dimension_numbers = #tpu.dot_dimension_numbers<[1], [0], [0], [1], [0, 0, 1, 1], [], []>} : vector<8x256xf32>, vector<256x512xf32>, vector<8x512xf32> -> vector<8x512xf32>
    %434 = arith.addf %433, %10 : vector<8x512xf32>
    %435 = vector.extract_strided_slice %434 {offsets = [0, 0], sizes = [8, 128], strides = [1, 1]} : vector<8x512xf32> to vector<8x128xf32>
    %436 = arith.negf %435 : vector<8x128xf32>
    %437 = math.exp %436 : vector<8x128xf32>
    %cst_73 = arith.constant 1.000000e+00 : f32
    %438 = vector.broadcast %cst_73 : f32 to vector<8x128xf32>
    %439 = arith.addf %438, %437 : vector<8x128xf32>
    %440 = arith.divf %438, %439 : vector<8x128xf32>
    %441 = vector.extract_strided_slice %434 {offsets = [0, 128], sizes = [8, 128], strides = [1, 1]} : vector<8x512xf32> to vector<8x128xf32>
    %442 = arith.negf %441 : vector<8x128xf32>
    %443 = math.exp %442 : vector<8x128xf32>
    %cst_74 = arith.constant 1.000000e+00 : f32
    %444 = vector.broadcast %cst_74 : f32 to vector<8x128xf32>
    %445 = arith.addf %444, %443 : vector<8x128xf32>
    %446 = arith.divf %444, %445 : vector<8x128xf32>
    %447 = vector.extract_strided_slice %434 {offsets = [0, 256], sizes = [8, 128], strides = [1, 1]} : vector<8x512xf32> to vector<8x128xf32>
    %448 = math.tanh %447 : vector<8x128xf32>
    %449 = vector.extract_strided_slice %434 {offsets = [0, 384], sizes = [8, 128], strides = [1, 1]} : vector<8x512xf32> to vector<8x128xf32>
    %450 = arith.negf %449 : vector<8x128xf32>
    %451 = math.exp %450 : vector<8x128xf32>
    %cst_75 = arith.constant 1.000000e+00 : f32
    %452 = vector.broadcast %cst_75 : f32 to vector<8x128xf32>
    %453 = arith.addf %452, %451 : vector<8x128xf32>
    %454 = arith.divf %452, %453 : vector<8x128xf32>
    %455 = arith.mulf %446, %401 : vector<8x128xf32>
    %456 = arith.mulf %440, %448 : vector<8x128xf32>
    %457 = arith.addf %455, %456 : vector<8x128xf32>
    %458 = math.tanh %457 : vector<8x128xf32>
    %459 = arith.mulf %454, %458 : vector<8x128xf32>
    %c0_76 = arith.constant 0 : index
    %c0_77 = arith.constant 0 : index
    %460 = vector.load %arg6[%c0_76, %c0_77] : memref<128x128xf32, #tpu.memory_space<vmem>>, vector<128x128xf32>
    %cst_78 = arith.constant dense<0.000000e+00> : vector<8x128xf32>
    %461 = tpu.matmul %459, %460, %cst_78 {dimension_numbers = #tpu.dot_dimension_numbers<[1], [0], [0], [1], [0, 0, 1, 1], [], []>} : vector<8x128xf32>, vector<128x128xf32>, vector<8x128xf32> -> vector<8x128xf32>
    %c0_79 = arith.constant 0 : index
    %c0_80 = arith.constant 0 : index
    %462 = vector.load %arg7[%c0_79, %c0_80] : memref<1x128xf32, #tpu.memory_space<vmem>>, vector<1x128xf32>
    %463 = vector.broadcast %462 : vector<1x128xf32> to vector<8x128xf32>
    %464 = arith.addf %461, %463 : vector<8x128xf32>
    %c0_81 = arith.constant 0 : index
    %c0_82 = arith.constant 0 : index
    %465 = vector.load %arg8[%c0_81, %c0_82] : memref<8x128xf32, #tpu.memory_space<vmem>>, vector<8x128xf32>
    tpu.vector_store %arg8[%c0_81, %c0_82], %464 {strides = array<i32>} : memref<8x128xf32, #tpu.memory_space<vmem>>, vector<8x128xf32>,
    return
  }
}

</mosaic_0001>

<llo_original>
// kernel: tpu_custom_call.1
$region0: #{tpu_custom_call.1}
  #allocation0 [shape = 'u32[]', space=smem, size = 0x4, offset = 0x4, fixed_abs, tag = 'smem constant byte address 0x4 - core index']
  #allocation1 [shape = 'u32[72,128]{1,0:T(1,128)}', space=vmem, size = 0x9000, scoped, tag = 'internal scratch']
  %s0 = inlined_call_operand.vmem [shape: f32[64,8], index: 0, kind: input, shape index: {}]
  %s1 = inlined_call_operand.vmem [shape: f32[8,512], index: 1, kind: input, shape index: {}]
  %s2 = inlined_call_operand.hbm [shape: f32[128,512], index: 2, kind: input, shape index: {}]
  %s3 = inlined_call_operand.vmem [shape: f32[1,512], index: 3, kind: input, shape index: {}]
  %s4 = inlined_call_operand.hbm [shape: f32[256,512], index: 4, kind: input, shape index: {}]
  %s5 = inlined_call_operand.vmem [shape: f32[1,512], index: 5, kind: input, shape index: {}]
  %s6 = inlined_call_operand.hbm [shape: f32[128,128], index: 6, kind: input, shape index: {}]
  %s7 = inlined_call_operand.vmem [shape: f32[1,128], index: 7, kind: input, shape index: {}]
  %s8 = inlined_call_operand.hbm [shape: f32[8,128], index: 8, kind: output, shape index: {}]
  %s9 = sld [smem:[#allocation0]]
  $region54: #{tpu_custom_call.1} parent=0
    _
  %s11 = ssub.s32 1, %s9
  %s12 = scalar_select 0, %s11, %s9
  $region1: #{tpu_custom_call.1} parent=0
    #allocation2 [shape = 'u8[262144]{0}', space=vmem, size = 0x40000, scoped, tag = 'input window, operand 2, single buffered']
    #allocation3 [shape = 's32[1]{0}', space=sflag, size = 0x4, scoped, tag = 'scoped memory for tpu_custom_call.1']
    #allocation4 [shape = 's32[1]{0}', space=sflag, size = 0x4, scoped, tag = 'scoped memory for tpu_custom_call.1']
    #allocation5 [shape = 'u8[524288]{0}', space=vmem, size = 0x80000, scoped, tag = 'input window, operand 4, single buffered']
    #allocation6 [shape = 's32[1]{0}', space=sflag, size = 0x4, scoped, tag = 'scoped memory for tpu_custom_call.1']
    #allocation7 [shape = 'u8[65536]{0}', space=vmem, size = 0x10000, scoped, tag = 'input window, operand 6, single buffered']
    #allocation8 [shape = 'u8[4096]{0}', space=vmem, size = 0x1000, scoped, tag = 'output window, operand 0, single buffered']
    %13 = vsyncpa [#allocation3], 0
    %14 = vsyncpa [#allocation6], 0
    %15 = vsyncpa [#allocation4], 0
    // Predicated region
    $region2: #{tpu_custom_call.1} parent=1 // pred_check
      _
    $region3: #{tpu_custom_call.1} parent=1 // pred_check_branch
      %17 = sbr.rel (0) target = $region5
    $region4: #{tpu_custom_call.1} parent=1 // pred_region
      _
    $region5: #{tpu_custom_call.1} parent=1 // pred_fallthru
      _
    // Predicated region
    $region6: #{tpu_custom_call.1} parent=1 // pred_check
      _
    $region7: #{tpu_custom_call.1} parent=1 // pred_check_branch
      %19 = sbr.rel (0) target = $region9
    $region8: #{tpu_custom_call.1} parent=1 // pred_region
      _
    $region9: #{tpu_custom_call.1} parent=1 // pred_fallthru
      _
    // Predicated region
    $region10: #{tpu_custom_call.1} parent=1 // pred_check
      _
    $region11: #{tpu_custom_call.1} parent=1 // pred_check_branch
      %21 = sbr.rel (0) target = $region13
    $region12: #{tpu_custom_call.1} parent=1 // pred_region
      %23 = vsyncadd [#allocation3], 0
      %s24 = sshll.u32 %s2, 4
      %s25 = int_to_ptr.hbm [resolvable:$true] %s24
      %s26 = sshll.u32 [#allocation2], 4
      %s27 = int_to_ptr.vmem [resolvable:$true] %s26
      %32 = dma.hbm_to_vmem [thread:$0]  %s25, 8192, %s27, [#allocation3], 512, 512, 32
    $region13: #{tpu_custom_call.1} parent=1 // pred_fallthru
      _
    // Predicated region
    $region14: #{tpu_custom_call.1} parent=1 // pred_check
      _
    $region15: #{tpu_custom_call.1} parent=1 // pred_check_branch
      %34 = sbr.rel (0) target = $region17
    $region16: #{tpu_custom_call.1} parent=1 // pred_region
      _
    $region17: #{tpu_custom_call.1} parent=1 // pred_fallthru
      _
    // Predicated region
    $region18: #{tpu_custom_call.1} parent=1 // pred_check
      _
    $region19: #{tpu_custom_call.1} parent=1 // pred_check_branch
      %36 = sbr.rel (0) target = $region21
    $region20: #{tpu_custom_call.1} parent=1 // pred_region
      %38 = vsyncadd [#allocation6], 0
      %s39 = sshll.u32 %s4, 4
      %s40 = int_to_ptr.hbm [resolvable:$true] %s39
      %s41 = sshll.u32 [#allocation5], 4
      %s42 = int_to_ptr.vmem [resolvable:$true] %s41
      %47 = dma.hbm_to_vmem [thread:$0]  %s40, 16384, %s42, [#allocation6], 512, 512, 32
    $region21: #{tpu_custom_call.1} parent=1 // pred_fallthru
      _
    // Predicated region
    $region22: #{tpu_custom_call.1} parent=1 // pred_check
      _
    $region23: #{tpu_custom_call.1} parent=1 // pred_check_branch
      %49 = sbr.rel (0) target = $region25
    $region24: #{tpu_custom_call.1} parent=1 // pred_region
      _
    $region25: #{tpu_custom_call.1} parent=1 // pred_fallthru
      _
    // Predicated region
    $region26: #{tpu_custom_call.1} parent=1 // pred_check
      _
    $region27: #{tpu_custom_call.1} parent=1 // pred_check_branch
      %51 = sbr.rel (0) target = $region29
    $region28: #{tpu_custom_call.1} parent=1 // pred_region
      %53 = vsyncadd [#allocation6], 0
      %s54 = sshll.u32 %s6, 4
      %s55 = int_to_ptr.hbm [resolvable:$true] %s54
      %s56 = sshll.u32 [#allocation7], 4
      %s57 = int_to_ptr.vmem [resolvable:$true] %s56
      %62 = dma.hbm_to_vmem [thread:$0]  %s55, 2048, %s57, [#allocation6], 128, 128, 8
    $region29: #{tpu_custom_call.1} parent=1 // pred_fallthru
      _
    // Predicated region
    $region30: #{tpu_custom_call.1} parent=1 // pred_check
      _
    $region31: #{tpu_custom_call.1} parent=1 // pred_check_branch
      %64 = sbr.rel (0) target = $region33
    $region32: #{tpu_custom_call.1} parent=1 // pred_region
      _
    $region33: #{tpu_custom_call.1} parent=1 // pred_fallthru
      _
    // Predicated region
    $region34: #{tpu_custom_call.1} parent=1 // pred_check
      _
    $region35: #{tpu_custom_call.1} parent=1 // pred_check_branch
      %66 = sbr.rel (0) target = $region37
    $region36: #{tpu_custom_call.1} parent=1 // pred_region
      %68 = dma.done [#allocation3], 8192
    $region37: #{tpu_custom_call.1} parent=1 // pred_fallthru
      _
    // Predicated region
    $region38: #{tpu_custom_call.1} parent=1 // pred_check
      _
    $region39: #{tpu_custom_call.1} parent=1 // pred_check_branch
      %70 = sbr.rel (0) target = $region41
    $region40: #{tpu_custom_call.1} parent=1 // pred_region
      %72 = dma.done [#allocation6], 16384
    $region41: #{tpu_custom_call.1} parent=1 // pred_fallthru
      _
    // Predicated region
    $region42: #{tpu_custom_call.1} parent=1 // pred_check
      _
    $region43: #{tpu_custom_call.1} parent=1 // pred_check_branch
      %74 = sbr.rel (0) target = $region45
    $region44: #{tpu_custom_call.1} parent=1 // pred_region
      %76 = dma.done [#allocation6], 2048
    $region45: #{tpu_custom_call.1} parent=1 // pred_fallthru
      _
    %v77 = vld [vmem:[%s0] sm:$0xff]
    %v78 = vld [vmem:[%s0 + $0x8] sm:$0xff]
    %v79 = vld [vmem:[%s0 + $0x10] sm:$0xff]
    %v80 = vld [vmem:[%s0 + $0x18] sm:$0xff]
    %v81 = vld [vmem:[%s0 + $0x20] sm:$0xff]
    %v82 = vld [vmem:[%s0 + $0x28] sm:$0xff]
    %v83 = vld [vmem:[%s0 + $0x30] sm:$0xff]
    %v84 = vld [vmem:[%s0 + $0x38] sm:$0xff]
    %v85 = vld [vmem:[%s1] sm:$0xff]
    %v86 = vld [vmem:[%s1 + $0x8] sm:$0xff]
    %v87 = vld [vmem:[%s1 + $0x10] sm:$0xff]
    %v88 = vld [vmem:[%s1 + $0x18] sm:$0xff]
    %v89 = vld [vmem:[%s3] sm:$0xf]
    %v91 = vperm.slane %v89, 0
    %v92 = vperm.slane %v89, 1
    %v93 = vperm.slane %v89, 2
    %v94 = vperm.slane %v89, 3
    %vm99 = vcmask 64512
    %v101 = vsel %vm99, %v77, 0
    %v104 = vsel %vm99, %v78, 0
    %v107 = vsel %vm99, %v79, 0
    %v110 = vsel %vm99, %v80, 0
    %v113 = vsel %vm99, %v81, 0
    %v116 = vsel %vm99, %v82, 0
    %v119 = vsel %vm99, %v83, 0
    %v122 = vsel %vm99, %v84, 0
    %124 = vmatpush.msra.mxu0 0.0
    %125 = vmatpush.msra.mxu0 0.0
    %126 = vmatpush.msra.mxu0 0.0
    %127 = vmatpush.msra.mxu0 0.0
    %128 = vmatpush.msra.mxu0 0.0
    %129 = vmatpush.msra.mxu0 0.0
    %130 = vmatpush.msra.mxu0 0.0
    %131 = vmatpush.msra.mxu0 0.0
    %132 = vmatpush.msra.mxu0 0.0
    %133 = vmatpush.msra.mxu0 0.0
    %134 = vmatpush.msra.mxu0 0.0
    %135 = vmatpush.msra.mxu0 0.0
    %136 = vmatpush.msra.mxu0 0.0
    %137 = vmatpush.msra.mxu0 0.0
    %138 = vmatpush.msra.mxu0 0.0
    %139 = vmatpush.msra.mxu0 %v85
    %140 = vmatmul.f32.gmra.mxu0 %v101
    %v141 = vpop.f32.mrf.mxu0
    %v142 = vadd.f32 %v91, %v141
    %143 = vmatmul.f32.gmra.mxu0 %v104
    %v144 = vpop.f32.mrf.mxu0
    %v145 = vadd.f32 %v91, %v144
    %146 = vmatmul.f32.gmra.mxu0 %v107
    %v147 = vpop.f32.mrf.mxu0
    %v148 = vadd.f32 %v91, %v147
    %149 = vmatmul.f32.gmra.mxu0 %v110
    %v150 = vpop.f32.mrf.mxu0
    %v151 = vadd.f32 %v91, %v150
    %152 = vmatmul.f32.gmra.mxu0 %v113
    %v153 = vpop.f32.mrf.mxu0
    %v154 = vadd.f32 %v91, %v153
    %155 = vmatmul.f32.gmra.mxu0 %v116
    %v156 = vpop.f32.mrf.mxu0
    %v157 = vadd.f32 %v91, %v156
    %158 = vmatmul.f32.gmra.mxu0 %v119
    %v159 = vpop.f32.mrf.mxu0
    %v160 = vadd.f32 %v91, %v159
    %161 = vmatmul.f32.gmra.mxu0 %v122
    %v162 = vpop.f32.mrf.mxu0
    %v163 = vadd.f32 %v91, %v162
    %164 = vdwg.mxu0
    %165 = vmatpush.msra.mxu0 0.0
    %166 = vmatpush.msra.mxu0 0.0
    %167 = vmatpush.msra.mxu0 0.0
    %168 = vmatpush.msra.mxu0 0.0
    %169 = vmatpush.msra.mxu0 0.0
    %170 = vmatpush.msra.mxu0 0.0
    %171 = vmatpush.msra.mxu0 0.0
    %172 = vmatpush.msra.mxu0 0.0
    %173 = vmatpush.msra.mxu0 0.0
    %174 = vmatpush.msra.mxu0 0.0
    %175 = vmatpush.msra.mxu0 0.0
    %176 = vmatpush.msra.mxu0 0.0
    %177 = vmatpush.msra.mxu0 0.0
    %178 = vmatpush.msra.mxu0 0.0
    %179 = vmatpush.msra.mxu0 0.0
    %180 = vmatpush.msra.mxu0 %v86
    %181 = vmatmul.f32.gmra.mxu0 %v101
    %v182 = vpop.f32.mrf.mxu0
    %v183 = vadd.f32 %v92, %v182
    %184 = vmatmul.f32.gmra.mxu0 %v104
    %v185 = vpop.f32.mrf.mxu0
    %v186 = vadd.f32 %v92, %v185
    %187 = vmatmul.f32.gmra.mxu0 %v107
    %v188 = vpop.f32.mrf.mxu0
    %v189 = vadd.f32 %v92, %v188
    %190 = vmatmul.f32.gmra.mxu0 %v110
    %v191 = vpop.f32.mrf.mxu0
    %v192 = vadd.f32 %v92, %v191
    %193 = vmatmul.f32.gmra.mxu0 %v113
    %v194 = vpop.f32.mrf.mxu0
    %v195 = vadd.f32 %v92, %v194
    %196 = vmatmul.f32.gmra.mxu0 %v116
    %v197 = vpop.f32.mrf.mxu0
    %v198 = vadd.f32 %v92, %v197
    %199 = vmatmul.f32.gmra.mxu0 %v119
    %v200 = vpop.f32.mrf.mxu0
    %v201 = vadd.f32 %v92, %v200
    %202 = vmatmul.f32.gmra.mxu0 %v122
    %v203 = vpop.f32.mrf.mxu0
    %v204 = vadd.f32 %v92, %v203
    %205 = vdwg.mxu0
    %206 = vmatpush.msra.mxu0 0.0
    %207 = vmatpush.msra.mxu0 0.0
    %208 = vmatpush.msra.mxu0 0.0
    %209 = vmatpush.msra.mxu0 0.0
    %210 = vmatpush.msra.mxu0 0.0
    %211 = vmatpush.msra.mxu0 0.0
    %212 = vmatpush.msra.mxu0 0.0
    %213 = vmatpush.msra.mxu0 0.0
    %214 = vmatpush.msra.mxu0 0.0
    %215 = vmatpush.msra.mxu0 0.0
    %216 = vmatpush.msra.mxu0 0.0
    %217 = vmatpush.msra.mxu0 0.0
    %218 = vmatpush.msra.mxu0 0.0
    %219 = vmatpush.msra.mxu0 0.0
    %220 = vmatpush.msra.mxu0 0.0
    %221 = vmatpush.msra.mxu0 %v87
    %222 = vmatmul.f32.gmra.mxu0 %v101
    %v223 = vpop.f32.mrf.mxu0
    %v224 = vadd.f32 %v93, %v223
    %225 = vmatmul.f32.gmra.mxu0 %v104
    %v226 = vpop.f32.mrf.mxu0
    %v227 = vadd.f32 %v93, %v226
    %228 = vmatmul.f32.gmra.mxu0 %v107
    %v229 = vpop.f32.mrf.mxu0
    %v230 = vadd.f32 %v93, %v229
    %231 = vmatmul.f32.gmra.mxu0 %v110
    %v232 = vpop.f32.mrf.mxu0
    %v233 = vadd.f32 %v93, %v232
    %234 = vmatmul.f32.gmra.mxu0 %v113
    %v235 = vpop.f32.mrf.mxu0
    %v236 = vadd.f32 %v93, %v235
    %237 = vmatmul.f32.gmra.mxu0 %v116
    %v238 = vpop.f32.mrf.mxu0
    %v239 = vadd.f32 %v93, %v238
    %240 = vmatmul.f32.gmra.mxu0 %v119
    %v241 = vpop.f32.mrf.mxu0
    %v242 = vadd.f32 %v93, %v241
    %243 = vmatmul.f32.gmra.mxu0 %v122
    %v244 = vpop.f32.mrf.mxu0
    %v245 = vadd.f32 %v93, %v244
    %246 = vdwg.mxu0
    %247 = vmatpush.msra.mxu0 0.0
    %248 = vmatpush.msra.mxu0 0.0
    %249 = vmatpush.msra.mxu0 0.0
    %250 = vmatpush.msra.mxu0 0.0
    %251 = vmatpush.msra.mxu0 0.0
    %252 = vmatpush.msra.mxu0 0.0
    %253 = vmatpush.msra.mxu0 0.0
    %254 = vmatpush.msra.mxu0 0.0
    %255 = vmatpush.msra.mxu0 0.0
    %256 = vmatpush.msra.mxu0 0.0
    %257 = vmatpush.msra.mxu0 0.0
    %258 = vmatpush.msra.mxu0 0.0
    %259 = vmatpush.msra.mxu0 0.0
    %260 = vmatpush.msra.mxu0 0.0
    %261 = vmatpush.msra.mxu0 0.0
    %262 = vmatpush.msra.mxu0 %v88
    %263 = vmatmul.f32.gmra.mxu0 %v101
    %v264 = vpop.f32.mrf.mxu0
    %v265 = vadd.f32 %v94, %v264
    %266 = vmatmul.f32.gmra.mxu0 %v104
    %v267 = vpop.f32.mrf.mxu0
    %v268 = vadd.f32 %v94, %v267
    %269 = vmatmul.f32.gmra.mxu0 %v107
    %v270 = vpop.f32.mrf.mxu0
    %v271 = vadd.f32 %v94, %v270
    %272 = vmatmul.f32.gmra.mxu0 %v110
    %v273 = vpop.f32.mrf.mxu0
    %v274 = vadd.f32 %v94, %v273
    %275 = vmatmul.f32.gmra.mxu0 %v113
    %v276 = vpop.f32.mrf.mxu0
    %v277 = vadd.f32 %v94, %v276
    %278 = vmatmul.f32.gmra.mxu0 %v116
    %v279 = vpop.f32.mrf.mxu0
    %v280 = vadd.f32 %v94, %v279
    %281 = vmatmul.f32.gmra.mxu0 %v119
    %v282 = vpop.f32.mrf.mxu0
    %v283 = vadd.f32 %v94, %v282
    %284 = vmatmul.f32.gmra.mxu0 %v122
    %v285 = vpop.f32.mrf.mxu0
    %v286 = vadd.f32 %v94, %v285
    %287 = vdwg.mxu0
    %v288 = vld [vmem:[#allocation2] sm:$0xff]
    %v289 = vld [vmem:[#allocation2 + $0x8] sm:$0xff]
    %v290 = vld [vmem:[#allocation2 + $0x10] sm:$0xff]
    %v291 = vld [vmem:[#allocation2 + $0x18] sm:$0xff]
    %v292 = vld [vmem:[#allocation2 + $0x20] sm:$0xff]
    %v293 = vld [vmem:[#allocation2 + $0x28] sm:$0xff]
    %v294 = vld [vmem:[#allocation2 + $0x30] sm:$0xff]
    %v295 = vld [vmem:[#allocation2 + $0x38] sm:$0xff]
    %v296 = vld [vmem:[#allocation2 + $0x40] sm:$0xff]
    %v297 = vld [vmem:[#allocation2 + $0x48] sm:$0xff]
    %v298 = vld [vmem:[#allocation2 + $0x50] sm:$0xff]
    %v299 = vld [vmem:[#allocation2 + $0x58] sm:$0xff]
    %v300 = vld [vmem:[#allocation2 + $0x60] sm:$0xff]
    %v301 = vld [vmem:[#allocation2 + $0x68] sm:$0xff]
    %v302 = vld [vmem:[#allocation2 + $0x70] sm:$0xff]
    %v303 = vld [vmem:[#allocation2 + $0x78] sm:$0xff]
    %v304 = vld [vmem:[#allocation2 + $0x80] sm:$0xff]
    %v305 = vld [vmem:[#allocation2 + $0x88] sm:$0xff]
    %v306 = vld [vmem:[#allocation2 + $0x90] sm:$0xff]
    %v307 = vld [vmem:[#allocation2 + $0x98] sm:$0xff]
    %v308 = vld [vmem:[#allocation2 + $0xa0] sm:$0xff]
    %v309 = vld [vmem:[#allocation2 + $0xa8] sm:$0xff]
    %v310 = vld [vmem:[#allocation2 + $0xb0] sm:$0xff]
    %v311 = vld [vmem:[#allocation2 + $0xb8] sm:$0xff]
    %v312 = vld [vmem:[#allocation2 + $0xc0] sm:$0xff]
    %v313 = vld [vmem:[#allocation2 + $0xc8] sm:$0xff]
    %v314 = vld [vmem:[#allocation2 + $0xd0] sm:$0xff]
    %v315 = vld [vmem:[#allocation2 + $0xd8] sm:$0xff]
    %v316 = vld [vmem:[#allocation2 + $0xe0] sm:$0xff]
    %v317 = vld [vmem:[#allocation2 + $0xe8] sm:$0xff]
    %v318 = vld [vmem:[#allocation2 + $0xf0] sm:$0xff]
    %v319 = vld [vmem:[#allocation2 + $0xf8] sm:$0xff]
    %v320 = vld [vmem:[#allocation2 + $0x100] sm:$0xff]
    %v321 = vld [vmem:[#allocation2 + $0x108] sm:$0xff]
    %v322 = vld [vmem:[#allocation2 + $0x110] sm:$0xff]
    %v323 = vld [vmem:[#allocation2 + $0x118] sm:$0xff]
    %v324 = vld [vmem:[#allocation2 + $0x120] sm:$0xff]
    %v325 = vld [vmem:[#allocation2 + $0x128] sm:$0xff]
    %v326 = vld [vmem:[#allocation2 + $0x130] sm:$0xff]
    %v327 = vld [vmem:[#allocation2 + $0x138] sm:$0xff]
    %v328 = vld [vmem:[#allocation2 + $0x140] sm:$0xff]
    %v329 = vld [vmem:[#allocation2 + $0x148] sm:$0xff]
    %v330 = vld [vmem:[#allocation2 + $0x150] sm:$0xff]
    %v331 = vld [vmem:[#allocation2 + $0x158] sm:$0xff]
    %v332 = vld [vmem:[#allocation2 + $0x160] sm:$0xff]
    %v333 = vld [vmem:[#allocation2 + $0x168] sm:$0xff]
    %v334 = vld [vmem:[#allocation2 + $0x170] sm:$0xff]
    %v335 = vld [vmem:[#allocation2 + $0x178] sm:$0xff]
    %v336 = vld [vmem:[#allocation2 + $0x180] sm:$0xff]
    %v337 = vld [vmem:[#allocation2 + $0x188] sm:$0xff]
    %v338 = vld [vmem:[#allocation2 + $0x190] sm:$0xff]
    %v339 = vld [vmem:[#allocation2 + $0x198] sm:$0xff]
    %v340 = vld [vmem:[#allocation2 + $0x1a0] sm:$0xff]
    %v341 = vld [vmem:[#allocation2 + $0x1a8] sm:$0xff]
    %v342 = vld [vmem:[#allocation2 + $0x1b0] sm:$0xff]
    %v343 = vld [vmem:[#allocation2 + $0x1b8] sm:$0xff]
    %v344 = vld [vmem:[#allocation2 + $0x1c0] sm:$0xff]
    %v345 = vld [vmem:[#allocation2 + $0x1c8] sm:$0xff]
    %v346 = vld [vmem:[#allocation2 + $0x1d0] sm:$0xff]
    %v347 = vld [vmem:[#allocation2 + $0x1d8] sm:$0xff]
    %v348 = vld [vmem:[#allocation2 + $0x1e0] sm:$0xff]
    %v349 = vld [vmem:[#allocation2 + $0x1e8] sm:$0xff]
    %v350 = vld [vmem:[#allocation2 + $0x1f0] sm:$0xff]
    %v351 = vld [vmem:[#allocation2 + $0x1f8] sm:$0xff]
    %v352 = vld [vmem:[#allocation5] sm:$0xff]
    %v353 = vld [vmem:[#allocation5 + $0x8] sm:$0xff]
    %v354 = vld [vmem:[#allocation5 + $0x10] sm:$0xff]
    %v355 = vld [vmem:[#allocation5 + $0x18] sm:$0xff]
    %v356 = vld [vmem:[#allocation5 + $0x20] sm:$0xff]
    %v357 = vld [vmem:[#allocation5 + $0x28] sm:$0xff]
    %v358 = vld [vmem:[#allocation5 + $0x30] sm:$0xff]
    %v359 = vld [vmem:[#allocation5 + $0x38] sm:$0xff]
    %v360 = vld [vmem:[#allocation5 + $0x40] sm:$0xff]
    %v361 = vld [vmem:[#allocation5 + $0x48] sm:$0xff]
    %v362 = vld [vmem:[#allocation5 + $0x50] sm:$0xff]
    %v363 = vld [vmem:[#allocation5 + $0x58] sm:$0xff]
    %v364 = vld [vmem:[#allocation5 + $0x60] sm:$0xff]
    %v365 = vld [vmem:[#allocation5 + $0x68] sm:$0xff]
    %v366 = vld [vmem:[#allocation5 + $0x70] sm:$0xff]
    %v367 = vld [vmem:[#allocation5 + $0x78] sm:$0xff]
    %v368 = vld [vmem:[#allocation5 + $0x80] sm:$0xff]
    %v369 = vld [vmem:[#allocation5 + $0x88] sm:$0xff]
    %v370 = vld [vmem:[#allocation5 + $0x90] sm:$0xff]
    %v371 = vld [vmem:[#allocation5 + $0x98] sm:$0xff]
    %v372 = vld [vmem:[#allocation5 + $0xa0] sm:$0xff]
    %v373 = vld [vmem:[#allocation5 + $0xa8] sm:$0xff]
    %v374 = vld [vmem:[#allocation5 + $0xb0] sm:$0xff]
    %v375 = vld [vmem:[#allocation5 + $0xb8] sm:$0xff]
    %v376 = vld [vmem:[#allocation5 + $0xc0] sm:$0xff]
    %v377 = vld [vmem:[#allocation5 + $0xc8] sm:$0xff]
    %v378 = vld [vmem:[#allocation5 + $0xd0] sm:$0xff]
    %v379 = vld [vmem:[#allocation5 + $0xd8] sm:$0xff]
    %v380 = vld [vmem:[#allocation5 + $0xe0] sm:$0xff]
    %v381 = vld [vmem:[#allocation5 + $0xe8] sm:$0xff]
    %v382 = vld [vmem:[#allocation5 + $0xf0] sm:$0xff]
    %v383 = vld [vmem:[#allocation5 + $0xf8] sm:$0xff]
    %v384 = vld [vmem:[#allocation5 + $0x100] sm:$0xff]
    %v385 = vld [vmem:[#allocation5 + $0x108] sm:$0xff]
    %v386 = vld [vmem:[#allocation5 + $0x110] sm:$0xff]
    %v387 = vld [vmem:[#allocation5 + $0x118] sm:$0xff]
    %v388 = vld [vmem:[#allocation5 + $0x120] sm:$0xff]
    %v389 = vld [vmem:[#allocation5 + $0x128] sm:$0xff]
    %v390 = vld [vmem:[#allocation5 + $0x130] sm:$0xff]
    %v391 = vld [vmem:[#allocation5 + $0x138] sm:$0xff]
    %v392 = vld [vmem:[#allocation5 + $0x140] sm:$0xff]
    %v393 = vld [vmem:[#allocation5 + $0x148] sm:$0xff]
    %v394 = vld [vmem:[#allocation5 + $0x150] sm:$0xff]
    %v395 = vld [vmem:[#allocation5 + $0x158] sm:$0xff]
    %v396 = vld [vmem:[#allocation5 + $0x160] sm:$0xff]
    %v397 = vld [vmem:[#allocation5 + $0x168] sm:$0xff]
    %v398 = vld [vmem:[#allocation5 + $0x170] sm:$0xff]
    %v399 = vld [vmem:[#allocation5 + $0x178] sm:$0xff]
    %v400 = vld [vmem:[#allocation5 + $0x180] sm:$0xff]
    %v401 = vld [vmem:[#allocation5 + $0x188] sm:$0xff]
    %v402 = vld [vmem:[#allocation5 + $0x190] sm:$0xff]
    %v403 = vld [vmem:[#allocation5 + $0x198] sm:$0xff]
    %v404 = vld [vmem:[#allocation5 + $0x1a0] sm:$0xff]
    %v405 = vld [vmem:[#allocation5 + $0x1a8] sm:$0xff]
    %v406 = vld [vmem:[#allocation5 + $0x1b0] sm:$0xff]
    %v407 = vld [vmem:[#allocation5 + $0x1b8] sm:$0xff]
    %v408 = vld [vmem:[#allocation5 + $0x1c0] sm:$0xff]
    %v409 = vld [vmem:[#allocation5 + $0x1c8] sm:$0xff]
    %v410 = vld [vmem:[#allocation5 + $0x1d0] sm:$0xff]
    %v411 = vld [vmem:[#allocation5 + $0x1d8] sm:$0xff]
    %v412 = vld [vmem:[#allocation5 + $0x1e0] sm:$0xff]
    %v413 = vld [vmem:[#allocation5 + $0x1e8] sm:$0xff]
    %v414 = vld [vmem:[#allocation5 + $0x1f0] sm:$0xff]
    %v415 = vld [vmem:[#allocation5 + $0x1f8] sm:$0xff]
    %v416 = vld [vmem:[#allocation5 + $0x200] sm:$0xff]
    %v417 = vld [vmem:[#allocation5 + $0x208] sm:$0xff]
    %v418 = vld [vmem:[#allocation5 + $0x210] sm:$0xff]
    %v419 = vld [vmem:[#allocation5 + $0x218] sm:$0xff]
    %v420 = vld [vmem:[#allocation5 + $0x220] sm:$0xff]
    %v421 = vld [vmem:[#allocation5 + $0x228] sm:$0xff]
    %v422 = vld [vmem:[#allocation5 + $0x230] sm:$0xff]
    %v423 = vld [vmem:[#allocation5 + $0x238] sm:$0xff]
    %v424 = vld [vmem:[#allocation5 + $0x240] sm:$0xff]
    %v425 = vld [vmem:[#allocation5 + $0x248] sm:$0xff]
    %v426 = vld [vmem:[#allocation5 + $0x250] sm:$0xff]
    %v427 = vld [vmem:[#allocation5 + $0x258] sm:$0xff]
    %v428 = vld [vmem:[#allocation5 + $0x260] sm:$0xff]
    %v429 = vld [vmem:[#allocation5 + $0x268] sm:$0xff]
    %v430 = vld [vmem:[#allocation5 + $0x270] sm:$0xff]
    %v431 = vld [vmem:[#allocation5 + $0x278] sm:$0xff]
    %v432 = vld [vmem:[#allocation5 + $0x280] sm:$0xff]
    %v433 = vld [vmem:[#allocation5 + $0x288] sm:$0xff]
    %v434 = vld [vmem:[#allocation5 + $0x290] sm:$0xff]
    %v435 = vld [vmem:[#allocation5 + $0x298] sm:$0xff]
    %v436 = vld [vmem:[#allocation5 + $0x2a0] sm:$0xff]
    %v437 = vld [vmem:[#allocation5 + $0x2a8] sm:$0xff]
    %v438 = vld [vmem:[#allocation5 + $0x2b0] sm:$0xff]
    %v439 = vld [vmem:[#allocation5 + $0x2b8] sm:$0xff]
    %v440 = vld [vmem:[#allocation5 + $0x2c0] sm:$0xff]
    %v441 = vld [vmem:[#allocation5 + $0x2c8] sm:$0xff]
    %v442 = vld [vmem:[#allocation5 + $0x2d0] sm:$0xff]
    %v443 = vld [vmem:[#allocation5 + $0x2d8] sm:$0xff]
    %v444 = vld [vmem:[#allocation5 + $0x2e0] sm:$0xff]
    %v445 = vld [vmem:[#allocation5 + $0x2e8] sm:$0xff]
    %v446 = vld [vmem:[#allocation5 + $0x2f0] sm:$0xff]
    %v447 = vld [vmem:[#allocation5 + $0x2f8] sm:$0xff]
    %v448 = vld [vmem:[#allocation5 + $0x300] sm:$0xff]
    %v449 = vld [vmem:[#allocation5 + $0x308] sm:$0xff]
    %v450 = vld [vmem:[#allocation5 + $0x310] sm:$0xff]
    %v451 = vld [vmem:[#allocation5 + $0x318] sm:$0xff]
    %v452 = vld [vmem:[#allocation5 + $0x320] sm:$0xff]
    %v453 = vld [vmem:[#allocation5 + $0x328] sm:$0xff]
    %v454 = vld [vmem:[#allocation5 + $0x330] sm:$0xff]
    %v455 = vld [vmem:[#allocation5 + $0x338] sm:$0xff]
    %v456 = vld [vmem:[#allocation5 + $0x340] sm:$0xff]
    %v457 = vld [vmem:[#allocation5 + $0x348] sm:$0xff]
    %v458 = vld [vmem:[#allocation5 + $0x350] sm:$0xff]
    %v459 = vld [vmem:[#allocation5 + $0x358] sm:$0xff]
    %v460 = vld [vmem:[#allocation5 + $0x360] sm:$0xff]
    %v461 = vld [vmem:[#allocation5 + $0x368] sm:$0xff]
    %v462 = vld [vmem:[#allocation5 + $0x370] sm:$0xff]
    %v463 = vld [vmem:[#allocation5 + $0x378] sm:$0xff]
    %v464 = vld [vmem:[#allocation5 + $0x380] sm:$0xff]
    %v465 = vld [vmem:[#allocation5 + $0x388] sm:$0xff]
    %v466 = vld [vmem:[#allocation5 + $0x390] sm:$0xff]
    %v467 = vld [vmem:[#allocation5 + $0x398] sm:$0xff]
    %v468 = vld [vmem:[#allocation5 + $0x3a0] sm:$0xff]
    %v469 = vld [vmem:[#allocation5 + $0x3a8] sm:$0xff]
    %v470 = vld [vmem:[#allocation5 + $0x3b0] sm:$0xff]
    %v471 = vld [vmem:[#allocation5 + $0x3b8] sm:$0xff]
    %v472 = vld [vmem:[#allocation5 + $0x3c0] sm:$0xff]
    %v473 = vld [vmem:[#allocation5 + $0x3c8] sm:$0xff]
    %v474 = vld [vmem:[#allocation5 + $0x3d0] sm:$0xff]
    %v475 = vld [vmem:[#allocation5 + $0x3d8] sm:$0xff]
    %v476 = vld [vmem:[#allocation5 + $0x3e0] sm:$0xff]
    %v477 = vld [vmem:[#allocation5 + $0x3e8] sm:$0xff]
    %v478 = vld [vmem:[#allocation5 + $0x3f0] sm:$0xff]
    %v479 = vld [vmem:[#allocation5 + $0x3f8] sm:$0xff]
    %v480 = vld [vmem:[%s5] sm:$0xf]
    %v482 = vperm.slane %v480, 0
    %v483 = vperm.slane %v480, 1
    %v484 = vperm.slane %v480, 2
    %v485 = vperm.slane %v480, 3
    %490 = vmatpush.msra.mxu0 %v348
    %491 = vmatpush.msra.mxu0 %v344
    %492 = vmatpush.msra.mxu0 %v340
    %493 = vmatpush.msra.mxu0 %v336
    %494 = vmatpush.msra.mxu0 %v332
    %495 = vmatpush.msra.mxu0 %v328
    %496 = vmatpush.msra.mxu0 %v324
    %497 = vmatpush.msra.mxu0 %v320
    %498 = vmatpush.msra.mxu0 %v316
    %499 = vmatpush.msra.mxu0 %v312
    %500 = vmatpush.msra.mxu0 %v308
    %501 = vmatpush.msra.mxu0 %v304
    %502 = vmatpush.msra.mxu0 %v300
    %503 = vmatpush.msra.mxu0 %v296
    %504 = vmatpush.msra.mxu0 %v292
    %505 = vmatpush.msra.mxu0 %v288
    %506 = vmatmul.f32.gmra.mxu0 0.0
    %v507 = vpop.f32.mrf.mxu0
    %v508 = vadd.f32 0.0, %v507
    %509 = vdwg.mxu0
    %510 = vmatpush.msra.mxu0 %v349
    %511 = vmatpush.msra.mxu0 %v345
    %512 = vmatpush.msra.mxu0 %v341
    %513 = vmatpush.msra.mxu0 %v337
    %514 = vmatpush.msra.mxu0 %v333
    %515 = vmatpush.msra.mxu0 %v329
    %516 = vmatpush.msra.mxu0 %v325
    %517 = vmatpush.msra.mxu0 %v321
    %518 = vmatpush.msra.mxu0 %v317
    %519 = vmatpush.msra.mxu0 %v313
    %520 = vmatpush.msra.mxu0 %v309
    %521 = vmatpush.msra.mxu0 %v305
    %522 = vmatpush.msra.mxu0 %v301
    %523 = vmatpush.msra.mxu0 %v297
    %524 = vmatpush.msra.mxu0 %v293
    %525 = vmatpush.msra.mxu0 %v289
    %526 = vmatmul.f32.gmra.mxu0 0.0
    %v527 = vpop.f32.mrf.mxu0
    %v528 = vadd.f32 0.0, %v527
    %529 = vdwg.mxu0
    %530 = vmatpush.msra.mxu0 %v350
    %531 = vmatpush.msra.mxu0 %v346
    %532 = vmatpush.msra.mxu0 %v342
    %533 = vmatpush.msra.mxu0 %v338
    %534 = vmatpush.msra.mxu0 %v334
    %535 = vmatpush.msra.mxu0 %v330
    %536 = vmatpush.msra.mxu0 %v326
    %537 = vmatpush.msra.mxu0 %v322
    %538 = vmatpush.msra.mxu0 %v318
    %539 = vmatpush.msra.mxu0 %v314
    %540 = vmatpush.msra.mxu0 %v310
    %541 = vmatpush.msra.mxu0 %v306
    %542 = vmatpush.msra.mxu0 %v302
    %543 = vmatpush.msra.mxu0 %v298
    %544 = vmatpush.msra.mxu0 %v294
    %545 = vmatpush.msra.mxu0 %v290
    %546 = vmatmul.f32.gmra.mxu0 0.0
    %v547 = vpop.f32.mrf.mxu0
    %v548 = vadd.f32 0.0, %v547
    %549 = vdwg.mxu0
    %550 = vmatpush.msra.mxu0 %v351
    %551 = vmatpush.msra.mxu0 %v347
    %552 = vmatpush.msra.mxu0 %v343
    %553 = vmatpush.msra.mxu0 %v339
    %554 = vmatpush.msra.mxu0 %v335
    %555 = vmatpush.msra.mxu0 %v331
    %556 = vmatpush.msra.mxu0 %v327
    %557 = vmatpush.msra.mxu0 %v323
    %558 = vmatpush.msra.mxu0 %v319
    %559 = vmatpush.msra.mxu0 %v315
    %560 = vmatpush.msra.mxu0 %v311
    %561 = vmatpush.msra.mxu0 %v307
    %562 = vmatpush.msra.mxu0 %v303
    %563 = vmatpush.msra.mxu0 %v299
    %564 = vmatpush.msra.mxu0 %v295
    %565 = vmatpush.msra.mxu0 %v291
    %566 = vmatmul.f32.gmra.mxu0 0.0
    %v567 = vpop.f32.mrf.mxu0
    %v568 = vadd.f32 0.0, %v567
    %569 = vdwg.mxu0
    %v570 = vadd.f32 %v142, %v508
    %v571 = vadd.f32 %v183, %v528
    %v572 = vadd.f32 %v224, %v548
    %v573 = vadd.f32 %v265, %v568
    %v574 = vxor.u32 %v570, 2147483648
    %v575 = vmul.f32 %v574, 1.442695
    %v576 = vpow.pop %v575
    %v577 = vadd.f32 %v576, 1.0
    %v578 = vrcp.pop %v577
    %v579 = vmul.f32 %v577, %v578
    %v580 = vsub.f32 1.0, %v579
    %v581 = vmul.f32 %v578, %v580
    %v582 = vadd.f32 %v578, %v581
    %vm583 = vweird.f32 %v577
    %vm584 = vweird.f32 %v578
    %vm585 = vmor %vm583, %vm584
    %v586 = vsel %vm585, %v578, %v582
    %v587 = vand.u32 2147483647, %v577
    %vm588 = vcmp.eq.f32.partialorder %v587, 8.507059e+37
    %v589 = vand.u32 %v577, 2147483648
    %v590 = vor.u32 1.1754944e-38, %v589
    %v591 = vsel %vm588, %v590, %v586
    %v592 = vmul.f32 1.0, %v591
    %v593 = vxor.u32 %v571, 2147483648
    %v594 = vmul.f32 %v593, 1.442695
    %v595 = vpow.pop %v594
    %v596 = vadd.f32 %v595, 1.0
    %v597 = vrcp.pop %v596
    %v598 = vmul.f32 %v596, %v597
    %v599 = vsub.f32 1.0, %v598
    %v600 = vmul.f32 %v597, %v599
    %v601 = vadd.f32 %v597, %v600
    %vm602 = vweird.f32 %v596
    %vm603 = vweird.f32 %v597
    %vm604 = vmor %vm602, %vm603
    %v605 = vsel %vm604, %v597, %v601
    %v606 = vand.u32 2147483647, %v596
    %vm607 = vcmp.eq.f32.partialorder %v606, 8.507059e+37
    %v608 = vand.u32 %v596, 2147483648
    %v609 = vor.u32 1.1754944e-38, %v608
    %v610 = vsel %vm607, %v609, %v605
    %v611 = vmul.f32 1.0, %v610
    %v612 = vtanh.pop %v572
    %v613 = vxor.u32 %v573, 2147483648
    %v614 = vmul.f32 %v613, 1.442695
    %v615 = vpow.pop %v614
    %v616 = vadd.f32 %v615, 1.0
    %v617 = vrcp.pop %v616
    %v618 = vmul.f32 %v616, %v617
    %v619 = vsub.f32 1.0, %v618
    %v620 = vmul.f32 %v617, %v619
    %v621 = vadd.f32 %v617, %v620
    %vm622 = vweird.f32 %v616
    %vm623 = vweird.f32 %v617
    %vm624 = vmor %vm622, %vm623
    %v625 = vsel %vm624, %v617, %v621
    %v626 = vand.u32 2147483647, %v616
    %vm627 = vcmp.eq.f32.partialorder %v626, 8.507059e+37
    %v628 = vand.u32 %v616, 2147483648
    %v629 = vor.u32 1.1754944e-38, %v628
    %v630 = vsel %vm627, %v629, %v625
    %v631 = vmul.f32 1.0, %v630
    %v632 = vmul.f32 %v611, 0.0
    %v633 = vmul.f32 %v592, %v612
    %v634 = vadd.f32 %v632, %v633
    %v635 = vtanh.pop %v634
    %v636 = vmul.f32 %v631, %v635
    %637 = vmatpush.msra.mxu0 %v412
    %638 = vmatpush.msra.mxu0 %v408
    %639 = vmatpush.msra.mxu0 %v404
    %640 = vmatpush.msra.mxu0 %v400
    %641 = vmatpush.msra.mxu0 %v396
    %642 = vmatpush.msra.mxu0 %v392
    %643 = vmatpush.msra.mxu0 %v388
    %644 = vmatpush.msra.mxu0 %v384
    %645 = vmatpush.msra.mxu0 %v380
    %646 = vmatpush.msra.mxu0 %v376
    %647 = vmatpush.msra.mxu0 %v372
    %648 = vmatpush.msra.mxu0 %v368
    %649 = vmatpush.msra.mxu0 %v364
    %650 = vmatpush.msra.mxu0 %v360
    %651 = vmatpush.msra.mxu0 %v356
    %652 = vmatpush.msra.mxu0 %v352
    %653 = vmatmul.f32.gmra.mxu0 %v636
    %v654 = vpop.f32.mrf.mxu0
    %v655 = vadd.f32 %v482, %v654
    %656 = vdwg.mxu0
    %657 = vmatpush.msra.mxu0 %v476
    %658 = vmatpush.msra.mxu0 %v472
    %659 = vmatpush.msra.mxu0 %v468
    %660 = vmatpush.msra.mxu0 %v464
    %661 = vmatpush.msra.mxu0 %v460
    %662 = vmatpush.msra.mxu0 %v456
    %663 = vmatpush.msra.mxu0 %v452
    %664 = vmatpush.msra.mxu0 %v448
    %665 = vmatpush.msra.mxu0 %v444
    %666 = vmatpush.msra.mxu0 %v440
    %667 = vmatpush.msra.mxu0 %v436
    %668 = vmatpush.msra.mxu0 %v432
    %669 = vmatpush.msra.mxu0 %v428
    %670 = vmatpush.msra.mxu0 %v424
    %671 = vmatpush.msra.mxu0 %v420
    %672 = vmatpush.msra.mxu0 %v416
    %673 = vmatmul.f32.gmra.mxu0 0.0
    %v674 = vpop.f32.mrf.mxu0
    %v675 = vadd.f32 %v655, %v674
    %676 = vdwg.mxu0
    %677 = vmatpush.msra.mxu0 %v413
    %678 = vmatpush.msra.mxu0 %v409
    %679 = vmatpush.msra.mxu0 %v405
    %680 = vmatpush.msra.mxu0 %v401
    %681 = vmatpush.msra.mxu0 %v397
    %682 = vmatpush.msra.mxu0 %v393
    %683 = vmatpush.msra.mxu0 %v389
    %684 = vmatpush.msra.mxu0 %v385
    %685 = vmatpush.msra.mxu0 %v381
    %686 = vmatpush.msra.mxu0 %v377
    %687 = vmatpush.msra.mxu0 %v373
    %688 = vmatpush.msra.mxu0 %v369
    %689 = vmatpush.msra.mxu0 %v365
    %690 = vmatpush.msra.mxu0 %v361
    %691 = vmatpush.msra.mxu0 %v357
    %692 = vmatpush.msra.mxu0 %v353
    %693 = vmatmul.f32.gmra.mxu0 %v636
    %v694 = vpop.f32.mrf.mxu0
    %v695 = vadd.f32 %v483, %v694
    %696 = vdwg.mxu0
    %697 = vmatpush.msra.mxu0 %v477
    %698 = vmatpush.msra.mxu0 %v473
    %699 = vmatpush.msra.mxu0 %v469
    %700 = vmatpush.msra.mxu0 %v465
    %701 = vmatpush.msra.mxu0 %v461
    %702 = vmatpush.msra.mxu0 %v457
    %703 = vmatpush.msra.mxu0 %v453
    %704 = vmatpush.msra.mxu0 %v449
    %705 = vmatpush.msra.mxu0 %v445
    %706 = vmatpush.msra.mxu0 %v441
    %707 = vmatpush.msra.mxu0 %v437
    %708 = vmatpush.msra.mxu0 %v433
    %709 = vmatpush.msra.mxu0 %v429
    %710 = vmatpush.msra.mxu0 %v425
    %711 = vmatpush.msra.mxu0 %v421
    %712 = vmatpush.msra.mxu0 %v417
    %713 = vmatmul.f32.gmra.mxu0 0.0
    %v714 = vpop.f32.mrf.mxu0
    %v715 = vadd.f32 %v695, %v714
    %716 = vdwg.mxu0
    %717 = vmatpush.msra.mxu0 %v414
    %718 = vmatpush.msra.mxu0 %v410
    %719 = vmatpush.msra.mxu0 %v406
    %720 = vmatpush.msra.mxu0 %v402
    %721 = vmatpush.msra.mxu0 %v398
    %722 = vmatpush.msra.mxu0 %v394
    %723 = vmatpush.msra.mxu0 %v390
    %724 = vmatpush.msra.mxu0 %v386
    %725 = vmatpush.msra.mxu0 %v382
    %726 = vmatpush.msra.mxu0 %v378
    %727 = vmatpush.msra.mxu0 %v374
    %728 = vmatpush.msra.mxu0 %v370
    %729 = vmatpush.msra.mxu0 %v366
    %730 = vmatpush.msra.mxu0 %v362
    %731 = vmatpush.msra.mxu0 %v358
    %732 = vmatpush.msra.mxu0 %v354
    %733 = vmatmul.f32.gmra.mxu0 %v636
    %v734 = vpop.f32.mrf.mxu0
    %v735 = vadd.f32 %v484, %v734
    %736 = vdwg.mxu0
    %737 = vmatpush.msra.mxu0 %v478
    %738 = vmatpush.msra.mxu0 %v474
    %739 = vmatpush.msra.mxu0 %v470
    %740 = vmatpush.msra.mxu0 %v466
    %741 = vmatpush.msra.mxu0 %v462
    %742 = vmatpush.msra.mxu0 %v458
    %743 = vmatpush.msra.mxu0 %v454
    %744 = vmatpush.msra.mxu0 %v450
    %745 = vmatpush.msra.mxu0 %v446
    %746 = vmatpush.msra.mxu0 %v442
    %747 = vmatpush.msra.mxu0 %v438
    %748 = vmatpush.msra.mxu0 %v434
    %749 = vmatpush.msra.mxu0 %v430
    %750 = vmatpush.msra.mxu0 %v426
    %751 = vmatpush.msra.mxu0 %v422
    %752 = vmatpush.msra.mxu0 %v418
    %753 = vmatmul.f32.gmra.mxu0 0.0
    %v754 = vpop.f32.mrf.mxu0
    %v755 = vadd.f32 %v735, %v754
    %756 = vdwg.mxu0
    %757 = vmatpush.msra.mxu0 %v415
    %758 = vmatpush.msra.mxu0 %v411
    %759 = vmatpush.msra.mxu0 %v407
    %760 = vmatpush.msra.mxu0 %v403
    %761 = vmatpush.msra.mxu0 %v399
    %762 = vmatpush.msra.mxu0 %v395
    %763 = vmatpush.msra.mxu0 %v391
    %764 = vmatpush.msra.mxu0 %v387
    %765 = vmatpush.msra.mxu0 %v383
    %766 = vmatpush.msra.mxu0 %v379
    %767 = vmatpush.msra.mxu0 %v375
    %768 = vmatpush.msra.mxu0 %v371
    %769 = vmatpush.msra.mxu0 %v367
    %770 = vmatpush.msra.mxu0 %v363
    %771 = vmatpush.msra.mxu0 %v359
    %772 = vmatpush.msra.mxu0 %v355
    %773 = vmatmul.f32.gmra.mxu0 %v636
    %v774 = vpop.f32.mrf.mxu0
    %v775 = vadd.f32 %v485, %v774
    %776 = vdwg.mxu0
    %777 = vmatpush.msra.mxu0 %v479
    %778 = vmatpush.msra.mxu0 %v475
    %779 = vmatpush.msra.mxu0 %v471
    %780 = vmatpush.msra.mxu0 %v467
    %781 = vmatpush.msra.mxu0 %v463
    %782 = vmatpush.msra.mxu0 %v459
    %783 = vmatpush.msra.mxu0 %v455
    %784 = vmatpush.msra.mxu0 %v451
    %785 = vmatpush.msra.mxu0 %v447
    %786 = vmatpush.msra.mxu0 %v443
    %787 = vmatpush.msra.mxu0 %v439
    %788 = vmatpush.msra.mxu0 %v435
    %789 = vmatpush.msra.mxu0 %v431
    %790 = vmatpush.msra.mxu0 %v427
    %791 = vmatpush.msra.mxu0 %v423
    %792 = vmatpush.msra.mxu0 %v419
    %793 = vmatmul.f32.gmra.mxu0 0.0
    %v794 = vpop.f32.mrf.mxu0
    %v795 = vadd.f32 %v775, %v794
    %796 = vdwg.mxu0
    %v797 = vxor.u32 %v675, 2147483648
    %v798 = vmul.f32 %v797, 1.442695
    %v799 = vpow.pop %v798
    %v800 = vadd.f32 %v799, 1.0
    %v801 = vrcp.pop %v800
    %v802 = vmul.f32 %v800, %v801
    %v803 = vsub.f32 1.0, %v802
    %v804 = vmul.f32 %v801, %v803
    %v805 = vadd.f32 %v801, %v804
    %vm806 = vweird.f32 %v800
    %vm807 = vweird.f32 %v801
    %vm808 = vmor %vm806, %vm807
    %v809 = vsel %vm808, %v801, %v805
    %v810 = vand.u32 2147483647, %v800
    %vm811 = vcmp.eq.f32.partialorder %v810, 8.507059e+37
    %v812 = vand.u32 %v800, 2147483648
    %v813 = vor.u32 1.1754944e-38, %v812
    %v814 = vsel %vm811, %v813, %v809
    %v815 = vmul.f32 1.0, %v814
    %v816 = vxor.u32 %v715, 2147483648
    %v817 = vmul.f32 %v816, 1.442695
    %v818 = vpow.pop %v817
    %v819 = vadd.f32 %v818, 1.0
    %v820 = vrcp.pop %v819
    %v821 = vmul.f32 %v819, %v820
    %v822 = vsub.f32 1.0, %v821
    %v823 = vmul.f32 %v820, %v822
    %v824 = vadd.f32 %v820, %v823
    %vm825 = vweird.f32 %v819
    %vm826 = vweird.f32 %v820
    %vm827 = vmor %vm825, %vm826
    %v828 = vsel %vm827, %v820, %v824
    %v829 = vand.u32 2147483647, %v819
    %vm830 = vcmp.eq.f32.partialorder %v829, 8.507059e+37
    %v831 = vand.u32 %v819, 2147483648
    %v832 = vor.u32 1.1754944e-38, %v831
    %v833 = vsel %vm830, %v832, %v828
    %v834 = vmul.f32 1.0, %v833
    %v835 = vtanh.pop %v755
    %v836 = vxor.u32 %v795, 2147483648
    %v837 = vmul.f32 %v836, 1.442695
    %v838 = vpow.pop %v837
    %v839 = vadd.f32 %v838, 1.0
    %v840 = vrcp.pop %v839
    %v841 = vmul.f32 %v839, %v840
    %v842 = vsub.f32 1.0, %v841
    %v843 = vmul.f32 %v840, %v842
    %v844 = vadd.f32 %v840, %v843
    %vm845 = vweird.f32 %v839
    %vm846 = vweird.f32 %v840
    %vm847 = vmor %vm845, %vm846
    %v848 = vsel %vm847, %v840, %v844
    %v849 = vand.u32 2147483647, %v839
    %vm850 = vcmp.eq.f32.partialorder %v849, 8.507059e+37
    %v851 = vand.u32 %v839, 2147483648
    %v852 = vor.u32 1.1754944e-38, %v851
    %v853 = vsel %vm850, %v852, %v848
    %v854 = vmul.f32 1.0, %v853
    %v855 = vmul.f32 %v834, 0.0
    %v856 = vmul.f32 %v815, %v835
    %v857 = vadd.f32 %v855, %v856
    %v858 = vtanh.pop %v857
    %v859 = vmul.f32 %v854, %v858
    %860 = vmatpush.msra.mxu0 %v348
    %861 = vmatpush.msra.mxu0 %v344
    %862 = vmatpush.msra.mxu0 %v340
    %863 = vmatpush.msra.mxu0 %v336
    %864 = vmatpush.msra.mxu0 %v332
    %865 = vmatpush.msra.mxu0 %v328
    %866 = vmatpush.msra.mxu0 %v324
    %867 = vmatpush.msra.mxu0 %v320
    %868 = vmatpush.msra.mxu0 %v316
    %869 = vmatpush.msra.mxu0 %v312
    %870 = vmatpush.msra.mxu0 %v308
    %871 = vmatpush.msra.mxu0 %v304
    %872 = vmatpush.msra.mxu0 %v300
    %873 = vmatpush.msra.mxu0 %v296
    %874 = vmatpush.msra.mxu0 %v292
    %875 = vmatpush.msra.mxu0 %v288
    %876 = vmatmul.f32.gmra.mxu0 %v636
    %v877 = vpop.f32.mrf.mxu0
    %v878 = vadd.f32 0.0, %v877
    %879 = vdwg.mxu0
    %880 = vmatpush.msra.mxu0 %v349
    %881 = vmatpush.msra.mxu0 %v345
    %882 = vmatpush.msra.mxu0 %v341
    %883 = vmatpush.msra.mxu0 %v337
    %884 = vmatpush.msra.mxu0 %v333
    %885 = vmatpush.msra.mxu0 %v329
    %886 = vmatpush.msra.mxu0 %v325
    %887 = vmatpush.msra.mxu0 %v321
    %888 = vmatpush.msra.mxu0 %v317
    %889 = vmatpush.msra.mxu0 %v313
    %890 = vmatpush.msra.mxu0 %v309
    %891 = vmatpush.msra.mxu0 %v305
    %892 = vmatpush.msra.mxu0 %v301
    %893 = vmatpush.msra.mxu0 %v297
    %894 = vmatpush.msra.mxu0 %v293
    %895 = vmatpush.msra.mxu0 %v289
    %896 = vmatmul.f32.gmra.mxu0 %v636
    %v897 = vpop.f32.mrf.mxu0
    %v898 = vadd.f32 0.0, %v897
    %899 = vdwg.mxu0
    %900 = vmatpush.msra.mxu0 %v350
    %901 = vmatpush.msra.mxu0 %v346
    %902 = vmatpush.msra.mxu0 %v342
    %903 = vmatpush.msra.mxu0 %v338
    %904 = vmatpush.msra.mxu0 %v334
    %905 = vmatpush.msra.mxu0 %v330
    %906 = vmatpush.msra.mxu0 %v326
    %907 = vmatpush.msra.mxu0 %v322
    %908 = vmatpush.msra.mxu0 %v318
    %909 = vmatpush.msra.mxu0 %v314
    %910 = vmatpush.msra.mxu0 %v310
    %911 = vmatpush.msra.mxu0 %v306
    %912 = vmatpush.msra.mxu0 %v302
    %913 = vmatpush.msra.mxu0 %v298
    %914 = vmatpush.msra.mxu0 %v294
    %915 = vmatpush.msra.mxu0 %v290
    %916 = vmatmul.f32.gmra.mxu0 %v636
    %v917 = vpop.f32.mrf.mxu0
    %v918 = vadd.f32 0.0, %v917
    %919 = vdwg.mxu0
    %920 = vmatpush.msra.mxu0 %v351
    %921 = vmatpush.msra.mxu0 %v347
    %922 = vmatpush.msra.mxu0 %v343
    %923 = vmatpush.msra.mxu0 %v339
    %924 = vmatpush.msra.mxu0 %v335
    %925 = vmatpush.msra.mxu0 %v331
    %926 = vmatpush.msra.mxu0 %v327
    %927 = vmatpush.msra.mxu0 %v323
    %928 = vmatpush.msra.mxu0 %v319
    %929 = vmatpush.msra.mxu0 %v315
    %930 = vmatpush.msra.mxu0 %v311
    %931 = vmatpush.msra.mxu0 %v307
    %932 = vmatpush.msra.mxu0 %v303
    %933 = vmatpush.msra.mxu0 %v299
    %934 = vmatpush.msra.mxu0 %v295
    %935 = vmatpush.msra.mxu0 %v291
    %936 = vmatmul.f32.gmra.mxu0 %v636
    %v937 = vpop.f32.mrf.mxu0
    %v938 = vadd.f32 0.0, %v937
    %939 = vdwg.mxu0
    %v940 = vadd.f32 %v145, %v878
    %v941 = vadd.f32 %v186, %v898
    %v942 = vadd.f32 %v227, %v918
    %v943 = vadd.f32 %v268, %v938
    %v944 = vxor.u32 %v940, 2147483648
    %v945 = vmul.f32 %v944, 1.442695
    %v946 = vpow.pop %v945
    %v947 = vadd.f32 %v946, 1.0
    %v948 = vrcp.pop %v947
    %v949 = vmul.f32 %v947, %v948
    %v950 = vsub.f32 1.0, %v949
    %v951 = vmul.f32 %v948, %v950
    %v952 = vadd.f32 %v948, %v951
    %vm953 = vweird.f32 %v947
    %vm954 = vweird.f32 %v948
    %vm955 = vmor %vm953, %vm954
    %v956 = vsel %vm955, %v948, %v952
    %v957 = vand.u32 2147483647, %v947
    %vm958 = vcmp.eq.f32.partialorder %v957, 8.507059e+37
    %v959 = vand.u32 %v947, 2147483648
    %v960 = vor.u32 1.1754944e-38, %v959
    %v961 = vsel %vm958, %v960, %v956
    %v962 = vmul.f32 1.0, %v961
    %v963 = vxor.u32 %v941, 2147483648
    %v964 = vmul.f32 %v963, 1.442695
    %v965 = vpow.pop %v964
    %v966 = vadd.f32 %v965, 1.0
    %v967 = vrcp.pop %v966
    %v968 = vmul.f32 %v966, %v967
    %v969 = vsub.f32 1.0, %v968
    %v970 = vmul.f32 %v967, %v969
    %v971 = vadd.f32 %v967, %v970
    %vm972 = vweird.f32 %v966
    %vm973 = vweird.f32 %v967
    %vm974 = vmor %vm972, %vm973
    %v975 = vsel %vm974, %v967, %v971
    %v976 = vand.u32 2147483647, %v966
    %vm977 = vcmp.eq.f32.partialorder %v976, 8.507059e+37
    %v978 = vand.u32 %v966, 2147483648
    %v979 = vor.u32 1.1754944e-38, %v978
    %v980 = vsel %vm977, %v979, %v975
    %v981 = vmul.f32 1.0, %v980
    %v982 = vtanh.pop %v942
    %v983 = vxor.u32 %v943, 2147483648
    %v984 = vmul.f32 %v983, 1.442695
    %v985 = vpow.pop %v984
    %v986 = vadd.f32 %v985, 1.0
    %v987 = vrcp.pop %v986
    %v988 = vmul.f32 %v986, %v987
    %v989 = vsub.f32 1.0, %v988
    %v990 = vmul.f32 %v987, %v989
    %v991 = vadd.f32 %v987, %v990
    %vm992 = vweird.f32 %v986
    %vm993 = vweird.f32 %v987
    %vm994 = vmor %vm992, %vm993
    %v995 = vsel %vm994, %v987, %v991
    %v996 = vand.u32 2147483647, %v986
    %vm997 = vcmp.eq.f32.partialorder %v996, 8.507059e+37
    %v998 = vand.u32 %v986, 2147483648
    %v999 = vor.u32 1.1754944e-38, %v998
    %v1000 = vsel %vm997, %v999, %v995
    %v1001 = vmul.f32 1.0, %v1000
    %v1002 = vmul.f32 %v981, %v634
    %v1003 = vmul.f32 %v962, %v982
    %v1004 = vadd.f32 %v1002, %v1003
    %v1005 = vtanh.pop %v1004
    %v1006 = vmul.f32 %v1001, %v1005
    %1007 = vmatpush.msra.mxu0 %v412
    %1008 = vmatpush.msra.mxu0 %v408
    %1009 = vmatpush.msra.mxu0 %v404
    %1010 = vmatpush.msra.mxu0 %v400
    %1011 = vmatpush.msra.mxu0 %v396
    %1012 = vmatpush.msra.mxu0 %v392
    %1013 = vmatpush.msra.mxu0 %v388
    %1014 = vmatpush.msra.mxu0 %v384
    %1015 = vmatpush.msra.mxu0 %v380
    %1016 = vmatpush.msra.mxu0 %v376
    %1017 = vmatpush.msra.mxu0 %v372
    %1018 = vmatpush.msra.mxu0 %v368
    %1019 = vmatpush.msra.mxu0 %v364
    %1020 = vmatpush.msra.mxu0 %v360
    %1021 = vmatpush.msra.mxu0 %v356
    %1022 = vmatpush.msra.mxu0 %v352
    %1023 = vmatmul.f32.gmra.mxu0 %v1006
    %v1024 = vpop.f32.mrf.mxu0
    %v1025 = vadd.f32 %v482, %v1024
    %1026 = vdwg.mxu0
    %1027 = vmatpush.msra.mxu0 %v476
    %1028 = vmatpush.msra.mxu0 %v472
    %1029 = vmatpush.msra.mxu0 %v468
    %1030 = vmatpush.msra.mxu0 %v464
    %1031 = vmatpush.msra.mxu0 %v460
    %1032 = vmatpush.msra.mxu0 %v456
    %1033 = vmatpush.msra.mxu0 %v452
    %1034 = vmatpush.msra.mxu0 %v448
    %1035 = vmatpush.msra.mxu0 %v444
    %1036 = vmatpush.msra.mxu0 %v440
    %1037 = vmatpush.msra.mxu0 %v436
    %1038 = vmatpush.msra.mxu0 %v432
    %1039 = vmatpush.msra.mxu0 %v428
    %1040 = vmatpush.msra.mxu0 %v424
    %1041 = vmatpush.msra.mxu0 %v420
    %1042 = vmatpush.msra.mxu0 %v416
    %1043 = vmatmul.f32.gmra.mxu0 %v859
    %v1044 = vpop.f32.mrf.mxu0
    %v1045 = vadd.f32 %v1025, %v1044
    %1046 = vdwg.mxu0
    %1047 = vmatpush.msra.mxu0 %v413
    %1048 = vmatpush.msra.mxu0 %v409
    %1049 = vmatpush.msra.mxu0 %v405
    %1050 = vmatpush.msra.mxu0 %v401
    %1051 = vmatpush.msra.mxu0 %v397
    %1052 = vmatpush.msra.mxu0 %v393
    %1053 = vmatpush.msra.mxu0 %v389
    %1054 = vmatpush.msra.mxu0 %v385
    %1055 = vmatpush.msra.mxu0 %v381
    %1056 = vmatpush.msra.mxu0 %v377
    %1057 = vmatpush.msra.mxu0 %v373
    %1058 = vmatpush.msra.mxu0 %v369
    %1059 = vmatpush.msra.mxu0 %v365
    %1060 = vmatpush.msra.mxu0 %v361
    %1061 = vmatpush.msra.mxu0 %v357
    %1062 = vmatpush.msra.mxu0 %v353
    %1063 = vmatmul.f32.gmra.mxu0 %v1006
    %v1064 = vpop.f32.mrf.mxu0
    %v1065 = vadd.f32 %v483, %v1064
    %1066 = vdwg.mxu0
    %1067 = vmatpush.msra.mxu0 %v477
    %1068 = vmatpush.msra.mxu0 %v473
    %1069 = vmatpush.msra.mxu0 %v469
    %1070 = vmatpush.msra.mxu0 %v465
    %1071 = vmatpush.msra.mxu0 %v461
    %1072 = vmatpush.msra.mxu0 %v457
    %1073 = vmatpush.msra.mxu0 %v453
    %1074 = vmatpush.msra.mxu0 %v449
    %1075 = vmatpush.msra.mxu0 %v445
    %1076 = vmatpush.msra.mxu0 %v441
    %1077 = vmatpush.msra.mxu0 %v437
    %1078 = vmatpush.msra.mxu0 %v433
    %1079 = vmatpush.msra.mxu0 %v429
    %1080 = vmatpush.msra.mxu0 %v425
    %1081 = vmatpush.msra.mxu0 %v421
    %1082 = vmatpush.msra.mxu0 %v417
    %1083 = vmatmul.f32.gmra.mxu0 %v859
    %v1084 = vpop.f32.mrf.mxu0
    %v1085 = vadd.f32 %v1065, %v1084
    %1086 = vdwg.mxu0
    %1087 = vmatpush.msra.mxu0 %v414
    %1088 = vmatpush.msra.mxu0 %v410
    %1089 = vmatpush.msra.mxu0 %v406
    %1090 = vmatpush.msra.mxu0 %v402
    %1091 = vmatpush.msra.mxu0 %v398
    %1092 = vmatpush.msra.mxu0 %v394
    %1093 = vmatpush.msra.mxu0 %v390
    %1094 = vmatpush.msra.mxu0 %v386
    %1095 = vmatpush.msra.mxu0 %v382
    %1096 = vmatpush.msra.mxu0 %v378
    %1097 = vmatpush.msra.mxu0 %v374
    %1098 = vmatpush.msra.mxu0 %v370
    %1099 = vmatpush.msra.mxu0 %v366
    %1100 = vmatpush.msra.mxu0 %v362
    %1101 = vmatpush.msra.mxu0 %v358
    %1102 = vmatpush.msra.mxu0 %v354
    %1103 = vmatmul.f32.gmra.mxu0 %v1006
    %v1104 = vpop.f32.mrf.mxu0
    %v1105 = vadd.f32 %v484, %v1104
    %1106 = vdwg.mxu0
    %1107 = vmatpush.msra.mxu0 %v478
    %1108 = vmatpush.msra.mxu0 %v474
    %1109 = vmatpush.msra.mxu0 %v470
    %1110 = vmatpush.msra.mxu0 %v466
    %1111 = vmatpush.msra.mxu0 %v462
    %1112 = vmatpush.msra.mxu0 %v458
    %1113 = vmatpush.msra.mxu0 %v454
    %1114 = vmatpush.msra.mxu0 %v450
    %1115 = vmatpush.msra.mxu0 %v446
    %1116 = vmatpush.msra.mxu0 %v442
    %1117 = vmatpush.msra.mxu0 %v438
    %1118 = vmatpush.msra.mxu0 %v434
    %1119 = vmatpush.msra.mxu0 %v430
    %1120 = vmatpush.msra.mxu0 %v426
    %1121 = vmatpush.msra.mxu0 %v422
    %1122 = vmatpush.msra.mxu0 %v418
    %1123 = vmatmul.f32.gmra.mxu0 %v859
    %v1124 = vpop.f32.mrf.mxu0
    %v1125 = vadd.f32 %v1105, %v1124
    %1126 = vdwg.mxu0
    %1127 = vmatpush.msra.mxu0 %v415
    %1128 = vmatpush.msra.mxu0 %v411
    %1129 = vmatpush.msra.mxu0 %v407
    %1130 = vmatpush.msra.mxu0 %v403
    %1131 = vmatpush.msra.mxu0 %v399
    %1132 = vmatpush.msra.mxu0 %v395
    %1133 = vmatpush.msra.mxu0 %v391
    %1134 = vmatpush.msra.mxu0 %v387
    %1135 = vmatpush.msra.mxu0 %v383
    %1136 = vmatpush.msra.mxu0 %v379
    %1137 = vmatpush.msra.mxu0 %v375
    %1138 = vmatpush.msra.mxu0 %v371
    %1139 = vmatpush.msra.mxu0 %v367
    %1140 = vmatpush.msra.mxu0 %v363
    %1141 = vmatpush.msra.mxu0 %v359
    %1142 = vmatpush.msra.mxu0 %v355
    %1143 = vmatmul.f32.gmra.mxu0 %v1006
    %v1144 = vpop.f32.mrf.mxu0
    %v1145 = vadd.f32 %v485, %v1144
    %1146 = vdwg.mxu0
    %1147 = vmatpush.msra.mxu0 %v479
    %1148 = vmatpush.msra.mxu0 %v475
    %1149 = vmatpush.msra.mxu0 %v471
    %1150 = vmatpush.msra.mxu0 %v467
    %1151 = vmatpush.msra.mxu0 %v463
    %1152 = vmatpush.msra.mxu0 %v459
    %1153 = vmatpush.msra.mxu0 %v455
    %1154 = vmatpush.msra.mxu0 %v451
    %1155 = vmatpush.msra.mxu0 %v447
    %1156 = vmatpush.msra.mxu0 %v443
    %1157 = vmatpush.msra.mxu0 %v439
    %1158 = vmatpush.msra.mxu0 %v435
    %1159 = vmatpush.msra.mxu0 %v431
    %1160 = vmatpush.msra.mxu0 %v427
    %1161 = vmatpush.msra.mxu0 %v423
    %1162 = vmatpush.msra.mxu0 %v419
    %1163 = vmatmul.f32.gmra.mxu0 %v859
    %v1164 = vpop.f32.mrf.mxu0
    %v1165 = vadd.f32 %v1145, %v1164
    %1166 = vdwg.mxu0
    %v1167 = vxor.u32 %v1045, 2147483648
    %v1168 = vmul.f32 %v1167, 1.442695
    %v1169 = vpow.pop %v1168
    %v1170 = vadd.f32 %v1169, 1.0
    %v1171 = vrcp.pop %v1170
    %v1172 = vmul.f32 %v1170, %v1171
    %v1173 = vsub.f32 1.0, %v1172
    %v1174 = vmul.f32 %v1171, %v1173
    %v1175 = vadd.f32 %v1171, %v1174
    %vm1176 = vweird.f32 %v1170
    %vm1177 = vweird.f32 %v1171
    %vm1178 = vmor %vm1176, %vm1177
    %v1179 = vsel %vm1178, %v1171, %v1175
    %v1180 = vand.u32 2147483647, %v1170
    %vm1181 = vcmp.eq.f32.partialorder %v1180, 8.507059e+37
    %v1182 = vand.u32 %v1170, 2147483648
    %v1183 = vor.u32 1.1754944e-38, %v1182
    %v1184 = vsel %vm1181, %v1183, %v1179
    %v1185 = vmul.f32 1.0, %v1184
    %v1186 = vxor.u32 %v1085, 2147483648
    %v1187 = vmul.f32 %v1186, 1.442695
    %v1188 = vpow.pop %v1187
    %v1189 = vadd.f32 %v1188, 1.0
    %v1190 = vrcp.pop %v1189
    %v1191 = vmul.f32 %v1189, %v1190
    %v1192 = vsub.f32 1.0, %v1191
    %v1193 = vmul.f32 %v1190, %v1192
    %v1194 = vadd.f32 %v1190, %v1193
    %vm1195 = vweird.f32 %v1189
    %vm1196 = vweird.f32 %v1190
    %vm1197 = vmor %vm1195, %vm1196
    %v1198 = vsel %vm1197, %v1190, %v1194
    %v1199 = vand.u32 2147483647, %v1189
    %vm1200 = vcmp.eq.f32.partialorder %v1199, 8.507059e+37
    %v1201 = vand.u32 %v1189, 2147483648
    %v1202 = vor.u32 1.1754944e-38, %v1201
    %v1203 = vsel %vm1200, %v1202, %v1198
    %v1204 = vmul.f32 1.0, %v1203
    %v1205 = vtanh.pop %v1125
    %v1206 = vxor.u32 %v1165, 2147483648
    %v1207 = vmul.f32 %v1206, 1.442695
    %v1208 = vpow.pop %v1207
    %v1209 = vadd.f32 %v1208, 1.0
    %v1210 = vrcp.pop %v1209
    %v1211 = vmul.f32 %v1209, %v1210
    %v1212 = vsub.f32 1.0, %v1211
    %v1213 = vmul.f32 %v1210, %v1212
    %v1214 = vadd.f32 %v1210, %v1213
    %vm1215 = vweird.f32 %v1209
    %vm1216 = vweird.f32 %v1210
    %vm1217 = vmor %vm1215, %vm1216
    %v1218 = vsel %vm1217, %v1210, %v1214
    %v1219 = vand.u32 2147483647, %v1209
    %vm1220 = vcmp.eq.f32.partialorder %v1219, 8.507059e+37
    %v1221 = vand.u32 %v1209, 2147483648
    %v1222 = vor.u32 1.1754944e-38, %v1221
    %v1223 = vsel %vm1220, %v1222, %v1218
    %v1224 = vmul.f32 1.0, %v1223
    %v1225 = vmul.f32 %v1204, %v857
    %v1226 = vmul.f32 %v1185, %v1205
    %v1227 = vadd.f32 %v1225, %v1226
    %v1228 = vtanh.pop %v1227
    %v1229 = vmul.f32 %v1224, %v1228
    %1230 = vmatpush.msra.mxu0 %v348
    %1231 = vmatpush.msra.mxu0 %v344
    %1232 = vmatpush.msra.mxu0 %v340
    %1233 = vmatpush.msra.mxu0 %v336
    %1234 = vmatpush.msra.mxu0 %v332
    %1235 = vmatpush.msra.mxu0 %v328
    %1236 = vmatpush.msra.mxu0 %v324
    %1237 = vmatpush.msra.mxu0 %v320
    %1238 = vmatpush.msra.mxu0 %v316
    %1239 = vmatpush.msra.mxu0 %v312
    %1240 = vmatpush.msra.mxu0 %v308
    %1241 = vmatpush.msra.mxu0 %v304
    %1242 = vmatpush.msra.mxu0 %v300
    %1243 = vmatpush.msra.mxu0 %v296
    %1244 = vmatpush.msra.mxu0 %v292
    %1245 = vmatpush.msra.mxu0 %v288
    %1246 = vmatmul.f32.gmra.mxu0 %v1006
    %v1247 = vpop.f32.mrf.mxu0
    %v1248 = vadd.f32 0.0, %v1247
    %1249 = vdwg.mxu0
    %1250 = vmatpush.msra.mxu0 %v349
    %1251 = vmatpush.msra.mxu0 %v345
    %1252 = vmatpush.msra.mxu0 %v341
    %1253 = vmatpush.msra.mxu0 %v337
    %1254 = vmatpush.msra.mxu0 %v333
    %1255 = vmatpush.msra.mxu0 %v329
    %1256 = vmatpush.msra.mxu0 %v325
    %1257 = vmatpush.msra.mxu0 %v321
    %1258 = vmatpush.msra.mxu0 %v317
    %1259 = vmatpush.msra.mxu0 %v313
    %1260 = vmatpush.msra.mxu0 %v309
    %1261 = vmatpush.msra.mxu0 %v305
    %1262 = vmatpush.msra.mxu0 %v301
    %1263 = vmatpush.msra.mxu0 %v297
    %1264 = vmatpush.msra.mxu0 %v293
    %1265 = vmatpush.msra.mxu0 %v289
    %1266 = vmatmul.f32.gmra.mxu0 %v1006
    %v1267 = vpop.f32.mrf.mxu0
    %v1268 = vadd.f32 0.0, %v1267
    %1269 = vdwg.mxu0
    %1270 = vmatpush.msra.mxu0 %v350
    %1271 = vmatpush.msra.mxu0 %v346
    %1272 = vmatpush.msra.mxu0 %v342
    %1273 = vmatpush.msra.mxu0 %v338
    %1274 = vmatpush.msra.mxu0 %v334
    %1275 = vmatpush.msra.mxu0 %v330
    %1276 = vmatpush.msra.mxu0 %v326
    %1277 = vmatpush.msra.mxu0 %v322
    %1278 = vmatpush.msra.mxu0 %v318
    %1279 = vmatpush.msra.mxu0 %v314
    %1280 = vmatpush.msra.mxu0 %v310
    %1281 = vmatpush.msra.mxu0 %v306
    %1282 = vmatpush.msra.mxu0 %v302
    %1283 = vmatpush.msra.mxu0 %v298
    %1284 = vmatpush.msra.mxu0 %v294
    %1285 = vmatpush.msra.mxu0 %v290
    %1286 = vmatmul.f32.gmra.mxu0 %v1006
    %v1287 = vpop.f32.mrf.mxu0
    %v1288 = vadd.f32 0.0, %v1287
    %1289 = vdwg.mxu0
    %1290 = vmatpush.msra.mxu0 %v351
    %1291 = vmatpush.msra.mxu0 %v347
    %1292 = vmatpush.msra.mxu0 %v343
    %1293 = vmatpush.msra.mxu0 %v339
    %1294 = vmatpush.msra.mxu0 %v335
    %1295 = vmatpush.msra.mxu0 %v331
    %1296 = vmatpush.msra.mxu0 %v327
    %1297 = vmatpush.msra.mxu0 %v323
    %1298 = vmatpush.msra.mxu0 %v319
    %1299 = vmatpush.msra.mxu0 %v315
    %1300 = vmatpush.msra.mxu0 %v311
    %1301 = vmatpush.msra.mxu0 %v307
    %1302 = vmatpush.msra.mxu0 %v303
    %1303 = vmatpush.msra.mxu0 %v299
    %1304 = vmatpush.msra.mxu0 %v295
    %1305 = vmatpush.msra.mxu0 %v291
    %1306 = vmatmul.f32.gmra.mxu0 %v1006
    %v1307 = vpop.f32.mrf.mxu0
    %v1308 = vadd.f32 0.0, %v1307
    %1309 = vdwg.mxu0
    %v1310 = vadd.f32 %v148, %v1248
    %v1311 = vadd.f32 %v189, %v1268
    %v1312 = vadd.f32 %v230, %v1288
    %v1313 = vadd.f32 %v271, %v1308
    %v1314 = vxor.u32 %v1310, 2147483648
    %v1315 = vmul.f32 %v1314, 1.442695
    %v1316 = vpow.pop %v1315
    %v1317 = vadd.f32 %v1316, 1.0
    %v1318 = vrcp.pop %v1317
    %v1319 = vmul.f32 %v1317, %v1318
    %v1320 = vsub.f32 1.0, %v1319
    %v1321 = vmul.f32 %v1318, %v1320
    %v1322 = vadd.f32 %v1318, %v1321
    %vm1323 = vweird.f32 %v1317
    %vm1324 = vweird.f32 %v1318
    %vm1325 = vmor %vm1323, %vm1324
    %v1326 = vsel %vm1325, %v1318, %v1322
    %v1327 = vand.u32 2147483647, %v1317
    %vm1328 = vcmp.eq.f32.partialorder %v1327, 8.507059e+37
    %v1329 = vand.u32 %v1317, 2147483648
    %v1330 = vor.u32 1.1754944e-38, %v1329
    %v1331 = vsel %vm1328, %v1330, %v1326
    %v1332 = vmul.f32 1.0, %v1331
    %v1333 = vxor.u32 %v1311, 2147483648
    %v1334 = vmul.f32 %v1333, 1.442695
    %v1335 = vpow.pop %v1334
    %v1336 = vadd.f32 %v1335, 1.0
    %v1337 = vrcp.pop %v1336
    %v1338 = vmul.f32 %v1336, %v1337
    %v1339 = vsub.f32 1.0, %v1338
    %v1340 = vmul.f32 %v1337, %v1339
    %v1341 = vadd.f32 %v1337, %v1340
    %vm1342 = vweird.f32 %v1336
    %vm1343 = vweird.f32 %v1337
    %vm1344 = vmor %vm1342, %vm1343
    %v1345 = vsel %vm1344, %v1337, %v1341
    %v1346 = vand.u32 2147483647, %v1336
    %vm1347 = vcmp.eq.f32.partialorder %v1346, 8.507059e+37
    %v1348 = vand.u32 %v1336, 2147483648
    %v1349 = vor.u32 1.1754944e-38, %v1348
    %v1350 = vsel %vm1347, %v1349, %v1345
    %v1351 = vmul.f32 1.0, %v1350
    %v1352 = vtanh.pop %v1312
    %v1353 = vxor.u32 %v1313, 2147483648
    %v1354 = vmul.f32 %v1353, 1.442695
    %v1355 = vpow.pop %v1354
    %v1356 = vadd.f32 %v1355, 1.0
    %v1357 = vrcp.pop %v1356
    %v1358 = vmul.f32 %v1356, %v1357
    %v1359 = vsub.f32 1.0, %v1358
    %v1360 = vmul.f32 %v1357, %v1359
    %v1361 = vadd.f32 %v1357, %v1360
    %vm1362 = vweird.f32 %v1356
    %vm1363 = vweird.f32 %v1357
    %vm1364 = vmor %vm1362, %vm1363
    %v1365 = vsel %vm1364, %v1357, %v1361
    %v1366 = vand.u32 2147483647, %v1356
    %vm1367 = vcmp.eq.f32.partialorder %v1366, 8.507059e+37
    %v1368 = vand.u32 %v1356, 2147483648
    %v1369 = vor.u32 1.1754944e-38, %v1368
    %v1370 = vsel %vm1367, %v1369, %v1365
    %v1371 = vmul.f32 1.0, %v1370
    %v1372 = vmul.f32 %v1351, %v1004
    %v1373 = vmul.f32 %v1332, %v1352
    %v1374 = vadd.f32 %v1372, %v1373
    %v1375 = vtanh.pop %v1374
    %v1376 = vmul.f32 %v1371, %v1375
    %1377 = vmatpush.msra.mxu0 %v412
    %1378 = vmatpush.msra.mxu0 %v408
    %1379 = vmatpush.msra.mxu0 %v404
    %1380 = vmatpush.msra.mxu0 %v400
    %1381 = vmatpush.msra.mxu0 %v396
    %1382 = vmatpush.msra.mxu0 %v392
    %1383 = vmatpush.msra.mxu0 %v388
    %1384 = vmatpush.msra.mxu0 %v384
    %1385 = vmatpush.msra.mxu0 %v380
    %1386 = vmatpush.msra.mxu0 %v376
    %1387 = vmatpush.msra.mxu0 %v372
    %1388 = vmatpush.msra.mxu0 %v368
    %1389 = vmatpush.msra.mxu0 %v364
    %1390 = vmatpush.msra.mxu0 %v360
    %1391 = vmatpush.msra.mxu0 %v356
    %1392 = vmatpush.msra.mxu0 %v352
    %1393 = vmatmul.f32.gmra.mxu0 %v1376
    %v1394 = vpop.f32.mrf.mxu0
    %v1395 = vadd.f32 %v482, %v1394
    %1396 = vdwg.mxu0
    %1397 = vmatpush.msra.mxu0 %v476
    %1398 = vmatpush.msra.mxu0 %v472
    %1399 = vmatpush.msra.mxu0 %v468
    %1400 = vmatpush.msra.mxu0 %v464
    %1401 = vmatpush.msra.mxu0 %v460
    %1402 = vmatpush.msra.mxu0 %v456
    %1403 = vmatpush.msra.mxu0 %v452
    %1404 = vmatpush.msra.mxu0 %v448
    %1405 = vmatpush.msra.mxu0 %v444
    %1406 = vmatpush.msra.mxu0 %v440
    %1407 = vmatpush.msra.mxu0 %v436
    %1408 = vmatpush.msra.mxu0 %v432
    %1409 = vmatpush.msra.mxu0 %v428
    %1410 = vmatpush.msra.mxu0 %v424
    %1411 = vmatpush.msra.mxu0 %v420
    %1412 = vmatpush.msra.mxu0 %v416
    %1413 = vmatmul.f32.gmra.mxu0 %v1229
    %v1414 = vpop.f32.mrf.mxu0
    %v1415 = vadd.f32 %v1395, %v1414
    %1416 = vdwg.mxu0
    %1417 = vmatpush.msra.mxu0 %v413
    %1418 = vmatpush.msra.mxu0 %v409
    %1419 = vmatpush.msra.mxu0 %v405
    %1420 = vmatpush.msra.mxu0 %v401
    %1421 = vmatpush.msra.mxu0 %v397
    %1422 = vmatpush.msra.mxu0 %v393
    %1423 = vmatpush.msra.mxu0 %v389
    %1424 = vmatpush.msra.mxu0 %v385
    %1425 = vmatpush.msra.mxu0 %v381
    %1426 = vmatpush.msra.mxu0 %v377
    %1427 = vmatpush.msra.mxu0 %v373
    %1428 = vmatpush.msra.mxu0 %v369
    %1429 = vmatpush.msra.mxu0 %v365
    %1430 = vmatpush.msra.mxu0 %v361
    %1431 = vmatpush.msra.mxu0 %v357
    %1432 = vmatpush.msra.mxu0 %v353
    %1433 = vmatmul.f32.gmra.mxu0 %v1376
    %v1434 = vpop.f32.mrf.mxu0
    %v1435 = vadd.f32 %v483, %v1434
    %1436 = vdwg.mxu0
    %1437 = vmatpush.msra.mxu0 %v477
    %1438 = vmatpush.msra.mxu0 %v473
    %1439 = vmatpush.msra.mxu0 %v469
    %1440 = vmatpush.msra.mxu0 %v465
    %1441 = vmatpush.msra.mxu0 %v461
    %1442 = vmatpush.msra.mxu0 %v457
    %1443 = vmatpush.msra.mxu0 %v453
    %1444 = vmatpush.msra.mxu0 %v449
    %1445 = vmatpush.msra.mxu0 %v445
    %1446 = vmatpush.msra.mxu0 %v441
    %1447 = vmatpush.msra.mxu0 %v437
    %1448 = vmatpush.msra.mxu0 %v433
    %1449 = vmatpush.msra.mxu0 %v429
    %1450 = vmatpush.msra.mxu0 %v425
    %1451 = vmatpush.msra.mxu0 %v421
    %1452 = vmatpush.msra.mxu0 %v417
    %1453 = vmatmul.f32.gmra.mxu0 %v1229
    %v1454 = vpop.f32.mrf.mxu0
    %v1455 = vadd.f32 %v1435, %v1454
    %1456 = vdwg.mxu0
    %1457 = vmatpush.msra.mxu0 %v414
    %1458 = vmatpush.msra.mxu0 %v410
    %1459 = vmatpush.msra.mxu0 %v406
    %1460 = vmatpush.msra.mxu0 %v402
    %1461 = vmatpush.msra.mxu0 %v398
    %1462 = vmatpush.msra.mxu0 %v394
    %1463 = vmatpush.msra.mxu0 %v390
    %1464 = vmatpush.msra.mxu0 %v386
    %1465 = vmatpush.msra.mxu0 %v382
    %1466 = vmatpush.msra.mxu0 %v378
    %1467 = vmatpush.msra.mxu0 %v374
    %1468 = vmatpush.msra.mxu0 %v370
    %1469 = vmatpush.msra.mxu0 %v366
    %1470 = vmatpush.msra.mxu0 %v362
    %1471 = vmatpush.msra.mxu0 %v358
    %1472 = vmatpush.msra.mxu0 %v354
    %1473 = vmatmul.f32.gmra.mxu0 %v1376
    %v1474 = vpop.f32.mrf.mxu0
    %v1475 = vadd.f32 %v484, %v1474
    %1476 = vdwg.mxu0
    %1477 = vmatpush.msra.mxu0 %v478
    %1478 = vmatpush.msra.mxu0 %v474
    %1479 = vmatpush.msra.mxu0 %v470
    %1480 = vmatpush.msra.mxu0 %v466
    %1481 = vmatpush.msra.mxu0 %v462
    %1482 = vmatpush.msra.mxu0 %v458
    %1483 = vmatpush.msra.mxu0 %v454
    %1484 = vmatpush.msra.mxu0 %v450
    %1485 = vmatpush.msra.mxu0 %v446
    %1486 = vmatpush.msra.mxu0 %v442
    %1487 = vmatpush.msra.mxu0 %v438
    %1488 = vmatpush.msra.mxu0 %v434
    %1489 = vmatpush.msra.mxu0 %v430
    %1490 = vmatpush.msra.mxu0 %v426
    %1491 = vmatpush.msra.mxu0 %v422
    %1492 = vmatpush.msra.mxu0 %v418
    %1493 = vmatmul.f32.gmra.mxu0 %v1229
    %v1494 = vpop.f32.mrf.mxu0
    %v1495 = vadd.f32 %v1475, %v1494
    %1496 = vdwg.mxu0
    %1497 = vmatpush.msra.mxu0 %v415
    %1498 = vmatpush.msra.mxu0 %v411
    %1499 = vmatpush.msra.mxu0 %v407
    %1500 = vmatpush.msra.mxu0 %v403
    %1501 = vmatpush.msra.mxu0 %v399
    %1502 = vmatpush.msra.mxu0 %v395
    %1503 = vmatpush.msra.mxu0 %v391
    %1504 = vmatpush.msra.mxu0 %v387
    %1505 = vmatpush.msra.mxu0 %v383
    %1506 = vmatpush.msra.mxu0 %v379
    %1507 = vmatpush.msra.mxu0 %v375
    %1508 = vmatpush.msra.mxu0 %v371
    %1509 = vmatpush.msra.mxu0 %v367
    %1510 = vmatpush.msra.mxu0 %v363
    %1511 = vmatpush.msra.mxu0 %v359
    %1512 = vmatpush.msra.mxu0 %v355
    %1513 = vmatmul.f32.gmra.mxu0 %v1376
    %v1514 = vpop.f32.mrf.mxu0
    %v1515 = vadd.f32 %v485, %v1514
    %1516 = vdwg.mxu0
    %1517 = vmatpush.msra.mxu0 %v479
    %1518 = vmatpush.msra.mxu0 %v475
    %1519 = vmatpush.msra.mxu0 %v471
    %1520 = vmatpush.msra.mxu0 %v467
    %1521 = vmatpush.msra.mxu0 %v463
    %1522 = vmatpush.msra.mxu0 %v459
    %1523 = vmatpush.msra.mxu0 %v455
    %1524 = vmatpush.msra.mxu0 %v451
    %1525 = vmatpush.msra.mxu0 %v447
    %1526 = vmatpush.msra.mxu0 %v443
    %1527 = vmatpush.msra.mxu0 %v439
    %1528 = vmatpush.msra.mxu0 %v435
    %1529 = vmatpush.msra.mxu0 %v431
    %1530 = vmatpush.msra.mxu0 %v427
    %1531 = vmatpush.msra.mxu0 %v423
    %1532 = vmatpush.msra.mxu0 %v419
    %1533 = vmatmul.f32.gmra.mxu0 %v1229
    %v1534 = vpop.f32.mrf.mxu0
    %v1535 = vadd.f32 %v1515, %v1534
    %1536 = vdwg.mxu0
    %v1537 = vxor.u32 %v1415, 2147483648
    %v1538 = vmul.f32 %v1537, 1.442695
    %v1539 = vpow.pop %v1538
    %v1540 = vadd.f32 %v1539, 1.0
    %v1541 = vrcp.pop %v1540
    %v1542 = vmul.f32 %v1540, %v1541
    %v1543 = vsub.f32 1.0, %v1542
    %v1544 = vmul.f32 %v1541, %v1543
    %v1545 = vadd.f32 %v1541, %v1544
    %vm1546 = vweird.f32 %v1540
    %vm1547 = vweird.f32 %v1541
    %vm1548 = vmor %vm1546, %vm1547
    %v1549 = vsel %vm1548, %v1541, %v1545
    %v1550 = vand.u32 2147483647, %v1540
    %vm1551 = vcmp.eq.f32.partialorder %v1550, 8.507059e+37
    %v1552 = vand.u32 %v1540, 2147483648
    %v1553 = vor.u32 1.1754944e-38, %v1552
    %v1554 = vsel %vm1551, %v1553, %v1549
    %v1555 = vmul.f32 1.0, %v1554
    %v1556 = vxor.u32 %v1455, 2147483648
    %v1557 = vmul.f32 %v1556, 1.442695
    %v1558 = vpow.pop %v1557
    %v1559 = vadd.f32 %v1558, 1.0
    %v1560 = vrcp.pop %v1559
    %v1561 = vmul.f32 %v1559, %v1560
    %v1562 = vsub.f32 1.0, %v1561
    %v1563 = vmul.f32 %v1560, %v1562
    %v1564 = vadd.f32 %v1560, %v1563
    %vm1565 = vweird.f32 %v1559
    %vm1566 = vweird.f32 %v1560
    %vm1567 = vmor %vm1565, %vm1566
    %v1568 = vsel %vm1567, %v1560, %v1564
    %v1569 = vand.u32 2147483647, %v1559
    %vm1570 = vcmp.eq.f32.partialorder %v1569, 8.507059e+37
    %v1571 = vand.u32 %v1559, 2147483648
    %v1572 = vor.u32 1.1754944e-38, %v1571
    %v1573 = vsel %vm1570, %v1572, %v1568
    %v1574 = vmul.f32 1.0, %v1573
    %v1575 = vtanh.pop %v1495
    %v1576 = vxor.u32 %v1535, 2147483648
    %v1577 = vmul.f32 %v1576, 1.442695
    %v1578 = vpow.pop %v1577
    %v1579 = vadd.f32 %v1578, 1.0
    %v1580 = vrcp.pop %v1579
    %v1581 = vmul.f32 %v1579, %v1580
    %v1582 = vsub.f32 1.0, %v1581
    %v1583 = vmul.f32 %v1580, %v1582
    %v1584 = vadd.f32 %v1580, %v1583
    %vm1585 = vweird.f32 %v1579
    %vm1586 = vweird.f32 %v1580
    %vm1587 = vmor %vm1585, %vm1586
    %v1588 = vsel %vm1587, %v1580, %v1584
    %v1589 = vand.u32 2147483647, %v1579
    %vm1590 = vcmp.eq.f32.partialorder %v1589, 8.507059e+37
    %v1591 = vand.u32 %v1579, 2147483648
    %v1592 = vor.u32 1.1754944e-38, %v1591
    %v1593 = vsel %vm1590, %v1592, %v1588
    %v1594 = vmul.f32 1.0, %v1593
    %v1595 = vmul.f32 %v1574, %v1227
    %v1596 = vmul.f32 %v1555, %v1575
    %v1597 = vadd.f32 %v1595, %v1596
    %v1598 = vtanh.pop %v1597
    %v1599 = vmul.f32 %v1594, %v1598
    %1600 = vmatpush.msra.mxu0 %v348
    %1601 = vmatpush.msra.mxu0 %v344
    %1602 = vmatpush.msra.mxu0 %v340
    %1603 = vmatpush.msra.mxu0 %v336
    %1604 = vmatpush.msra.mxu0 %v332
    %1605 = vmatpush.msra.mxu0 %v328
    %1606 = vmatpush.msra.mxu0 %v324
    %1607 = vmatpush.msra.mxu0 %v320
    %1608 = vmatpush.msra.mxu0 %v316
    %1609 = vmatpush.msra.mxu0 %v312
    %1610 = vmatpush.msra.mxu0 %v308
    %1611 = vmatpush.msra.mxu0 %v304
    %1612 = vmatpush.msra.mxu0 %v300
    %1613 = vmatpush.msra.mxu0 %v296
    %1614 = vmatpush.msra.mxu0 %v292
    %1615 = vmatpush.msra.mxu0 %v288
    %1616 = vmatmul.f32.gmra.mxu0 %v1376
    %v1617 = vpop.f32.mrf.mxu0
    %v1618 = vadd.f32 0.0, %v1617
    %1619 = vdwg.mxu0
    %1620 = vmatpush.msra.mxu0 %v349
    %1621 = vmatpush.msra.mxu0 %v345
    %1622 = vmatpush.msra.mxu0 %v341
    %1623 = vmatpush.msra.mxu0 %v337
    %1624 = vmatpush.msra.mxu0 %v333
    %1625 = vmatpush.msra.mxu0 %v329
    %1626 = vmatpush.msra.mxu0 %v325
    %1627 = vmatpush.msra.mxu0 %v321
    %1628 = vmatpush.msra.mxu0 %v317
    %1629 = vmatpush.msra.mxu0 %v313
    %1630 = vmatpush.msra.mxu0 %v309
    %1631 = vmatpush.msra.mxu0 %v305
    %1632 = vmatpush.msra.mxu0 %v301
    %1633 = vmatpush.msra.mxu0 %v297
    %1634 = vmatpush.msra.mxu0 %v293
    %1635 = vmatpush.msra.mxu0 %v289
    %1636 = vmatmul.f32.gmra.mxu0 %v1376
    %v1637 = vpop.f32.mrf.mxu0
    %v1638 = vadd.f32 0.0, %v1637
    %1639 = vdwg.mxu0
    %1640 = vmatpush.msra.mxu0 %v350
    %1641 = vmatpush.msra.mxu0 %v346
    %1642 = vmatpush.msra.mxu0 %v342
    %1643 = vmatpush.msra.mxu0 %v338
    %1644 = vmatpush.msra.mxu0 %v334
    %1645 = vmatpush.msra.mxu0 %v330
    %1646 = vmatpush.msra.mxu0 %v326
    %1647 = vmatpush.msra.mxu0 %v322
    %1648 = vmatpush.msra.mxu0 %v318
    %1649 = vmatpush.msra.mxu0 %v314
    %1650 = vmatpush.msra.mxu0 %v310
    %1651 = vmatpush.msra.mxu0 %v306
    %1652 = vmatpush.msra.mxu0 %v302
    %1653 = vmatpush.msra.mxu0 %v298
    %1654 = vmatpush.msra.mxu0 %v294
    %1655 = vmatpush.msra.mxu0 %v290
    %1656 = vmatmul.f32.gmra.mxu0 %v1376
    %v1657 = vpop.f32.mrf.mxu0
    %v1658 = vadd.f32 0.0, %v1657
    %1659 = vdwg.mxu0
    %1660 = vmatpush.msra.mxu0 %v351
    %1661 = vmatpush.msra.mxu0 %v347
    %1662 = vmatpush.msra.mxu0 %v343
    %1663 = vmatpush.msra.mxu0 %v339
    %1664 = vmatpush.msra.mxu0 %v335
    %1665 = vmatpush.msra.mxu0 %v331
    %1666 = vmatpush.msra.mxu0 %v327
    %1667 = vmatpush.msra.mxu0 %v323
    %1668 = vmatpush.msra.mxu0 %v319
    %1669 = vmatpush.msra.mxu0 %v315
    %1670 = vmatpush.msra.mxu0 %v311
    %1671 = vmatpush.msra.mxu0 %v307
    %1672 = vmatpush.msra.mxu0 %v303
    %1673 = vmatpush.msra.mxu0 %v299
    %1674 = vmatpush.msra.mxu0 %v295
    %1675 = vmatpush.msra.mxu0 %v291
    %1676 = vmatmul.f32.gmra.mxu0 %v1376
    %v1677 = vpop.f32.mrf.mxu0
    %v1678 = vadd.f32 0.0, %v1677
    %1679 = vdwg.mxu0
    %v1680 = vadd.f32 %v151, %v1618
    %v1681 = vadd.f32 %v192, %v1638
    %v1682 = vadd.f32 %v233, %v1658
    %v1683 = vadd.f32 %v274, %v1678
    %v1684 = vxor.u32 %v1680, 2147483648
    %v1685 = vmul.f32 %v1684, 1.442695
    %v1686 = vpow.pop %v1685
    %v1687 = vadd.f32 %v1686, 1.0
    %v1688 = vrcp.pop %v1687
    %v1689 = vmul.f32 %v1687, %v1688
    %v1690 = vsub.f32 1.0, %v1689
    %v1691 = vmul.f32 %v1688, %v1690
    %v1692 = vadd.f32 %v1688, %v1691
    %vm1693 = vweird.f32 %v1687
    %vm1694 = vweird.f32 %v1688
    %vm1695 = vmor %vm1693, %vm1694
    %v1696 = vsel %vm1695, %v1688, %v1692
    %v1697 = vand.u32 2147483647, %v1687
    %vm1698 = vcmp.eq.f32.partialorder %v1697, 8.507059e+37
    %v1699 = vand.u32 %v1687, 2147483648
    %v1700 = vor.u32 1.1754944e-38, %v1699
    %v1701 = vsel %vm1698, %v1700, %v1696
    %v1702 = vmul.f32 1.0, %v1701
    %v1703 = vxor.u32 %v1681, 2147483648
    %v1704 = vmul.f32 %v1703, 1.442695
    %v1705 = vpow.pop %v1704
    %v1706 = vadd.f32 %v1705, 1.0
    %v1707 = vrcp.pop %v1706
    %v1708 = vmul.f32 %v1706, %v1707
    %v1709 = vsub.f32 1.0, %v1708
    %v1710 = vmul.f32 %v1707, %v1709
    %v1711 = vadd.f32 %v1707, %v1710
    %vm1712 = vweird.f32 %v1706
    %vm1713 = vweird.f32 %v1707
    %vm1714 = vmor %vm1712, %vm1713
    %v1715 = vsel %vm1714, %v1707, %v1711
    %v1716 = vand.u32 2147483647, %v1706
    %vm1717 = vcmp.eq.f32.partialorder %v1716, 8.507059e+37
    %v1718 = vand.u32 %v1706, 2147483648
    %v1719 = vor.u32 1.1754944e-38, %v1718
    %v1720 = vsel %vm1717, %v1719, %v1715
    %v1721 = vmul.f32 1.0, %v1720
    %v1722 = vtanh.pop %v1682
    %v1723 = vxor.u32 %v1683, 2147483648
    %v1724 = vmul.f32 %v1723, 1.442695
    %v1725 = vpow.pop %v1724
    %v1726 = vadd.f32 %v1725, 1.0
    %v1727 = vrcp.pop %v1726
    %v1728 = vmul.f32 %v1726, %v1727
    %v1729 = vsub.f32 1.0, %v1728
    %v1730 = vmul.f32 %v1727, %v1729
    %v1731 = vadd.f32 %v1727, %v1730
    %vm1732 = vweird.f32 %v1726
    %vm1733 = vweird.f32 %v1727
    %vm1734 = vmor %vm1732, %vm1733
    %v1735 = vsel %vm1734, %v1727, %v1731
    %v1736 = vand.u32 2147483647, %v1726
    %vm1737 = vcmp.eq.f32.partialorder %v1736, 8.507059e+37
    %v1738 = vand.u32 %v1726, 2147483648
    %v1739 = vor.u32 1.1754944e-38, %v1738
    %v1740 = vsel %vm1737, %v1739, %v1735
    %v1741 = vmul.f32 1.0, %v1740
    %v1742 = vmul.f32 %v1721, %v1374
    %v1743 = vmul.f32 %v1702, %v1722
    %v1744 = vadd.f32 %v1742, %v1743
    %v1745 = vtanh.pop %v1744
    %v1746 = vmul.f32 %v1741, %v1745
    %1747 = vmatpush.msra.mxu0 %v412
    %1748 = vmatpush.msra.mxu0 %v408
    %1749 = vmatpush.msra.mxu0 %v404
    %1750 = vmatpush.msra.mxu0 %v400
    %1751 = vmatpush.msra.mxu0 %v396
    %1752 = vmatpush.msra.mxu0 %v392
    %1753 = vmatpush.msra.mxu0 %v388
    %1754 = vmatpush.msra.mxu0 %v384
    %1755 = vmatpush.msra.mxu0 %v380
    %1756 = vmatpush.msra.mxu0 %v376
    %1757 = vmatpush.msra.mxu0 %v372
    %1758 = vmatpush.msra.mxu0 %v368
    %1759 = vmatpush.msra.mxu0 %v364
    %1760 = vmatpush.msra.mxu0 %v360
    %1761 = vmatpush.msra.mxu0 %v356
    %1762 = vmatpush.msra.mxu0 %v352
    %1763 = vmatmul.f32.gmra.mxu0 %v1746
    %v1764 = vpop.f32.mrf.mxu0
    %v1765 = vadd.f32 %v482, %v1764
    %1766 = vdwg.mxu0
    %1767 = vmatpush.msra.mxu0 %v476
    %1768 = vmatpush.msra.mxu0 %v472
    %1769 = vmatpush.msra.mxu0 %v468
    %1770 = vmatpush.msra.mxu0 %v464
    %1771 = vmatpush.msra.mxu0 %v460
    %1772 = vmatpush.msra.mxu0 %v456
    %1773 = vmatpush.msra.mxu0 %v452
    %1774 = vmatpush.msra.mxu0 %v448
    %1775 = vmatpush.msra.mxu0 %v444
    %1776 = vmatpush.msra.mxu0 %v440
    %1777 = vmatpush.msra.mxu0 %v436
    %1778 = vmatpush.msra.mxu0 %v432
    %1779 = vmatpush.msra.mxu0 %v428
    %1780 = vmatpush.msra.mxu0 %v424
    %1781 = vmatpush.msra.mxu0 %v420
    %1782 = vmatpush.msra.mxu0 %v416
    %1783 = vmatmul.f32.gmra.mxu0 %v1599
    %v1784 = vpop.f32.mrf.mxu0
    %v1785 = vadd.f32 %v1765, %v1784
    %1786 = vdwg.mxu0
    %1787 = vmatpush.msra.mxu0 %v413
    %1788 = vmatpush.msra.mxu0 %v409
    %1789 = vmatpush.msra.mxu0 %v405
    %1790 = vmatpush.msra.mxu0 %v401
    %1791 = vmatpush.msra.mxu0 %v397
    %1792 = vmatpush.msra.mxu0 %v393
    %1793 = vmatpush.msra.mxu0 %v389
    %1794 = vmatpush.msra.mxu0 %v385
    %1795 = vmatpush.msra.mxu0 %v381
    %1796 = vmatpush.msra.mxu0 %v377
    %1797 = vmatpush.msra.mxu0 %v373
    %1798 = vmatpush.msra.mxu0 %v369
    %1799 = vmatpush.msra.mxu0 %v365
    %1800 = vmatpush.msra.mxu0 %v361
    %1801 = vmatpush.msra.mxu0 %v357
    %1802 = vmatpush.msra.mxu0 %v353
    %1803 = vmatmul.f32.gmra.mxu0 %v1746
    %v1804 = vpop.f32.mrf.mxu0
    %v1805 = vadd.f32 %v483, %v1804
    %1806 = vdwg.mxu0
    %1807 = vmatpush.msra.mxu0 %v477
    %1808 = vmatpush.msra.mxu0 %v473
    %1809 = vmatpush.msra.mxu0 %v469
    %1810 = vmatpush.msra.mxu0 %v465
    %1811 = vmatpush.msra.mxu0 %v461
    %1812 = vmatpush.msra.mxu0 %v457
    %1813 = vmatpush.msra.mxu0 %v453
    %1814 = vmatpush.msra.mxu0 %v449
    %1815 = vmatpush.msra.mxu0 %v445
    %1816 = vmatpush.msra.mxu0 %v441
    %1817 = vmatpush.msra.mxu0 %v437
    %1818 = vmatpush.msra.mxu0 %v433
    %1819 = vmatpush.msra.mxu0 %v429
    %1820 = vmatpush.msra.mxu0 %v425
    %1821 = vmatpush.msra.mxu0 %v421
    %1822 = vmatpush.msra.mxu0 %v417
    %1823 = vmatmul.f32.gmra.mxu0 %v1599
    %v1824 = vpop.f32.mrf.mxu0
    %v1825 = vadd.f32 %v1805, %v1824
    %1826 = vdwg.mxu0
    %1827 = vmatpush.msra.mxu0 %v414
    %1828 = vmatpush.msra.mxu0 %v410
    %1829 = vmatpush.msra.mxu0 %v406
    %1830 = vmatpush.msra.mxu0 %v402
    %1831 = vmatpush.msra.mxu0 %v398
    %1832 = vmatpush.msra.mxu0 %v394
    %1833 = vmatpush.msra.mxu0 %v390
    %1834 = vmatpush.msra.mxu0 %v386
    %1835 = vmatpush.msra.mxu0 %v382
    %1836 = vmatpush.msra.mxu0 %v378
    %1837 = vmatpush.msra.mxu0 %v374
    %1838 = vmatpush.msra.mxu0 %v370
    %1839 = vmatpush.msra.mxu0 %v366
    %1840 = vmatpush.msra.mxu0 %v362
    %1841 = vmatpush.msra.mxu0 %v358
    %1842 = vmatpush.msra.mxu0 %v354
    %1843 = vmatmul.f32.gmra.mxu0 %v1746
    %v1844 = vpop.f32.mrf.mxu0
    %v1845 = vadd.f32 %v484, %v1844
    %1846 = vdwg.mxu0
    %1847 = vmatpush.msra.mxu0 %v478
    %1848 = vmatpush.msra.mxu0 %v474
    %1849 = vmatpush.msra.mxu0 %v470
    %1850 = vmatpush.msra.mxu0 %v466
    %1851 = vmatpush.msra.mxu0 %v462
    %1852 = vmatpush.msra.mxu0 %v458
    %1853 = vmatpush.msra.mxu0 %v454
    %1854 = vmatpush.msra.mxu0 %v450
    %1855 = vmatpush.msra.mxu0 %v446
    %1856 = vmatpush.msra.mxu0 %v442
    %1857 = vmatpush.msra.mxu0 %v438
    %1858 = vmatpush.msra.mxu0 %v434
    %1859 = vmatpush.msra.mxu0 %v430
    %1860 = vmatpush.msra.mxu0 %v426
    %1861 = vmatpush.msra.mxu0 %v422
    %1862 = vmatpush.msra.mxu0 %v418
    %1863 = vmatmul.f32.gmra.mxu0 %v1599
    %v1864 = vpop.f32.mrf.mxu0
    %v1865 = vadd.f32 %v1845, %v1864
    %1866 = vdwg.mxu0
    %1867 = vmatpush.msra.mxu0 %v415
    %1868 = vmatpush.msra.mxu0 %v411
    %1869 = vmatpush.msra.mxu0 %v407
    %1870 = vmatpush.msra.mxu0 %v403
    %1871 = vmatpush.msra.mxu0 %v399
    %1872 = vmatpush.msra.mxu0 %v395
    %1873 = vmatpush.msra.mxu0 %v391
    %1874 = vmatpush.msra.mxu0 %v387
    %1875 = vmatpush.msra.mxu0 %v383
    %1876 = vmatpush.msra.mxu0 %v379
    %1877 = vmatpush.msra.mxu0 %v375
    %1878 = vmatpush.msra.mxu0 %v371
    %1879 = vmatpush.msra.mxu0 %v367
    %1880 = vmatpush.msra.mxu0 %v363
    %1881 = vmatpush.msra.mxu0 %v359
    %1882 = vmatpush.msra.mxu0 %v355
    %1883 = vmatmul.f32.gmra.mxu0 %v1746
    %v1884 = vpop.f32.mrf.mxu0
    %v1885 = vadd.f32 %v485, %v1884
    %1886 = vdwg.mxu0
    %1887 = vmatpush.msra.mxu0 %v479
    %1888 = vmatpush.msra.mxu0 %v475
    %1889 = vmatpush.msra.mxu0 %v471
    %1890 = vmatpush.msra.mxu0 %v467
    %1891 = vmatpush.msra.mxu0 %v463
    %1892 = vmatpush.msra.mxu0 %v459
    %1893 = vmatpush.msra.mxu0 %v455
    %1894 = vmatpush.msra.mxu0 %v451
    %1895 = vmatpush.msra.mxu0 %v447
    %1896 = vmatpush.msra.mxu0 %v443
    %1897 = vmatpush.msra.mxu0 %v439
    %1898 = vmatpush.msra.mxu0 %v435
    %1899 = vmatpush.msra.mxu0 %v431
    %1900 = vmatpush.msra.mxu0 %v427
    %1901 = vmatpush.msra.mxu0 %v423
    %1902 = vmatpush.msra.mxu0 %v419
    %1903 = vmatmul.f32.gmra.mxu0 %v1599
    %v1904 = vpop.f32.mrf.mxu0
    %v1905 = vadd.f32 %v1885, %v1904
    %1906 = vdwg.mxu0
    %v1907 = vxor.u32 %v1785, 2147483648
    %v1908 = vmul.f32 %v1907, 1.442695
    %v1909 = vpow.pop %v1908
    %v1910 = vadd.f32 %v1909, 1.0
    %v1911 = vrcp.pop %v1910
    %v1912 = vmul.f32 %v1910, %v1911
    %v1913 = vsub.f32 1.0, %v1912
    %v1914 = vmul.f32 %v1911, %v1913
    %v1915 = vadd.f32 %v1911, %v1914
    %vm1916 = vweird.f32 %v1910
    %vm1917 = vweird.f32 %v1911
    %vm1918 = vmor %vm1916, %vm1917
    %v1919 = vsel %vm1918, %v1911, %v1915
    %v1920 = vand.u32 2147483647, %v1910
    %vm1921 = vcmp.eq.f32.partialorder %v1920, 8.507059e+37
    %v1922 = vand.u32 %v1910, 2147483648
    %v1923 = vor.u32 1.1754944e-38, %v1922
    %v1924 = vsel %vm1921, %v1923, %v1919
    %v1925 = vmul.f32 1.0, %v1924
    %v1926 = vxor.u32 %v1825, 2147483648
    %v1927 = vmul.f32 %v1926, 1.442695
    %v1928 = vpow.pop %v1927
    %v1929 = vadd.f32 %v1928, 1.0
    %v1930 = vrcp.pop %v1929
    %v1931 = vmul.f32 %v1929, %v1930
    %v1932 = vsub.f32 1.0, %v1931
    %v1933 = vmul.f32 %v1930, %v1932
    %v1934 = vadd.f32 %v1930, %v1933
    %vm1935 = vweird.f32 %v1929
    %vm1936 = vweird.f32 %v1930
    %vm1937 = vmor %vm1935, %vm1936
    %v1938 = vsel %vm1937, %v1930, %v1934
    %v1939 = vand.u32 2147483647, %v1929
    %vm1940 = vcmp.eq.f32.partialorder %v1939, 8.507059e+37
    %v1941 = vand.u32 %v1929, 2147483648
    %v1942 = vor.u32 1.1754944e-38, %v1941
    %v1943 = vsel %vm1940, %v1942, %v1938
    %v1944 = vmul.f32 1.0, %v1943
    %v1945 = vtanh.pop %v1865
    %v1946 = vxor.u32 %v1905, 2147483648
    %v1947 = vmul.f32 %v1946, 1.442695
    %v1948 = vpow.pop %v1947
    %v1949 = vadd.f32 %v1948, 1.0
    %v1950 = vrcp.pop %v1949
    %v1951 = vmul.f32 %v1949, %v1950
    %v1952 = vsub.f32 1.0, %v1951
    %v1953 = vmul.f32 %v1950, %v1952
    %v1954 = vadd.f32 %v1950, %v1953
    %vm1955 = vweird.f32 %v1949
    %vm1956 = vweird.f32 %v1950
    %vm1957 = vmor %vm1955, %vm1956
    %v1958 = vsel %vm1957, %v1950, %v1954
    %v1959 = vand.u32 2147483647, %v1949
    %vm1960 = vcmp.eq.f32.partialorder %v1959, 8.507059e+37
    %v1961 = vand.u32 %v1949, 2147483648
    %v1962 = vor.u32 1.1754944e-38, %v1961
    %v1963 = vsel %vm1960, %v1962, %v1958
    %v1964 = vmul.f32 1.0, %v1963
    %v1965 = vmul.f32 %v1944, %v1597
    %v1966 = vmul.f32 %v1925, %v1945
    %v1967 = vadd.f32 %v1965, %v1966
    %v1968 = vtanh.pop %v1967
    %v1969 = vmul.f32 %v1964, %v1968
    %1970 = vmatpush.msra.mxu0 %v348
    %1971 = vmatpush.msra.mxu0 %v344
    %1972 = vmatpush.msra.mxu0 %v340
    %1973 = vmatpush.msra.mxu0 %v336
    %1974 = vmatpush.msra.mxu0 %v332
    %1975 = vmatpush.msra.mxu0 %v328
    %1976 = vmatpush.msra.mxu0 %v324
    %1977 = vmatpush.msra.mxu0 %v320
    %1978 = vmatpush.msra.mxu0 %v316
    %1979 = vmatpush.msra.mxu0 %v312
    %1980 = vmatpush.msra.mxu0 %v308
    %1981 = vmatpush.msra.mxu0 %v304
    %1982 = vmatpush.msra.mxu0 %v300
    %1983 = vmatpush.msra.mxu0 %v296
    %1984 = vmatpush.msra.mxu0 %v292
    %1985 = vmatpush.msra.mxu0 %v288
    %1986 = vmatmul.f32.gmra.mxu0 %v1746
    %v1987 = vpop.f32.mrf.mxu0
    %v1988 = vadd.f32 0.0, %v1987
    %1989 = vdwg.mxu0
    %1990 = vmatpush.msra.mxu0 %v349
    %1991 = vmatpush.msra.mxu0 %v345
    %1992 = vmatpush.msra.mxu0 %v341
    %1993 = vmatpush.msra.mxu0 %v337
    %1994 = vmatpush.msra.mxu0 %v333
    %1995 = vmatpush.msra.mxu0 %v329
    %1996 = vmatpush.msra.mxu0 %v325
    %1997 = vmatpush.msra.mxu0 %v321
    %1998 = vmatpush.msra.mxu0 %v317
    %1999 = vmatpush.msra.mxu0 %v313
    %2000 = vmatpush.msra.mxu0 %v309
    %2001 = vmatpush.msra.mxu0 %v305
    %2002 = vmatpush.msra.mxu0 %v301
    %2003 = vmatpush.msra.mxu0 %v297
    %2004 = vmatpush.msra.mxu0 %v293
    %2005 = vmatpush.msra.mxu0 %v289
    %2006 = vmatmul.f32.gmra.mxu0 %v1746
    %v2007 = vpop.f32.mrf.mxu0
    %v2008 = vadd.f32 0.0, %v2007
    %2009 = vdwg.mxu0
    %2010 = vmatpush.msra.mxu0 %v350
    %2011 = vmatpush.msra.mxu0 %v346
    %2012 = vmatpush.msra.mxu0 %v342
    %2013 = vmatpush.msra.mxu0 %v338
    %2014 = vmatpush.msra.mxu0 %v334
    %2015 = vmatpush.msra.mxu0 %v330
    %2016 = vmatpush.msra.mxu0 %v326
    %2017 = vmatpush.msra.mxu0 %v322
    %2018 = vmatpush.msra.mxu0 %v318
    %2019 = vmatpush.msra.mxu0 %v314
    %2020 = vmatpush.msra.mxu0 %v310
    %2021 = vmatpush.msra.mxu0 %v306
    %2022 = vmatpush.msra.mxu0 %v302
    %2023 = vmatpush.msra.mxu0 %v298
    %2024 = vmatpush.msra.mxu0 %v294
    %2025 = vmatpush.msra.mxu0 %v290
    %2026 = vmatmul.f32.gmra.mxu0 %v1746
    %v2027 = vpop.f32.mrf.mxu0
    %v2028 = vadd.f32 0.0, %v2027
    %2029 = vdwg.mxu0
    %2030 = vmatpush.msra.mxu0 %v351
    %2031 = vmatpush.msra.mxu0 %v347
    %2032 = vmatpush.msra.mxu0 %v343
    %2033 = vmatpush.msra.mxu0 %v339
    %2034 = vmatpush.msra.mxu0 %v335
    %2035 = vmatpush.msra.mxu0 %v331
    %2036 = vmatpush.msra.mxu0 %v327
    %2037 = vmatpush.msra.mxu0 %v323
    %2038 = vmatpush.msra.mxu0 %v319
    %2039 = vmatpush.msra.mxu0 %v315
    %2040 = vmatpush.msra.mxu0 %v311
    %2041 = vmatpush.msra.mxu0 %v307
    %2042 = vmatpush.msra.mxu0 %v303
    %2043 = vmatpush.msra.mxu0 %v299
    %2044 = vmatpush.msra.mxu0 %v295
    %2045 = vmatpush.msra.mxu0 %v291
    %2046 = vmatmul.f32.gmra.mxu0 %v1746
    %v2047 = vpop.f32.mrf.mxu0
    %v2048 = vadd.f32 0.0, %v2047
    %2049 = vdwg.mxu0
    %v2050 = vadd.f32 %v154, %v1988
    %v2051 = vadd.f32 %v195, %v2008
    %v2052 = vadd.f32 %v236, %v2028
    %v2053 = vadd.f32 %v277, %v2048
    %v2054 = vxor.u32 %v2050, 2147483648
    %v2055 = vmul.f32 %v2054, 1.442695
    %v2056 = vpow.pop %v2055
    %v2057 = vadd.f32 %v2056, 1.0
    %v2058 = vrcp.pop %v2057
    %v2059 = vmul.f32 %v2057, %v2058
    %v2060 = vsub.f32 1.0, %v2059
    %v2061 = vmul.f32 %v2058, %v2060
    %v2062 = vadd.f32 %v2058, %v2061
    %vm2063 = vweird.f32 %v2057
    %vm2064 = vweird.f32 %v2058
    %vm2065 = vmor %vm2063, %vm2064
    %v2066 = vsel %vm2065, %v2058, %v2062
    %v2067 = vand.u32 2147483647, %v2057
    %vm2068 = vcmp.eq.f32.partialorder %v2067, 8.507059e+37
    %v2069 = vand.u32 %v2057, 2147483648
    %v2070 = vor.u32 1.1754944e-38, %v2069
    %v2071 = vsel %vm2068, %v2070, %v2066
    %v2072 = vmul.f32 1.0, %v2071
    %v2073 = vxor.u32 %v2051, 2147483648
    %v2074 = vmul.f32 %v2073, 1.442695
    %v2075 = vpow.pop %v2074
    %v2076 = vadd.f32 %v2075, 1.0
    %v2077 = vrcp.pop %v2076
    %v2078 = vmul.f32 %v2076, %v2077
    %v2079 = vsub.f32 1.0, %v2078
    %v2080 = vmul.f32 %v2077, %v2079
    %v2081 = vadd.f32 %v2077, %v2080
    %vm2082 = vweird.f32 %v2076
    %vm2083 = vweird.f32 %v2077
    %vm2084 = vmor %vm2082, %vm2083
    %v2085 = vsel %vm2084, %v2077, %v2081
    %v2086 = vand.u32 2147483647, %v2076
    %vm2087 = vcmp.eq.f32.partialorder %v2086, 8.507059e+37
    %v2088 = vand.u32 %v2076, 2147483648
    %v2089 = vor.u32 1.1754944e-38, %v2088
    %v2090 = vsel %vm2087, %v2089, %v2085
    %v2091 = vmul.f32 1.0, %v2090
    %v2092 = vtanh.pop %v2052
    %v2093 = vxor.u32 %v2053, 2147483648
    %v2094 = vmul.f32 %v2093, 1.442695
    %v2095 = vpow.pop %v2094
    %v2096 = vadd.f32 %v2095, 1.0
    %v2097 = vrcp.pop %v2096
    %v2098 = vmul.f32 %v2096, %v2097
    %v2099 = vsub.f32 1.0, %v2098
    %v2100 = vmul.f32 %v2097, %v2099
    %v2101 = vadd.f32 %v2097, %v2100
    %vm2102 = vweird.f32 %v2096
    %vm2103 = vweird.f32 %v2097
    %vm2104 = vmor %vm2102, %vm2103
    %v2105 = vsel %vm2104, %v2097, %v2101
    %v2106 = vand.u32 2147483647, %v2096
    %vm2107 = vcmp.eq.f32.partialorder %v2106, 8.507059e+37
    %v2108 = vand.u32 %v2096, 2147483648
    %v2109 = vor.u32 1.1754944e-38, %v2108
    %v2110 = vsel %vm2107, %v2109, %v2105
    %v2111 = vmul.f32 1.0, %v2110
    %v2112 = vmul.f32 %v2091, %v1744
    %v2113 = vmul.f32 %v2072, %v2092
    %v2114 = vadd.f32 %v2112, %v2113
    %v2115 = vtanh.pop %v2114
    %v2116 = vmul.f32 %v2111, %v2115
    %2117 = vmatpush.msra.mxu0 %v412
    %2118 = vmatpush.msra.mxu0 %v408
    %2119 = vmatpush.msra.mxu0 %v404
    %2120 = vmatpush.msra.mxu0 %v400
    %2121 = vmatpush.msra.mxu0 %v396
    %2122 = vmatpush.msra.mxu0 %v392
    %2123 = vmatpush.msra.mxu0 %v388
    %2124 = vmatpush.msra.mxu0 %v384
    %2125 = vmatpush.msra.mxu0 %v380
    %2126 = vmatpush.msra.mxu0 %v376
    %2127 = vmatpush.msra.mxu0 %v372
    %2128 = vmatpush.msra.mxu0 %v368
    %2129 = vmatpush.msra.mxu0 %v364
    %2130 = vmatpush.msra.mxu0 %v360
    %2131 = vmatpush.msra.mxu0 %v356
    %2132 = vmatpush.msra.mxu0 %v352
    %2133 = vmatmul.f32.gmra.mxu0 %v2116
    %v2134 = vpop.f32.mrf.mxu0
    %v2135 = vadd.f32 %v482, %v2134
    %2136 = vdwg.mxu0
    %2137 = vmatpush.msra.mxu0 %v476
    %2138 = vmatpush.msra.mxu0 %v472
    %2139 = vmatpush.msra.mxu0 %v468
    %2140 = vmatpush.msra.mxu0 %v464
    %2141 = vmatpush.msra.mxu0 %v460
    %2142 = vmatpush.msra.mxu0 %v456
    %2143 = vmatpush.msra.mxu0 %v452
    %2144 = vmatpush.msra.mxu0 %v448
    %2145 = vmatpush.msra.mxu0 %v444
    %2146 = vmatpush.msra.mxu0 %v440
    %2147 = vmatpush.msra.mxu0 %v436
    %2148 = vmatpush.msra.mxu0 %v432
    %2149 = vmatpush.msra.mxu0 %v428
    %2150 = vmatpush.msra.mxu0 %v424
    %2151 = vmatpush.msra.mxu0 %v420
    %2152 = vmatpush.msra.mxu0 %v416
    %2153 = vmatmul.f32.gmra.mxu0 %v1969
    %v2154 = vpop.f32.mrf.mxu0
    %v2155 = vadd.f32 %v2135, %v2154
    %2156 = vdwg.mxu0
    %2157 = vmatpush.msra.mxu0 %v413
    %2158 = vmatpush.msra.mxu0 %v409
    %2159 = vmatpush.msra.mxu0 %v405
    %2160 = vmatpush.msra.mxu0 %v401
    %2161 = vmatpush.msra.mxu0 %v397
    %2162 = vmatpush.msra.mxu0 %v393
    %2163 = vmatpush.msra.mxu0 %v389
    %2164 = vmatpush.msra.mxu0 %v385
    %2165 = vmatpush.msra.mxu0 %v381
    %2166 = vmatpush.msra.mxu0 %v377
    %2167 = vmatpush.msra.mxu0 %v373
    %2168 = vmatpush.msra.mxu0 %v369
    %2169 = vmatpush.msra.mxu0 %v365
    %2170 = vmatpush.msra.mxu0 %v361
    %2171 = vmatpush.msra.mxu0 %v357
    %2172 = vmatpush.msra.mxu0 %v353
    %2173 = vmatmul.f32.gmra.mxu0 %v2116
    %v2174 = vpop.f32.mrf.mxu0
    %v2175 = vadd.f32 %v483, %v2174
    %2176 = vdwg.mxu0
    %2177 = vmatpush.msra.mxu0 %v477
    %2178 = vmatpush.msra.mxu0 %v473
    %2179 = vmatpush.msra.mxu0 %v469
    %2180 = vmatpush.msra.mxu0 %v465
    %2181 = vmatpush.msra.mxu0 %v461
    %2182 = vmatpush.msra.mxu0 %v457
    %2183 = vmatpush.msra.mxu0 %v453
    %2184 = vmatpush.msra.mxu0 %v449
    %2185 = vmatpush.msra.mxu0 %v445
    %2186 = vmatpush.msra.mxu0 %v441
    %2187 = vmatpush.msra.mxu0 %v437
    %2188 = vmatpush.msra.mxu0 %v433
    %2189 = vmatpush.msra.mxu0 %v429
    %2190 = vmatpush.msra.mxu0 %v425
    %2191 = vmatpush.msra.mxu0 %v421
    %2192 = vmatpush.msra.mxu0 %v417
    %2193 = vmatmul.f32.gmra.mxu0 %v1969
    %v2194 = vpop.f32.mrf.mxu0
    %v2195 = vadd.f32 %v2175, %v2194
    %2196 = vdwg.mxu0
    %2197 = vmatpush.msra.mxu0 %v414
    %2198 = vmatpush.msra.mxu0 %v410
    %2199 = vmatpush.msra.mxu0 %v406
    %2200 = vmatpush.msra.mxu0 %v402
    %2201 = vmatpush.msra.mxu0 %v398
    %2202 = vmatpush.msra.mxu0 %v394
    %2203 = vmatpush.msra.mxu0 %v390
    %2204 = vmatpush.msra.mxu0 %v386
    %2205 = vmatpush.msra.mxu0 %v382
    %2206 = vmatpush.msra.mxu0 %v378
    %2207 = vmatpush.msra.mxu0 %v374
    %2208 = vmatpush.msra.mxu0 %v370
    %2209 = vmatpush.msra.mxu0 %v366
    %2210 = vmatpush.msra.mxu0 %v362
    %2211 = vmatpush.msra.mxu0 %v358
    %2212 = vmatpush.msra.mxu0 %v354
    %2213 = vmatmul.f32.gmra.mxu0 %v2116
    %v2214 = vpop.f32.mrf.mxu0
    %v2215 = vadd.f32 %v484, %v2214
    %2216 = vdwg.mxu0
    %2217 = vmatpush.msra.mxu0 %v478
    %2218 = vmatpush.msra.mxu0 %v474
    %2219 = vmatpush.msra.mxu0 %v470
    %2220 = vmatpush.msra.mxu0 %v466
    %2221 = vmatpush.msra.mxu0 %v462
    %2222 = vmatpush.msra.mxu0 %v458
    %2223 = vmatpush.msra.mxu0 %v454
    %2224 = vmatpush.msra.mxu0 %v450
    %2225 = vmatpush.msra.mxu0 %v446
    %2226 = vmatpush.msra.mxu0 %v442
    %2227 = vmatpush.msra.mxu0 %v438
    %2228 = vmatpush.msra.mxu0 %v434
    %2229 = vmatpush.msra.mxu0 %v430
    %2230 = vmatpush.msra.mxu0 %v426
    %2231 = vmatpush.msra.mxu0 %v422
    %2232 = vmatpush.msra.mxu0 %v418
    %2233 = vmatmul.f32.gmra.mxu0 %v1969
    %v2234 = vpop.f32.mrf.mxu0
    %v2235 = vadd.f32 %v2215, %v2234
    %2236 = vdwg.mxu0
    %2237 = vmatpush.msra.mxu0 %v415
    %2238 = vmatpush.msra.mxu0 %v411
    %2239 = vmatpush.msra.mxu0 %v407
    %2240 = vmatpush.msra.mxu0 %v403
    %2241 = vmatpush.msra.mxu0 %v399
    %2242 = vmatpush.msra.mxu0 %v395
    %2243 = vmatpush.msra.mxu0 %v391
    %2244 = vmatpush.msra.mxu0 %v387
    %2245 = vmatpush.msra.mxu0 %v383
    %2246 = vmatpush.msra.mxu0 %v379
    %2247 = vmatpush.msra.mxu0 %v375
    %2248 = vmatpush.msra.mxu0 %v371
    %2249 = vmatpush.msra.mxu0 %v367
    %2250 = vmatpush.msra.mxu0 %v363
    %2251 = vmatpush.msra.mxu0 %v359
    %2252 = vmatpush.msra.mxu0 %v355
    %2253 = vmatmul.f32.gmra.mxu0 %v2116
    %v2254 = vpop.f32.mrf.mxu0
    %v2255 = vadd.f32 %v485, %v2254
    %2256 = vdwg.mxu0
    %2257 = vmatpush.msra.mxu0 %v479
    %2258 = vmatpush.msra.mxu0 %v475
    %2259 = vmatpush.msra.mxu0 %v471
    %2260 = vmatpush.msra.mxu0 %v467
    %2261 = vmatpush.msra.mxu0 %v463
    %2262 = vmatpush.msra.mxu0 %v459
    %2263 = vmatpush.msra.mxu0 %v455
    %2264 = vmatpush.msra.mxu0 %v451
    %2265 = vmatpush.msra.mxu0 %v447
    %2266 = vmatpush.msra.mxu0 %v443
    %2267 = vmatpush.msra.mxu0 %v439
    %2268 = vmatpush.msra.mxu0 %v435
    %2269 = vmatpush.msra.mxu0 %v431
    %2270 = vmatpush.msra.mxu0 %v427
    %2271 = vmatpush.msra.mxu0 %v423
    %2272 = vmatpush.msra.mxu0 %v419
    %2273 = vmatmul.f32.gmra.mxu0 %v1969
    %v2274 = vpop.f32.mrf.mxu0
    %v2275 = vadd.f32 %v2255, %v2274
    %2276 = vdwg.mxu0
    %v2277 = vxor.u32 %v2155, 2147483648
    %v2278 = vmul.f32 %v2277, 1.442695
    %v2279 = vpow.pop %v2278
    %v2280 = vadd.f32 %v2279, 1.0
    %v2281 = vrcp.pop %v2280
    %v2282 = vmul.f32 %v2280, %v2281
    %v2283 = vsub.f32 1.0, %v2282
    %v2284 = vmul.f32 %v2281, %v2283
    %v2285 = vadd.f32 %v2281, %v2284
    %vm2286 = vweird.f32 %v2280
    %vm2287 = vweird.f32 %v2281
    %vm2288 = vmor %vm2286, %vm2287
    %v2289 = vsel %vm2288, %v2281, %v2285
    %v2290 = vand.u32 2147483647, %v2280
    %vm2291 = vcmp.eq.f32.partialorder %v2290, 8.507059e+37
    %v2292 = vand.u32 %v2280, 2147483648
    %v2293 = vor.u32 1.1754944e-38, %v2292
    %v2294 = vsel %vm2291, %v2293, %v2289
    %v2295 = vmul.f32 1.0, %v2294
    %v2296 = vxor.u32 %v2195, 2147483648
    %v2297 = vmul.f32 %v2296, 1.442695
    %v2298 = vpow.pop %v2297
    %v2299 = vadd.f32 %v2298, 1.0
    %v2300 = vrcp.pop %v2299
    %v2301 = vmul.f32 %v2299, %v2300
    %v2302 = vsub.f32 1.0, %v2301
    %v2303 = vmul.f32 %v2300, %v2302
    %v2304 = vadd.f32 %v2300, %v2303
    %vm2305 = vweird.f32 %v2299
    %vm2306 = vweird.f32 %v2300
    %vm2307 = vmor %vm2305, %vm2306
    %v2308 = vsel %vm2307, %v2300, %v2304
    %v2309 = vand.u32 2147483647, %v2299
    %vm2310 = vcmp.eq.f32.partialorder %v2309, 8.507059e+37
    %v2311 = vand.u32 %v2299, 2147483648
    %v2312 = vor.u32 1.1754944e-38, %v2311
    %v2313 = vsel %vm2310, %v2312, %v2308
    %v2314 = vmul.f32 1.0, %v2313
    %v2315 = vtanh.pop %v2235
    %v2316 = vxor.u32 %v2275, 2147483648
    %v2317 = vmul.f32 %v2316, 1.442695
    %v2318 = vpow.pop %v2317
    %v2319 = vadd.f32 %v2318, 1.0
    %v2320 = vrcp.pop %v2319
    %v2321 = vmul.f32 %v2319, %v2320
    %v2322 = vsub.f32 1.0, %v2321
    %v2323 = vmul.f32 %v2320, %v2322
    %v2324 = vadd.f32 %v2320, %v2323
    %vm2325 = vweird.f32 %v2319
    %vm2326 = vweird.f32 %v2320
    %vm2327 = vmor %vm2325, %vm2326
    %v2328 = vsel %vm2327, %v2320, %v2324
    %v2329 = vand.u32 2147483647, %v2319
    %vm2330 = vcmp.eq.f32.partialorder %v2329, 8.507059e+37
    %v2331 = vand.u32 %v2319, 2147483648
    %v2332 = vor.u32 1.1754944e-38, %v2331
    %v2333 = vsel %vm2330, %v2332, %v2328
    %v2334 = vmul.f32 1.0, %v2333
    %v2335 = vmul.f32 %v2314, %v1967
    %v2336 = vmul.f32 %v2295, %v2315
    %v2337 = vadd.f32 %v2335, %v2336
    %v2338 = vtanh.pop %v2337
    %v2339 = vmul.f32 %v2334, %v2338
    %2340 = vmatpush.msra.mxu0 %v348
    %2341 = vmatpush.msra.mxu0 %v344
    %2342 = vmatpush.msra.mxu0 %v340
    %2343 = vmatpush.msra.mxu0 %v336
    %2344 = vmatpush.msra.mxu0 %v332
    %2345 = vmatpush.msra.mxu0 %v328
    %2346 = vmatpush.msra.mxu0 %v324
    %2347 = vmatpush.msra.mxu0 %v320
    %2348 = vmatpush.msra.mxu0 %v316
    %2349 = vmatpush.msra.mxu0 %v312
    %2350 = vmatpush.msra.mxu0 %v308
    %2351 = vmatpush.msra.mxu0 %v304
    %2352 = vmatpush.msra.mxu0 %v300
    %2353 = vmatpush.msra.mxu0 %v296
    %2354 = vmatpush.msra.mxu0 %v292
    %2355 = vmatpush.msra.mxu0 %v288
    %2356 = vmatmul.f32.gmra.mxu0 %v2116
    %v2357 = vpop.f32.mrf.mxu0
    %v2358 = vadd.f32 0.0, %v2357
    %2359 = vdwg.mxu0
    %2360 = vmatpush.msra.mxu0 %v349
    %2361 = vmatpush.msra.mxu0 %v345
    %2362 = vmatpush.msra.mxu0 %v341
    %2363 = vmatpush.msra.mxu0 %v337
    %2364 = vmatpush.msra.mxu0 %v333
    %2365 = vmatpush.msra.mxu0 %v329
    %2366 = vmatpush.msra.mxu0 %v325
    %2367 = vmatpush.msra.mxu0 %v321
    %2368 = vmatpush.msra.mxu0 %v317
    %2369 = vmatpush.msra.mxu0 %v313
    %2370 = vmatpush.msra.mxu0 %v309
    %2371 = vmatpush.msra.mxu0 %v305
    %2372 = vmatpush.msra.mxu0 %v301
    %2373 = vmatpush.msra.mxu0 %v297
    %2374 = vmatpush.msra.mxu0 %v293
    %2375 = vmatpush.msra.mxu0 %v289
    %2376 = vmatmul.f32.gmra.mxu0 %v2116
    %v2377 = vpop.f32.mrf.mxu0
    %v2378 = vadd.f32 0.0, %v2377
    %2379 = vdwg.mxu0
    %2380 = vmatpush.msra.mxu0 %v350
    %2381 = vmatpush.msra.mxu0 %v346
    %2382 = vmatpush.msra.mxu0 %v342
    %2383 = vmatpush.msra.mxu0 %v338
    %2384 = vmatpush.msra.mxu0 %v334
    %2385 = vmatpush.msra.mxu0 %v330
    %2386 = vmatpush.msra.mxu0 %v326
    %2387 = vmatpush.msra.mxu0 %v322
    %2388 = vmatpush.msra.mxu0 %v318
    %2389 = vmatpush.msra.mxu0 %v314
    %2390 = vmatpush.msra.mxu0 %v310
    %2391 = vmatpush.msra.mxu0 %v306
    %2392 = vmatpush.msra.mxu0 %v302
    %2393 = vmatpush.msra.mxu0 %v298
    %2394 = vmatpush.msra.mxu0 %v294
    %2395 = vmatpush.msra.mxu0 %v290
    %2396 = vmatmul.f32.gmra.mxu0 %v2116
    %v2397 = vpop.f32.mrf.mxu0
    %v2398 = vadd.f32 0.0, %v2397
    %2399 = vdwg.mxu0
    %2400 = vmatpush.msra.mxu0 %v351
    %2401 = vmatpush.msra.mxu0 %v347
    %2402 = vmatpush.msra.mxu0 %v343
    %2403 = vmatpush.msra.mxu0 %v339
    %2404 = vmatpush.msra.mxu0 %v335
    %2405 = vmatpush.msra.mxu0 %v331
    %2406 = vmatpush.msra.mxu0 %v327
    %2407 = vmatpush.msra.mxu0 %v323
    %2408 = vmatpush.msra.mxu0 %v319
    %2409 = vmatpush.msra.mxu0 %v315
    %2410 = vmatpush.msra.mxu0 %v311
    %2411 = vmatpush.msra.mxu0 %v307
    %2412 = vmatpush.msra.mxu0 %v303
    %2413 = vmatpush.msra.mxu0 %v299
    %2414 = vmatpush.msra.mxu0 %v295
    %2415 = vmatpush.msra.mxu0 %v291
    %2416 = vmatmul.f32.gmra.mxu0 %v2116
    %v2417 = vpop.f32.mrf.mxu0
    %v2418 = vadd.f32 0.0, %v2417
    %2419 = vdwg.mxu0
    %v2420 = vadd.f32 %v157, %v2358
    %v2421 = vadd.f32 %v198, %v2378
    %v2422 = vadd.f32 %v239, %v2398
    %v2423 = vadd.f32 %v280, %v2418
    %v2424 = vxor.u32 %v2420, 2147483648
    %v2425 = vmul.f32 %v2424, 1.442695
    %v2426 = vpow.pop %v2425
    %v2427 = vadd.f32 %v2426, 1.0
    %v2428 = vrcp.pop %v2427
    %v2429 = vmul.f32 %v2427, %v2428
    %v2430 = vsub.f32 1.0, %v2429
    %v2431 = vmul.f32 %v2428, %v2430
    %v2432 = vadd.f32 %v2428, %v2431
    %vm2433 = vweird.f32 %v2427
    %vm2434 = vweird.f32 %v2428
    %vm2435 = vmor %vm2433, %vm2434
    %v2436 = vsel %vm2435, %v2428, %v2432
    %v2437 = vand.u32 2147483647, %v2427
    %vm2438 = vcmp.eq.f32.partialorder %v2437, 8.507059e+37
    %v2439 = vand.u32 %v2427, 2147483648
    %v2440 = vor.u32 1.1754944e-38, %v2439
    %v2441 = vsel %vm2438, %v2440, %v2436
    %v2442 = vmul.f32 1.0, %v2441
    %v2443 = vxor.u32 %v2421, 2147483648
    %v2444 = vmul.f32 %v2443, 1.442695
    %v2445 = vpow.pop %v2444
    %v2446 = vadd.f32 %v2445, 1.0
    %v2447 = vrcp.pop %v2446
    %v2448 = vmul.f32 %v2446, %v2447
    %v2449 = vsub.f32 1.0, %v2448
    %v2450 = vmul.f32 %v2447, %v2449
    %v2451 = vadd.f32 %v2447, %v2450
    %vm2452 = vweird.f32 %v2446
    %vm2453 = vweird.f32 %v2447
    %vm2454 = vmor %vm2452, %vm2453
    %v2455 = vsel %vm2454, %v2447, %v2451
    %v2456 = vand.u32 2147483647, %v2446
    %vm2457 = vcmp.eq.f32.partialorder %v2456, 8.507059e+37
    %v2458 = vand.u32 %v2446, 2147483648
    %v2459 = vor.u32 1.1754944e-38, %v2458
    %v2460 = vsel %vm2457, %v2459, %v2455
    %v2461 = vmul.f32 1.0, %v2460
    %v2462 = vtanh.pop %v2422
    %v2463 = vxor.u32 %v2423, 2147483648
    %v2464 = vmul.f32 %v2463, 1.442695
    %v2465 = vpow.pop %v2464
    %v2466 = vadd.f32 %v2465, 1.0
    %v2467 = vrcp.pop %v2466
    %v2468 = vmul.f32 %v2466, %v2467
    %v2469 = vsub.f32 1.0, %v2468
    %v2470 = vmul.f32 %v2467, %v2469
    %v2471 = vadd.f32 %v2467, %v2470
    %vm2472 = vweird.f32 %v2466
    %vm2473 = vweird.f32 %v2467
    %vm2474 = vmor %vm2472, %vm2473
    %v2475 = vsel %vm2474, %v2467, %v2471
    %v2476 = vand.u32 2147483647, %v2466
    %vm2477 = vcmp.eq.f32.partialorder %v2476, 8.507059e+37
    %v2478 = vand.u32 %v2466, 2147483648
    %v2479 = vor.u32 1.1754944e-38, %v2478
    %v2480 = vsel %vm2477, %v2479, %v2475
    %v2481 = vmul.f32 1.0, %v2480
    %v2482 = vmul.f32 %v2461, %v2114
    %v2483 = vmul.f32 %v2442, %v2462
    %v2484 = vadd.f32 %v2482, %v2483
    %v2485 = vtanh.pop %v2484
    %v2486 = vmul.f32 %v2481, %v2485
    %2487 = vmatpush.msra.mxu0 %v412
    %2488 = vmatpush.msra.mxu0 %v408
    %2489 = vmatpush.msra.mxu0 %v404
    %2490 = vmatpush.msra.mxu0 %v400
    %2491 = vmatpush.msra.mxu0 %v396
    %2492 = vmatpush.msra.mxu0 %v392
    %2493 = vmatpush.msra.mxu0 %v388
    %2494 = vmatpush.msra.mxu0 %v384
    %2495 = vmatpush.msra.mxu0 %v380
    %2496 = vmatpush.msra.mxu0 %v376
    %2497 = vmatpush.msra.mxu0 %v372
    %2498 = vmatpush.msra.mxu0 %v368
    %2499 = vmatpush.msra.mxu0 %v364
    %2500 = vmatpush.msra.mxu0 %v360
    %2501 = vmatpush.msra.mxu0 %v356
    %2502 = vmatpush.msra.mxu0 %v352
    %2503 = vmatmul.f32.gmra.mxu0 %v2486
    %v2504 = vpop.f32.mrf.mxu0
    %v2505 = vadd.f32 %v482, %v2504
    %2506 = vdwg.mxu0
    %2507 = vmatpush.msra.mxu0 %v476
    %2508 = vmatpush.msra.mxu0 %v472
    %2509 = vmatpush.msra.mxu0 %v468
    %2510 = vmatpush.msra.mxu0 %v464
    %2511 = vmatpush.msra.mxu0 %v460
    %2512 = vmatpush.msra.mxu0 %v456
    %2513 = vmatpush.msra.mxu0 %v452
    %2514 = vmatpush.msra.mxu0 %v448
    %2515 = vmatpush.msra.mxu0 %v444
    %2516 = vmatpush.msra.mxu0 %v440
    %2517 = vmatpush.msra.mxu0 %v436
    %2518 = vmatpush.msra.mxu0 %v432
    %2519 = vmatpush.msra.mxu0 %v428
    %2520 = vmatpush.msra.mxu0 %v424
    %2521 = vmatpush.msra.mxu0 %v420
    %2522 = vmatpush.msra.mxu0 %v416
    %2523 = vmatmul.f32.gmra.mxu0 %v2339
    %v2524 = vpop.f32.mrf.mxu0
    %v2525 = vadd.f32 %v2505, %v2524
    %2526 = vdwg.mxu0
    %2527 = vmatpush.msra.mxu0 %v413
    %2528 = vmatpush.msra.mxu0 %v409
    %2529 = vmatpush.msra.mxu0 %v405
    %2530 = vmatpush.msra.mxu0 %v401
    %2531 = vmatpush.msra.mxu0 %v397
    %2532 = vmatpush.msra.mxu0 %v393
    %2533 = vmatpush.msra.mxu0 %v389
    %2534 = vmatpush.msra.mxu0 %v385
    %2535 = vmatpush.msra.mxu0 %v381
    %2536 = vmatpush.msra.mxu0 %v377
    %2537 = vmatpush.msra.mxu0 %v373
    %2538 = vmatpush.msra.mxu0 %v369
    %2539 = vmatpush.msra.mxu0 %v365
    %2540 = vmatpush.msra.mxu0 %v361
    %2541 = vmatpush.msra.mxu0 %v357
    %2542 = vmatpush.msra.mxu0 %v353
    %2543 = vmatmul.f32.gmra.mxu0 %v2486
    %v2544 = vpop.f32.mrf.mxu0
    %v2545 = vadd.f32 %v483, %v2544
    %2546 = vdwg.mxu0
    %2547 = vmatpush.msra.mxu0 %v477
    %2548 = vmatpush.msra.mxu0 %v473
    %2549 = vmatpush.msra.mxu0 %v469
    %2550 = vmatpush.msra.mxu0 %v465
    %2551 = vmatpush.msra.mxu0 %v461
    %2552 = vmatpush.msra.mxu0 %v457
    %2553 = vmatpush.msra.mxu0 %v453
    %2554 = vmatpush.msra.mxu0 %v449
    %2555 = vmatpush.msra.mxu0 %v445
    %2556 = vmatpush.msra.mxu0 %v441
    %2557 = vmatpush.msra.mxu0 %v437
    %2558 = vmatpush.msra.mxu0 %v433
    %2559 = vmatpush.msra.mxu0 %v429
    %2560 = vmatpush.msra.mxu0 %v425
    %2561 = vmatpush.msra.mxu0 %v421
    %2562 = vmatpush.msra.mxu0 %v417
    %2563 = vmatmul.f32.gmra.mxu0 %v2339
    %v2564 = vpop.f32.mrf.mxu0
    %v2565 = vadd.f32 %v2545, %v2564
    %2566 = vdwg.mxu0
    %2567 = vmatpush.msra.mxu0 %v414
    %2568 = vmatpush.msra.mxu0 %v410
    %2569 = vmatpush.msra.mxu0 %v406
    %2570 = vmatpush.msra.mxu0 %v402
    %2571 = vmatpush.msra.mxu0 %v398
    %2572 = vmatpush.msra.mxu0 %v394
    %2573 = vmatpush.msra.mxu0 %v390
    %2574 = vmatpush.msra.mxu0 %v386
    %2575 = vmatpush.msra.mxu0 %v382
    %2576 = vmatpush.msra.mxu0 %v378
    %2577 = vmatpush.msra.mxu0 %v374
    %2578 = vmatpush.msra.mxu0 %v370
    %2579 = vmatpush.msra.mxu0 %v366
    %2580 = vmatpush.msra.mxu0 %v362
    %2581 = vmatpush.msra.mxu0 %v358
    %2582 = vmatpush.msra.mxu0 %v354
    %2583 = vmatmul.f32.gmra.mxu0 %v2486
    %v2584 = vpop.f32.mrf.mxu0
    %v2585 = vadd.f32 %v484, %v2584
    %2586 = vdwg.mxu0
    %2587 = vmatpush.msra.mxu0 %v478
    %2588 = vmatpush.msra.mxu0 %v474
    %2589 = vmatpush.msra.mxu0 %v470
    %2590 = vmatpush.msra.mxu0 %v466
    %2591 = vmatpush.msra.mxu0 %v462
    %2592 = vmatpush.msra.mxu0 %v458
    %2593 = vmatpush.msra.mxu0 %v454
    %2594 = vmatpush.msra.mxu0 %v450
    %2595 = vmatpush.msra.mxu0 %v446
    %2596 = vmatpush.msra.mxu0 %v442
    %2597 = vmatpush.msra.mxu0 %v438
    %2598 = vmatpush.msra.mxu0 %v434
    %2599 = vmatpush.msra.mxu0 %v430
    %2600 = vmatpush.msra.mxu0 %v426
    %2601 = vmatpush.msra.mxu0 %v422
    %2602 = vmatpush.msra.mxu0 %v418
    %2603 = vmatmul.f32.gmra.mxu0 %v2339
    %v2604 = vpop.f32.mrf.mxu0
    %v2605 = vadd.f32 %v2585, %v2604
    %2606 = vdwg.mxu0
    %2607 = vmatpush.msra.mxu0 %v415
    %2608 = vmatpush.msra.mxu0 %v411
    %2609 = vmatpush.msra.mxu0 %v407
    %2610 = vmatpush.msra.mxu0 %v403
    %2611 = vmatpush.msra.mxu0 %v399
    %2612 = vmatpush.msra.mxu0 %v395
    %2613 = vmatpush.msra.mxu0 %v391
    %2614 = vmatpush.msra.mxu0 %v387
    %2615 = vmatpush.msra.mxu0 %v383
    %2616 = vmatpush.msra.mxu0 %v379
    %2617 = vmatpush.msra.mxu0 %v375
    %2618 = vmatpush.msra.mxu0 %v371
    %2619 = vmatpush.msra.mxu0 %v367
    %2620 = vmatpush.msra.mxu0 %v363
    %2621 = vmatpush.msra.mxu0 %v359
    %2622 = vmatpush.msra.mxu0 %v355
    %2623 = vmatmul.f32.gmra.mxu0 %v2486
    %v2624 = vpop.f32.mrf.mxu0
    %v2625 = vadd.f32 %v485, %v2624
    %2626 = vdwg.mxu0
    %2627 = vmatpush.msra.mxu0 %v479
    %2628 = vmatpush.msra.mxu0 %v475
    %2629 = vmatpush.msra.mxu0 %v471
    %2630 = vmatpush.msra.mxu0 %v467
    %2631 = vmatpush.msra.mxu0 %v463
    %2632 = vmatpush.msra.mxu0 %v459
    %2633 = vmatpush.msra.mxu0 %v455
    %2634 = vmatpush.msra.mxu0 %v451
    %2635 = vmatpush.msra.mxu0 %v447
    %2636 = vmatpush.msra.mxu0 %v443
    %2637 = vmatpush.msra.mxu0 %v439
    %2638 = vmatpush.msra.mxu0 %v435
    %2639 = vmatpush.msra.mxu0 %v431
    %2640 = vmatpush.msra.mxu0 %v427
    %2641 = vmatpush.msra.mxu0 %v423
    %2642 = vmatpush.msra.mxu0 %v419
    %2643 = vmatmul.f32.gmra.mxu0 %v2339
    %v2644 = vpop.f32.mrf.mxu0
    %v2645 = vadd.f32 %v2625, %v2644
    %2646 = vdwg.mxu0
    %v2647 = vxor.u32 %v2525, 2147483648
    %v2648 = vmul.f32 %v2647, 1.442695
    %v2649 = vpow.pop %v2648
    %v2650 = vadd.f32 %v2649, 1.0
    %v2651 = vrcp.pop %v2650
    %v2652 = vmul.f32 %v2650, %v2651
    %v2653 = vsub.f32 1.0, %v2652
    %v2654 = vmul.f32 %v2651, %v2653
    %v2655 = vadd.f32 %v2651, %v2654
    %vm2656 = vweird.f32 %v2650
    %vm2657 = vweird.f32 %v2651
    %vm2658 = vmor %vm2656, %vm2657
    %v2659 = vsel %vm2658, %v2651, %v2655
    %v2660 = vand.u32 2147483647, %v2650
    %vm2661 = vcmp.eq.f32.partialorder %v2660, 8.507059e+37
    %v2662 = vand.u32 %v2650, 2147483648
    %v2663 = vor.u32 1.1754944e-38, %v2662
    %v2664 = vsel %vm2661, %v2663, %v2659
    %v2665 = vmul.f32 1.0, %v2664
    %v2666 = vxor.u32 %v2565, 2147483648
    %v2667 = vmul.f32 %v2666, 1.442695
    %v2668 = vpow.pop %v2667
    %v2669 = vadd.f32 %v2668, 1.0
    %v2670 = vrcp.pop %v2669
    %v2671 = vmul.f32 %v2669, %v2670
    %v2672 = vsub.f32 1.0, %v2671
    %v2673 = vmul.f32 %v2670, %v2672
    %v2674 = vadd.f32 %v2670, %v2673
    %vm2675 = vweird.f32 %v2669
    %vm2676 = vweird.f32 %v2670
    %vm2677 = vmor %vm2675, %vm2676
    %v2678 = vsel %vm2677, %v2670, %v2674
    %v2679 = vand.u32 2147483647, %v2669
    %vm2680 = vcmp.eq.f32.partialorder %v2679, 8.507059e+37
    %v2681 = vand.u32 %v2669, 2147483648
    %v2682 = vor.u32 1.1754944e-38, %v2681
    %v2683 = vsel %vm2680, %v2682, %v2678
    %v2684 = vmul.f32 1.0, %v2683
    %v2685 = vtanh.pop %v2605
    %v2686 = vxor.u32 %v2645, 2147483648
    %v2687 = vmul.f32 %v2686, 1.442695
    %v2688 = vpow.pop %v2687
    %v2689 = vadd.f32 %v2688, 1.0
    %v2690 = vrcp.pop %v2689
    %v2691 = vmul.f32 %v2689, %v2690
    %v2692 = vsub.f32 1.0, %v2691
    %v2693 = vmul.f32 %v2690, %v2692
    %v2694 = vadd.f32 %v2690, %v2693
    %vm2695 = vweird.f32 %v2689
    %vm2696 = vweird.f32 %v2690
    %vm2697 = vmor %vm2695, %vm2696
    %v2698 = vsel %vm2697, %v2690, %v2694
    %v2699 = vand.u32 2147483647, %v2689
    %vm2700 = vcmp.eq.f32.partialorder %v2699, 8.507059e+37
    %v2701 = vand.u32 %v2689, 2147483648
    %v2702 = vor.u32 1.1754944e-38, %v2701
    %v2703 = vsel %vm2700, %v2702, %v2698
    %v2704 = vmul.f32 1.0, %v2703
    %v2705 = vmul.f32 %v2684, %v2337
    %v2706 = vmul.f32 %v2665, %v2685
    %v2707 = vadd.f32 %v2705, %v2706
    %v2708 = vtanh.pop %v2707
    %v2709 = vmul.f32 %v2704, %v2708
    %2710 = vmatpush.msra.mxu0 %v348
    %2711 = vmatpush.msra.mxu0 %v344
    %2712 = vmatpush.msra.mxu0 %v340
    %2713 = vmatpush.msra.mxu0 %v336
    %2714 = vmatpush.msra.mxu0 %v332
    %2715 = vmatpush.msra.mxu0 %v328
    %2716 = vmatpush.msra.mxu0 %v324
    %2717 = vmatpush.msra.mxu0 %v320
    %2718 = vmatpush.msra.mxu0 %v316
    %2719 = vmatpush.msra.mxu0 %v312
    %2720 = vmatpush.msra.mxu0 %v308
    %2721 = vmatpush.msra.mxu0 %v304
    %2722 = vmatpush.msra.mxu0 %v300
    %2723 = vmatpush.msra.mxu0 %v296
    %2724 = vmatpush.msra.mxu0 %v292
    %2725 = vmatpush.msra.mxu0 %v288
    %2726 = vmatmul.f32.gmra.mxu0 %v2486
    %v2727 = vpop.f32.mrf.mxu0
    %v2728 = vadd.f32 0.0, %v2727
    %2729 = vdwg.mxu0
    %2730 = vmatpush.msra.mxu0 %v349
    %2731 = vmatpush.msra.mxu0 %v345
    %2732 = vmatpush.msra.mxu0 %v341
    %2733 = vmatpush.msra.mxu0 %v337
    %2734 = vmatpush.msra.mxu0 %v333
    %2735 = vmatpush.msra.mxu0 %v329
    %2736 = vmatpush.msra.mxu0 %v325
    %2737 = vmatpush.msra.mxu0 %v321
    %2738 = vmatpush.msra.mxu0 %v317
    %2739 = vmatpush.msra.mxu0 %v313
    %2740 = vmatpush.msra.mxu0 %v309
    %2741 = vmatpush.msra.mxu0 %v305
    %2742 = vmatpush.msra.mxu0 %v301
    %2743 = vmatpush.msra.mxu0 %v297
    %2744 = vmatpush.msra.mxu0 %v293
    %2745 = vmatpush.msra.mxu0 %v289
    %2746 = vmatmul.f32.gmra.mxu0 %v2486
    %v2747 = vpop.f32.mrf.mxu0
    %v2748 = vadd.f32 0.0, %v2747
    %2749 = vdwg.mxu0
    %2750 = vmatpush.msra.mxu0 %v350
    %2751 = vmatpush.msra.mxu0 %v346
    %2752 = vmatpush.msra.mxu0 %v342
    %2753 = vmatpush.msra.mxu0 %v338
    %2754 = vmatpush.msra.mxu0 %v334
    %2755 = vmatpush.msra.mxu0 %v330
    %2756 = vmatpush.msra.mxu0 %v326
    %2757 = vmatpush.msra.mxu0 %v322
    %2758 = vmatpush.msra.mxu0 %v318
    %2759 = vmatpush.msra.mxu0 %v314
    %2760 = vmatpush.msra.mxu0 %v310
    %2761 = vmatpush.msra.mxu0 %v306
    %2762 = vmatpush.msra.mxu0 %v302
    %2763 = vmatpush.msra.mxu0 %v298
    %2764 = vmatpush.msra.mxu0 %v294
    %2765 = vmatpush.msra.mxu0 %v290
    %2766 = vmatmul.f32.gmra.mxu0 %v2486
    %v2767 = vpop.f32.mrf.mxu0
    %v2768 = vadd.f32 0.0, %v2767
    %2769 = vdwg.mxu0
    %2770 = vmatpush.msra.mxu0 %v351
    %2771 = vmatpush.msra.mxu0 %v347
    %2772 = vmatpush.msra.mxu0 %v343
    %2773 = vmatpush.msra.mxu0 %v339
    %2774 = vmatpush.msra.mxu0 %v335
    %2775 = vmatpush.msra.mxu0 %v331
    %2776 = vmatpush.msra.mxu0 %v327
    %2777 = vmatpush.msra.mxu0 %v323
    %2778 = vmatpush.msra.mxu0 %v319
    %2779 = vmatpush.msra.mxu0 %v315
    %2780 = vmatpush.msra.mxu0 %v311
    %2781 = vmatpush.msra.mxu0 %v307
    %2782 = vmatpush.msra.mxu0 %v303
    %2783 = vmatpush.msra.mxu0 %v299
    %2784 = vmatpush.msra.mxu0 %v295
    %2785 = vmatpush.msra.mxu0 %v291
    %2786 = vmatmul.f32.gmra.mxu0 %v2486
    %v2787 = vpop.f32.mrf.mxu0
    %v2788 = vadd.f32 0.0, %v2787
    %2789 = vdwg.mxu0
    %v2790 = vadd.f32 %v160, %v2728
    %v2791 = vadd.f32 %v201, %v2748
    %v2792 = vadd.f32 %v242, %v2768
    %v2793 = vadd.f32 %v283, %v2788
    %v2794 = vxor.u32 %v2790, 2147483648
    %v2795 = vmul.f32 %v2794, 1.442695
    %v2796 = vpow.pop %v2795
    %v2797 = vadd.f32 %v2796, 1.0
    %v2798 = vrcp.pop %v2797
    %v2799 = vmul.f32 %v2797, %v2798
    %v2800 = vsub.f32 1.0, %v2799
    %v2801 = vmul.f32 %v2798, %v2800
    %v2802 = vadd.f32 %v2798, %v2801
    %vm2803 = vweird.f32 %v2797
    %vm2804 = vweird.f32 %v2798
    %vm2805 = vmor %vm2803, %vm2804
    %v2806 = vsel %vm2805, %v2798, %v2802
    %v2807 = vand.u32 2147483647, %v2797
    %vm2808 = vcmp.eq.f32.partialorder %v2807, 8.507059e+37
    %v2809 = vand.u32 %v2797, 2147483648
    %v2810 = vor.u32 1.1754944e-38, %v2809
    %v2811 = vsel %vm2808, %v2810, %v2806
    %v2812 = vmul.f32 1.0, %v2811
    %v2813 = vxor.u32 %v2791, 2147483648
    %v2814 = vmul.f32 %v2813, 1.442695
    %v2815 = vpow.pop %v2814
    %v2816 = vadd.f32 %v2815, 1.0
    %v2817 = vrcp.pop %v2816
    %v2818 = vmul.f32 %v2816, %v2817
    %v2819 = vsub.f32 1.0, %v2818
    %v2820 = vmul.f32 %v2817, %v2819
    %v2821 = vadd.f32 %v2817, %v2820
    %vm2822 = vweird.f32 %v2816
    %vm2823 = vweird.f32 %v2817
    %vm2824 = vmor %vm2822, %vm2823
    %v2825 = vsel %vm2824, %v2817, %v2821
    %v2826 = vand.u32 2147483647, %v2816
    %vm2827 = vcmp.eq.f32.partialorder %v2826, 8.507059e+37
    %v2828 = vand.u32 %v2816, 2147483648
    %v2829 = vor.u32 1.1754944e-38, %v2828
    %v2830 = vsel %vm2827, %v2829, %v2825
    %v2831 = vmul.f32 1.0, %v2830
    %v2832 = vtanh.pop %v2792
    %v2833 = vxor.u32 %v2793, 2147483648
    %v2834 = vmul.f32 %v2833, 1.442695
    %v2835 = vpow.pop %v2834
    %v2836 = vadd.f32 %v2835, 1.0
    %v2837 = vrcp.pop %v2836
    %v2838 = vmul.f32 %v2836, %v2837
    %v2839 = vsub.f32 1.0, %v2838
    %v2840 = vmul.f32 %v2837, %v2839
    %v2841 = vadd.f32 %v2837, %v2840
    %vm2842 = vweird.f32 %v2836
    %vm2843 = vweird.f32 %v2837
    %vm2844 = vmor %vm2842, %vm2843
    %v2845 = vsel %vm2844, %v2837, %v2841
    %v2846 = vand.u32 2147483647, %v2836
    %vm2847 = vcmp.eq.f32.partialorder %v2846, 8.507059e+37
    %v2848 = vand.u32 %v2836, 2147483648
    %v2849 = vor.u32 1.1754944e-38, %v2848
    %v2850 = vsel %vm2847, %v2849, %v2845
    %v2851 = vmul.f32 1.0, %v2850
    %v2852 = vmul.f32 %v2831, %v2484
    %v2853 = vmul.f32 %v2812, %v2832
    %v2854 = vadd.f32 %v2852, %v2853
    %v2855 = vtanh.pop %v2854
    %v2856 = vmul.f32 %v2851, %v2855
    %2857 = vmatpush.msra.mxu0 %v412
    %2858 = vmatpush.msra.mxu0 %v408
    %2859 = vmatpush.msra.mxu0 %v404
    %2860 = vmatpush.msra.mxu0 %v400
    %2861 = vmatpush.msra.mxu0 %v396
    %2862 = vmatpush.msra.mxu0 %v392
    %2863 = vmatpush.msra.mxu0 %v388
    %2864 = vmatpush.msra.mxu0 %v384
    %2865 = vmatpush.msra.mxu0 %v380
    %2866 = vmatpush.msra.mxu0 %v376
    %2867 = vmatpush.msra.mxu0 %v372
    %2868 = vmatpush.msra.mxu0 %v368
    %2869 = vmatpush.msra.mxu0 %v364
    %2870 = vmatpush.msra.mxu0 %v360
    %2871 = vmatpush.msra.mxu0 %v356
    %2872 = vmatpush.msra.mxu0 %v352
    %2873 = vmatmul.f32.gmra.mxu0 %v2856
    %v2874 = vpop.f32.mrf.mxu0
    %v2875 = vadd.f32 %v482, %v2874
    %2876 = vdwg.mxu0
    %2877 = vmatpush.msra.mxu0 %v476
    %2878 = vmatpush.msra.mxu0 %v472
    %2879 = vmatpush.msra.mxu0 %v468
    %2880 = vmatpush.msra.mxu0 %v464
    %2881 = vmatpush.msra.mxu0 %v460
    %2882 = vmatpush.msra.mxu0 %v456
    %2883 = vmatpush.msra.mxu0 %v452
    %2884 = vmatpush.msra.mxu0 %v448
    %2885 = vmatpush.msra.mxu0 %v444
    %2886 = vmatpush.msra.mxu0 %v440
    %2887 = vmatpush.msra.mxu0 %v436
    %2888 = vmatpush.msra.mxu0 %v432
    %2889 = vmatpush.msra.mxu0 %v428
    %2890 = vmatpush.msra.mxu0 %v424
    %2891 = vmatpush.msra.mxu0 %v420
    %2892 = vmatpush.msra.mxu0 %v416
    %2893 = vmatmul.f32.gmra.mxu0 %v2709
    %v2894 = vpop.f32.mrf.mxu0
    %v2895 = vadd.f32 %v2875, %v2894
    %2896 = vdwg.mxu0
    %2897 = vmatpush.msra.mxu0 %v413
    %2898 = vmatpush.msra.mxu0 %v409
    %2899 = vmatpush.msra.mxu0 %v405
    %2900 = vmatpush.msra.mxu0 %v401
    %2901 = vmatpush.msra.mxu0 %v397
    %2902 = vmatpush.msra.mxu0 %v393
    %2903 = vmatpush.msra.mxu0 %v389
    %2904 = vmatpush.msra.mxu0 %v385
    %2905 = vmatpush.msra.mxu0 %v381
    %2906 = vmatpush.msra.mxu0 %v377
    %2907 = vmatpush.msra.mxu0 %v373
    %2908 = vmatpush.msra.mxu0 %v369
    %2909 = vmatpush.msra.mxu0 %v365
    %2910 = vmatpush.msra.mxu0 %v361
    %2911 = vmatpush.msra.mxu0 %v357
    %2912 = vmatpush.msra.mxu0 %v353
    %2913 = vmatmul.f32.gmra.mxu0 %v2856
    %v2914 = vpop.f32.mrf.mxu0
    %v2915 = vadd.f32 %v483, %v2914
    %2916 = vdwg.mxu0
    %2917 = vmatpush.msra.mxu0 %v477
    %2918 = vmatpush.msra.mxu0 %v473
    %2919 = vmatpush.msra.mxu0 %v469
    %2920 = vmatpush.msra.mxu0 %v465
    %2921 = vmatpush.msra.mxu0 %v461
    %2922 = vmatpush.msra.mxu0 %v457
    %2923 = vmatpush.msra.mxu0 %v453
    %2924 = vmatpush.msra.mxu0 %v449
    %2925 = vmatpush.msra.mxu0 %v445
    %2926 = vmatpush.msra.mxu0 %v441
    %2927 = vmatpush.msra.mxu0 %v437
    %2928 = vmatpush.msra.mxu0 %v433
    %2929 = vmatpush.msra.mxu0 %v429
    %2930 = vmatpush.msra.mxu0 %v425
    %2931 = vmatpush.msra.mxu0 %v421
    %2932 = vmatpush.msra.mxu0 %v417
    %2933 = vmatmul.f32.gmra.mxu0 %v2709
    %v2934 = vpop.f32.mrf.mxu0
    %v2935 = vadd.f32 %v2915, %v2934
    %2936 = vdwg.mxu0
    %2937 = vmatpush.msra.mxu0 %v414
    %2938 = vmatpush.msra.mxu0 %v410
    %2939 = vmatpush.msra.mxu0 %v406
    %2940 = vmatpush.msra.mxu0 %v402
    %2941 = vmatpush.msra.mxu0 %v398
    %2942 = vmatpush.msra.mxu0 %v394
    %2943 = vmatpush.msra.mxu0 %v390
    %2944 = vmatpush.msra.mxu0 %v386
    %2945 = vmatpush.msra.mxu0 %v382
    %2946 = vmatpush.msra.mxu0 %v378
    %2947 = vmatpush.msra.mxu0 %v374
    %2948 = vmatpush.msra.mxu0 %v370
    %2949 = vmatpush.msra.mxu0 %v366
    %2950 = vmatpush.msra.mxu0 %v362
    %2951 = vmatpush.msra.mxu0 %v358
    %2952 = vmatpush.msra.mxu0 %v354
    %2953 = vmatmul.f32.gmra.mxu0 %v2856
    %v2954 = vpop.f32.mrf.mxu0
    %v2955 = vadd.f32 %v484, %v2954
    %2956 = vdwg.mxu0
    %2957 = vmatpush.msra.mxu0 %v478
    %2958 = vmatpush.msra.mxu0 %v474
    %2959 = vmatpush.msra.mxu0 %v470
    %2960 = vmatpush.msra.mxu0 %v466
    %2961 = vmatpush.msra.mxu0 %v462
    %2962 = vmatpush.msra.mxu0 %v458
    %2963 = vmatpush.msra.mxu0 %v454
    %2964 = vmatpush.msra.mxu0 %v450
    %2965 = vmatpush.msra.mxu0 %v446
    %2966 = vmatpush.msra.mxu0 %v442
    %2967 = vmatpush.msra.mxu0 %v438
    %2968 = vmatpush.msra.mxu0 %v434
    %2969 = vmatpush.msra.mxu0 %v430
    %2970 = vmatpush.msra.mxu0 %v426
    %2971 = vmatpush.msra.mxu0 %v422
    %2972 = vmatpush.msra.mxu0 %v418
    %2973 = vmatmul.f32.gmra.mxu0 %v2709
    %v2974 = vpop.f32.mrf.mxu0
    %v2975 = vadd.f32 %v2955, %v2974
    %2976 = vdwg.mxu0
    %2977 = vmatpush.msra.mxu0 %v415
    %2978 = vmatpush.msra.mxu0 %v411
    %2979 = vmatpush.msra.mxu0 %v407
    %2980 = vmatpush.msra.mxu0 %v403
    %2981 = vmatpush.msra.mxu0 %v399
    %2982 = vmatpush.msra.mxu0 %v395
    %2983 = vmatpush.msra.mxu0 %v391
    %2984 = vmatpush.msra.mxu0 %v387
    %2985 = vmatpush.msra.mxu0 %v383
    %2986 = vmatpush.msra.mxu0 %v379
    %2987 = vmatpush.msra.mxu0 %v375
    %2988 = vmatpush.msra.mxu0 %v371
    %2989 = vmatpush.msra.mxu0 %v367
    %2990 = vmatpush.msra.mxu0 %v363
    %2991 = vmatpush.msra.mxu0 %v359
    %2992 = vmatpush.msra.mxu0 %v355
    %2993 = vmatmul.f32.gmra.mxu0 %v2856
    %v2994 = vpop.f32.mrf.mxu0
    %v2995 = vadd.f32 %v485, %v2994
    %2996 = vdwg.mxu0
    %2997 = vmatpush.msra.mxu0 %v479
    %2998 = vmatpush.msra.mxu0 %v475
    %2999 = vmatpush.msra.mxu0 %v471
    %3000 = vmatpush.msra.mxu0 %v467
    %3001 = vmatpush.msra.mxu0 %v463
    %3002 = vmatpush.msra.mxu0 %v459
    %3003 = vmatpush.msra.mxu0 %v455
    %3004 = vmatpush.msra.mxu0 %v451
    %3005 = vmatpush.msra.mxu0 %v447
    %3006 = vmatpush.msra.mxu0 %v443
    %3007 = vmatpush.msra.mxu0 %v439
    %3008 = vmatpush.msra.mxu0 %v435
    %3009 = vmatpush.msra.mxu0 %v431
    %3010 = vmatpush.msra.mxu0 %v427
    %3011 = vmatpush.msra.mxu0 %v423
    %3012 = vmatpush.msra.mxu0 %v419
    %3013 = vmatmul.f32.gmra.mxu0 %v2709
    %v3014 = vpop.f32.mrf.mxu0
    %v3015 = vadd.f32 %v2995, %v3014
    %3016 = vdwg.mxu0
    %v3017 = vxor.u32 %v2895, 2147483648
    %v3018 = vmul.f32 %v3017, 1.442695
    %v3019 = vpow.pop %v3018
    %v3020 = vadd.f32 %v3019, 1.0
    %v3021 = vrcp.pop %v3020
    %v3022 = vmul.f32 %v3020, %v3021
    %v3023 = vsub.f32 1.0, %v3022
    %v3024 = vmul.f32 %v3021, %v3023
    %v3025 = vadd.f32 %v3021, %v3024
    %vm3026 = vweird.f32 %v3020
    %vm3027 = vweird.f32 %v3021
    %vm3028 = vmor %vm3026, %vm3027
    %v3029 = vsel %vm3028, %v3021, %v3025
    %v3030 = vand.u32 2147483647, %v3020
    %vm3031 = vcmp.eq.f32.partialorder %v3030, 8.507059e+37
    %v3032 = vand.u32 %v3020, 2147483648
    %v3033 = vor.u32 1.1754944e-38, %v3032
    %v3034 = vsel %vm3031, %v3033, %v3029
    %v3035 = vmul.f32 1.0, %v3034
    %v3036 = vxor.u32 %v2935, 2147483648
    %v3037 = vmul.f32 %v3036, 1.442695
    %v3038 = vpow.pop %v3037
    %v3039 = vadd.f32 %v3038, 1.0
    %v3040 = vrcp.pop %v3039
    %v3041 = vmul.f32 %v3039, %v3040
    %v3042 = vsub.f32 1.0, %v3041
    %v3043 = vmul.f32 %v3040, %v3042
    %v3044 = vadd.f32 %v3040, %v3043
    %vm3045 = vweird.f32 %v3039
    %vm3046 = vweird.f32 %v3040
    %vm3047 = vmor %vm3045, %vm3046
    %v3048 = vsel %vm3047, %v3040, %v3044
    %v3049 = vand.u32 2147483647, %v3039
    %vm3050 = vcmp.eq.f32.partialorder %v3049, 8.507059e+37
    %v3051 = vand.u32 %v3039, 2147483648
    %v3052 = vor.u32 1.1754944e-38, %v3051
    %v3053 = vsel %vm3050, %v3052, %v3048
    %v3054 = vmul.f32 1.0, %v3053
    %v3055 = vtanh.pop %v2975
    %v3056 = vxor.u32 %v3015, 2147483648
    %v3057 = vmul.f32 %v3056, 1.442695
    %v3058 = vpow.pop %v3057
    %v3059 = vadd.f32 %v3058, 1.0
    %v3060 = vrcp.pop %v3059
    %v3061 = vmul.f32 %v3059, %v3060
    %v3062 = vsub.f32 1.0, %v3061
    %v3063 = vmul.f32 %v3060, %v3062
    %v3064 = vadd.f32 %v3060, %v3063
    %vm3065 = vweird.f32 %v3059
    %vm3066 = vweird.f32 %v3060
    %vm3067 = vmor %vm3065, %vm3066
    %v3068 = vsel %vm3067, %v3060, %v3064
    %v3069 = vand.u32 2147483647, %v3059
    %vm3070 = vcmp.eq.f32.partialorder %v3069, 8.507059e+37
    %v3071 = vand.u32 %v3059, 2147483648
    %v3072 = vor.u32 1.1754944e-38, %v3071
    %v3073 = vsel %vm3070, %v3072, %v3068
    %v3074 = vmul.f32 1.0, %v3073
    %v3075 = vmul.f32 %v3054, %v2707
    %v3076 = vmul.f32 %v3035, %v3055
    %v3077 = vadd.f32 %v3075, %v3076
    %v3078 = vtanh.pop %v3077
    %v3079 = vmul.f32 %v3074, %v3078
    %3080 = vmatpush.msra.mxu0 %v348
    %3081 = vmatpush.msra.mxu0 %v344
    %3082 = vmatpush.msra.mxu0 %v340
    %3083 = vmatpush.msra.mxu0 %v336
    %3084 = vmatpush.msra.mxu0 %v332
    %3085 = vmatpush.msra.mxu0 %v328
    %3086 = vmatpush.msra.mxu0 %v324
    %3087 = vmatpush.msra.mxu0 %v320
    %3088 = vmatpush.msra.mxu0 %v316
    %3089 = vmatpush.msra.mxu0 %v312
    %3090 = vmatpush.msra.mxu0 %v308
    %3091 = vmatpush.msra.mxu0 %v304
    %3092 = vmatpush.msra.mxu0 %v300
    %3093 = vmatpush.msra.mxu0 %v296
    %3094 = vmatpush.msra.mxu0 %v292
    %3095 = vmatpush.msra.mxu0 %v288
    %3096 = vmatmul.f32.gmra.mxu0 %v2856
    %v3097 = vpop.f32.mrf.mxu0
    %v3098 = vadd.f32 0.0, %v3097
    %3099 = vdwg.mxu0
    %3100 = vmatpush.msra.mxu0 %v349
    %3101 = vmatpush.msra.mxu0 %v345
    %3102 = vmatpush.msra.mxu0 %v341
    %3103 = vmatpush.msra.mxu0 %v337
    %3104 = vmatpush.msra.mxu0 %v333
    %3105 = vmatpush.msra.mxu0 %v329
    %3106 = vmatpush.msra.mxu0 %v325
    %3107 = vmatpush.msra.mxu0 %v321
    %3108 = vmatpush.msra.mxu0 %v317
    %3109 = vmatpush.msra.mxu0 %v313
    %3110 = vmatpush.msra.mxu0 %v309
    %3111 = vmatpush.msra.mxu0 %v305
    %3112 = vmatpush.msra.mxu0 %v301
    %3113 = vmatpush.msra.mxu0 %v297
    %3114 = vmatpush.msra.mxu0 %v293
    %3115 = vmatpush.msra.mxu0 %v289
    %3116 = vmatmul.f32.gmra.mxu0 %v2856
    %v3117 = vpop.f32.mrf.mxu0
    %v3118 = vadd.f32 0.0, %v3117
    %3119 = vdwg.mxu0
    %3120 = vmatpush.msra.mxu0 %v350
    %3121 = vmatpush.msra.mxu0 %v346
    %3122 = vmatpush.msra.mxu0 %v342
    %3123 = vmatpush.msra.mxu0 %v338
    %3124 = vmatpush.msra.mxu0 %v334
    %3125 = vmatpush.msra.mxu0 %v330
    %3126 = vmatpush.msra.mxu0 %v326
    %3127 = vmatpush.msra.mxu0 %v322
    %3128 = vmatpush.msra.mxu0 %v318
    %3129 = vmatpush.msra.mxu0 %v314
    %3130 = vmatpush.msra.mxu0 %v310
    %3131 = vmatpush.msra.mxu0 %v306
    %3132 = vmatpush.msra.mxu0 %v302
    %3133 = vmatpush.msra.mxu0 %v298
    %3134 = vmatpush.msra.mxu0 %v294
    %3135 = vmatpush.msra.mxu0 %v290
    %3136 = vmatmul.f32.gmra.mxu0 %v2856
    %v3137 = vpop.f32.mrf.mxu0
    %v3138 = vadd.f32 0.0, %v3137
    %3139 = vdwg.mxu0
    %3140 = vmatpush.msra.mxu0 %v351
    %3141 = vmatpush.msra.mxu0 %v347
    %3142 = vmatpush.msra.mxu0 %v343
    %3143 = vmatpush.msra.mxu0 %v339
    %3144 = vmatpush.msra.mxu0 %v335
    %3145 = vmatpush.msra.mxu0 %v331
    %3146 = vmatpush.msra.mxu0 %v327
    %3147 = vmatpush.msra.mxu0 %v323
    %3148 = vmatpush.msra.mxu0 %v319
    %3149 = vmatpush.msra.mxu0 %v315
    %3150 = vmatpush.msra.mxu0 %v311
    %3151 = vmatpush.msra.mxu0 %v307
    %3152 = vmatpush.msra.mxu0 %v303
    %3153 = vmatpush.msra.mxu0 %v299
    %3154 = vmatpush.msra.mxu0 %v295
    %3155 = vmatpush.msra.mxu0 %v291
    %3156 = vmatmul.f32.gmra.mxu0 %v2856
    %v3157 = vpop.f32.mrf.mxu0
    %v3158 = vadd.f32 0.0, %v3157
    %3159 = vdwg.mxu0
    %v3160 = vadd.f32 %v163, %v3098
    %v3161 = vadd.f32 %v204, %v3118
    %v3162 = vadd.f32 %v245, %v3138
    %v3163 = vadd.f32 %v286, %v3158
    %v3164 = vxor.u32 %v3160, 2147483648
    %v3165 = vmul.f32 %v3164, 1.442695
    %v3166 = vpow.pop %v3165
    %v3167 = vadd.f32 %v3166, 1.0
    %v3168 = vrcp.pop %v3167
    %v3169 = vmul.f32 %v3167, %v3168
    %v3170 = vsub.f32 1.0, %v3169
    %v3171 = vmul.f32 %v3168, %v3170
    %v3172 = vadd.f32 %v3168, %v3171
    %vm3173 = vweird.f32 %v3167
    %vm3174 = vweird.f32 %v3168
    %vm3175 = vmor %vm3173, %vm3174
    %v3176 = vsel %vm3175, %v3168, %v3172
    %v3177 = vand.u32 2147483647, %v3167
    %vm3178 = vcmp.eq.f32.partialorder %v3177, 8.507059e+37
    %v3179 = vand.u32 %v3167, 2147483648
    %v3180 = vor.u32 1.1754944e-38, %v3179
    %v3181 = vsel %vm3178, %v3180, %v3176
    %v3182 = vmul.f32 1.0, %v3181
    %v3183 = vxor.u32 %v3161, 2147483648
    %v3184 = vmul.f32 %v3183, 1.442695
    %v3185 = vpow.pop %v3184
    %v3186 = vadd.f32 %v3185, 1.0
    %v3187 = vrcp.pop %v3186
    %v3188 = vmul.f32 %v3186, %v3187
    %v3189 = vsub.f32 1.0, %v3188
    %v3190 = vmul.f32 %v3187, %v3189
    %v3191 = vadd.f32 %v3187, %v3190
    %vm3192 = vweird.f32 %v3186
    %vm3193 = vweird.f32 %v3187
    %vm3194 = vmor %vm3192, %vm3193
    %v3195 = vsel %vm3194, %v3187, %v3191
    %v3196 = vand.u32 2147483647, %v3186
    %vm3197 = vcmp.eq.f32.partialorder %v3196, 8.507059e+37
    %v3198 = vand.u32 %v3186, 2147483648
    %v3199 = vor.u32 1.1754944e-38, %v3198
    %v3200 = vsel %vm3197, %v3199, %v3195
    %v3201 = vmul.f32 1.0, %v3200
    %v3202 = vtanh.pop %v3162
    %v3203 = vxor.u32 %v3163, 2147483648
    %v3204 = vmul.f32 %v3203, 1.442695
    %v3205 = vpow.pop %v3204
    %v3206 = vadd.f32 %v3205, 1.0
    %v3207 = vrcp.pop %v3206
    %v3208 = vmul.f32 %v3206, %v3207
    %v3209 = vsub.f32 1.0, %v3208
    %v3210 = vmul.f32 %v3207, %v3209
    %v3211 = vadd.f32 %v3207, %v3210
    %vm3212 = vweird.f32 %v3206
    %vm3213 = vweird.f32 %v3207
    %vm3214 = vmor %vm3212, %vm3213
    %v3215 = vsel %vm3214, %v3207, %v3211
    %v3216 = vand.u32 2147483647, %v3206
    %vm3217 = vcmp.eq.f32.partialorder %v3216, 8.507059e+37
    %v3218 = vand.u32 %v3206, 2147483648
    %v3219 = vor.u32 1.1754944e-38, %v3218
    %v3220 = vsel %vm3217, %v3219, %v3215
    %v3221 = vmul.f32 1.0, %v3220
    %v3222 = vmul.f32 %v3201, %v2854
    %v3223 = vmul.f32 %v3182, %v3202
    %v3224 = vadd.f32 %v3222, %v3223
    %v3225 = vtanh.pop %v3224
    %v3226 = vmul.f32 %v3221, %v3225
    %3227 = vmatpush.msra.mxu0 %v412
    %3228 = vmatpush.msra.mxu0 %v408
    %3229 = vmatpush.msra.mxu0 %v404
    %3230 = vmatpush.msra.mxu0 %v400
    %3231 = vmatpush.msra.mxu0 %v396
    %3232 = vmatpush.msra.mxu0 %v392
    %3233 = vmatpush.msra.mxu0 %v388
    %3234 = vmatpush.msra.mxu0 %v384
    %3235 = vmatpush.msra.mxu0 %v380
    %3236 = vmatpush.msra.mxu0 %v376
    %3237 = vmatpush.msra.mxu0 %v372
    %3238 = vmatpush.msra.mxu0 %v368
    %3239 = vmatpush.msra.mxu0 %v364
    %3240 = vmatpush.msra.mxu0 %v360
    %3241 = vmatpush.msra.mxu0 %v356
    %3242 = vmatpush.msra.mxu0 %v352
    %3243 = vmatmul.f32.gmra.mxu0 %v3226
    %v3244 = vpop.f32.mrf.mxu0
    %v3245 = vadd.f32 %v482, %v3244
    %3246 = vdwg.mxu0
    %3247 = vmatpush.msra.mxu0 %v476
    %3248 = vmatpush.msra.mxu0 %v472
    %3249 = vmatpush.msra.mxu0 %v468
    %3250 = vmatpush.msra.mxu0 %v464
    %3251 = vmatpush.msra.mxu0 %v460
    %3252 = vmatpush.msra.mxu0 %v456
    %3253 = vmatpush.msra.mxu0 %v452
    %3254 = vmatpush.msra.mxu0 %v448
    %3255 = vmatpush.msra.mxu0 %v444
    %3256 = vmatpush.msra.mxu0 %v440
    %3257 = vmatpush.msra.mxu0 %v436
    %3258 = vmatpush.msra.mxu0 %v432
    %3259 = vmatpush.msra.mxu0 %v428
    %3260 = vmatpush.msra.mxu0 %v424
    %3261 = vmatpush.msra.mxu0 %v420
    %3262 = vmatpush.msra.mxu0 %v416
    %3263 = vmatmul.f32.gmra.mxu0 %v3079
    %v3264 = vpop.f32.mrf.mxu0
    %v3265 = vadd.f32 %v3245, %v3264
    %3266 = vdwg.mxu0
    %3267 = vmatpush.msra.mxu0 %v413
    %3268 = vmatpush.msra.mxu0 %v409
    %3269 = vmatpush.msra.mxu0 %v405
    %3270 = vmatpush.msra.mxu0 %v401
    %3271 = vmatpush.msra.mxu0 %v397
    %3272 = vmatpush.msra.mxu0 %v393
    %3273 = vmatpush.msra.mxu0 %v389
    %3274 = vmatpush.msra.mxu0 %v385
    %3275 = vmatpush.msra.mxu0 %v381
    %3276 = vmatpush.msra.mxu0 %v377
    %3277 = vmatpush.msra.mxu0 %v373
    %3278 = vmatpush.msra.mxu0 %v369
    %3279 = vmatpush.msra.mxu0 %v365
    %3280 = vmatpush.msra.mxu0 %v361
    %3281 = vmatpush.msra.mxu0 %v357
    %3282 = vmatpush.msra.mxu0 %v353
    %3283 = vmatmul.f32.gmra.mxu0 %v3226
    %v3284 = vpop.f32.mrf.mxu0
    %v3285 = vadd.f32 %v483, %v3284
    %3286 = vdwg.mxu0
    %3287 = vmatpush.msra.mxu0 %v477
    %3288 = vmatpush.msra.mxu0 %v473
    %3289 = vmatpush.msra.mxu0 %v469
    %3290 = vmatpush.msra.mxu0 %v465
    %3291 = vmatpush.msra.mxu0 %v461
    %3292 = vmatpush.msra.mxu0 %v457
    %3293 = vmatpush.msra.mxu0 %v453
    %3294 = vmatpush.msra.mxu0 %v449
    %3295 = vmatpush.msra.mxu0 %v445
    %3296 = vmatpush.msra.mxu0 %v441
    %3297 = vmatpush.msra.mxu0 %v437
    %3298 = vmatpush.msra.mxu0 %v433
    %3299 = vmatpush.msra.mxu0 %v429
    %3300 = vmatpush.msra.mxu0 %v425
    %3301 = vmatpush.msra.mxu0 %v421
    %3302 = vmatpush.msra.mxu0 %v417
    %3303 = vmatmul.f32.gmra.mxu0 %v3079
    %v3304 = vpop.f32.mrf.mxu0
    %v3305 = vadd.f32 %v3285, %v3304
    %3306 = vdwg.mxu0
    %3307 = vmatpush.msra.mxu0 %v414
    %3308 = vmatpush.msra.mxu0 %v410
    %3309 = vmatpush.msra.mxu0 %v406
    %3310 = vmatpush.msra.mxu0 %v402
    %3311 = vmatpush.msra.mxu0 %v398
    %3312 = vmatpush.msra.mxu0 %v394
    %3313 = vmatpush.msra.mxu0 %v390
    %3314 = vmatpush.msra.mxu0 %v386
    %3315 = vmatpush.msra.mxu0 %v382
    %3316 = vmatpush.msra.mxu0 %v378
    %3317 = vmatpush.msra.mxu0 %v374
    %3318 = vmatpush.msra.mxu0 %v370
    %3319 = vmatpush.msra.mxu0 %v366
    %3320 = vmatpush.msra.mxu0 %v362
    %3321 = vmatpush.msra.mxu0 %v358
    %3322 = vmatpush.msra.mxu0 %v354
    %3323 = vmatmul.f32.gmra.mxu0 %v3226
    %v3324 = vpop.f32.mrf.mxu0
    %v3325 = vadd.f32 %v484, %v3324
    %3326 = vdwg.mxu0
    %3327 = vmatpush.msra.mxu0 %v478
    %3328 = vmatpush.msra.mxu0 %v474
    %3329 = vmatpush.msra.mxu0 %v470
    %3330 = vmatpush.msra.mxu0 %v466
    %3331 = vmatpush.msra.mxu0 %v462
    %3332 = vmatpush.msra.mxu0 %v458
    %3333 = vmatpush.msra.mxu0 %v454
    %3334 = vmatpush.msra.mxu0 %v450
    %3335 = vmatpush.msra.mxu0 %v446
    %3336 = vmatpush.msra.mxu0 %v442
    %3337 = vmatpush.msra.mxu0 %v438
    %3338 = vmatpush.msra.mxu0 %v434
    %3339 = vmatpush.msra.mxu0 %v430
    %3340 = vmatpush.msra.mxu0 %v426
    %3341 = vmatpush.msra.mxu0 %v422
    %3342 = vmatpush.msra.mxu0 %v418
    %3343 = vmatmul.f32.gmra.mxu0 %v3079
    %v3344 = vpop.f32.mrf.mxu0
    %v3345 = vadd.f32 %v3325, %v3344
    %3346 = vdwg.mxu0
    %3347 = vmatpush.msra.mxu0 %v415
    %3348 = vmatpush.msra.mxu0 %v411
    %3349 = vmatpush.msra.mxu0 %v407
    %3350 = vmatpush.msra.mxu0 %v403
    %3351 = vmatpush.msra.mxu0 %v399
    %3352 = vmatpush.msra.mxu0 %v395
    %3353 = vmatpush.msra.mxu0 %v391
    %3354 = vmatpush.msra.mxu0 %v387
    %3355 = vmatpush.msra.mxu0 %v383
    %3356 = vmatpush.msra.mxu0 %v379
    %3357 = vmatpush.msra.mxu0 %v375
    %3358 = vmatpush.msra.mxu0 %v371
    %3359 = vmatpush.msra.mxu0 %v367
    %3360 = vmatpush.msra.mxu0 %v363
    %3361 = vmatpush.msra.mxu0 %v359
    %3362 = vmatpush.msra.mxu0 %v355
    %3363 = vmatmul.f32.gmra.mxu0 %v3226
    %v3364 = vpop.f32.mrf.mxu0
    %v3365 = vadd.f32 %v485, %v3364
    %3366 = vdwg.mxu0
    %3367 = vmatpush.msra.mxu0 %v479
    %3368 = vmatpush.msra.mxu0 %v475
    %3369 = vmatpush.msra.mxu0 %v471
    %3370 = vmatpush.msra.mxu0 %v467
    %3371 = vmatpush.msra.mxu0 %v463
    %3372 = vmatpush.msra.mxu0 %v459
    %3373 = vmatpush.msra.mxu0 %v455
    %3374 = vmatpush.msra.mxu0 %v451
    %3375 = vmatpush.msra.mxu0 %v447
    %3376 = vmatpush.msra.mxu0 %v443
    %3377 = vmatpush.msra.mxu0 %v439
    %3378 = vmatpush.msra.mxu0 %v435
    %3379 = vmatpush.msra.mxu0 %v431
    %3380 = vmatpush.msra.mxu0 %v427
    %3381 = vmatpush.msra.mxu0 %v423
    %3382 = vmatpush.msra.mxu0 %v419
    %3383 = vmatmul.f32.gmra.mxu0 %v3079
    %v3384 = vpop.f32.mrf.mxu0
    %v3385 = vadd.f32 %v3365, %v3384
    %3386 = vdwg.mxu0
    %v3387 = vxor.u32 %v3265, 2147483648
    %v3388 = vmul.f32 %v3387, 1.442695
    %v3389 = vpow.pop %v3388
    %v3390 = vadd.f32 %v3389, 1.0
    %v3391 = vrcp.pop %v3390
    %v3392 = vmul.f32 %v3390, %v3391
    %v3393 = vsub.f32 1.0, %v3392
    %v3394 = vmul.f32 %v3391, %v3393
    %v3395 = vadd.f32 %v3391, %v3394
    %vm3396 = vweird.f32 %v3390
    %vm3397 = vweird.f32 %v3391
    %vm3398 = vmor %vm3396, %vm3397
    %v3399 = vsel %vm3398, %v3391, %v3395
    %v3400 = vand.u32 2147483647, %v3390
    %vm3401 = vcmp.eq.f32.partialorder %v3400, 8.507059e+37
    %v3402 = vand.u32 %v3390, 2147483648
    %v3403 = vor.u32 1.1754944e-38, %v3402
    %v3404 = vsel %vm3401, %v3403, %v3399
    %v3405 = vmul.f32 1.0, %v3404
    %v3406 = vxor.u32 %v3305, 2147483648
    %v3407 = vmul.f32 %v3406, 1.442695
    %v3408 = vpow.pop %v3407
    %v3409 = vadd.f32 %v3408, 1.0
    %v3410 = vrcp.pop %v3409
    %v3411 = vmul.f32 %v3409, %v3410
    %v3412 = vsub.f32 1.0, %v3411
    %v3413 = vmul.f32 %v3410, %v3412
    %v3414 = vadd.f32 %v3410, %v3413
    %vm3415 = vweird.f32 %v3409
    %vm3416 = vweird.f32 %v3410
    %vm3417 = vmor %vm3415, %vm3416
    %v3418 = vsel %vm3417, %v3410, %v3414
    %v3419 = vand.u32 2147483647, %v3409
    %vm3420 = vcmp.eq.f32.partialorder %v3419, 8.507059e+37
    %v3421 = vand.u32 %v3409, 2147483648
    %v3422 = vor.u32 1.1754944e-38, %v3421
    %v3423 = vsel %vm3420, %v3422, %v3418
    %v3424 = vmul.f32 1.0, %v3423
    %v3425 = vtanh.pop %v3345
    %v3426 = vxor.u32 %v3385, 2147483648
    %v3427 = vmul.f32 %v3426, 1.442695
    %v3428 = vpow.pop %v3427
    %v3429 = vadd.f32 %v3428, 1.0
    %v3430 = vrcp.pop %v3429
    %v3431 = vmul.f32 %v3429, %v3430
    %v3432 = vsub.f32 1.0, %v3431
    %v3433 = vmul.f32 %v3430, %v3432
    %v3434 = vadd.f32 %v3430, %v3433
    %vm3435 = vweird.f32 %v3429
    %vm3436 = vweird.f32 %v3430
    %vm3437 = vmor %vm3435, %vm3436
    %v3438 = vsel %vm3437, %v3430, %v3434
    %v3439 = vand.u32 2147483647, %v3429
    %vm3440 = vcmp.eq.f32.partialorder %v3439, 8.507059e+37
    %v3441 = vand.u32 %v3429, 2147483648
    %v3442 = vor.u32 1.1754944e-38, %v3441
    %v3443 = vsel %vm3440, %v3442, %v3438
    %v3444 = vmul.f32 1.0, %v3443
    %v3445 = vmul.f32 %v3424, %v3077
    %v3446 = vmul.f32 %v3405, %v3425
    %v3447 = vadd.f32 %v3445, %v3446
    %v3448 = vtanh.pop %v3447
    %v3449 = vmul.f32 %v3444, %v3448
    %v3450 = vld [vmem:[#allocation7] sm:$0xff]
    %v3451 = vld [vmem:[#allocation7 + $0x8] sm:$0xff]
    %v3452 = vld [vmem:[#allocation7 + $0x10] sm:$0xff]
    %v3453 = vld [vmem:[#allocation7 + $0x18] sm:$0xff]
    %v3454 = vld [vmem:[#allocation7 + $0x20] sm:$0xff]
    %v3455 = vld [vmem:[#allocation7 + $0x28] sm:$0xff]
    %v3456 = vld [vmem:[#allocation7 + $0x30] sm:$0xff]
    %v3457 = vld [vmem:[#allocation7 + $0x38] sm:$0xff]
    %v3458 = vld [vmem:[#allocation7 + $0x40] sm:$0xff]
    %v3459 = vld [vmem:[#allocation7 + $0x48] sm:$0xff]
    %v3460 = vld [vmem:[#allocation7 + $0x50] sm:$0xff]
    %v3461 = vld [vmem:[#allocation7 + $0x58] sm:$0xff]
    %v3462 = vld [vmem:[#allocation7 + $0x60] sm:$0xff]
    %v3463 = vld [vmem:[#allocation7 + $0x68] sm:$0xff]
    %v3464 = vld [vmem:[#allocation7 + $0x70] sm:$0xff]
    %v3465 = vld [vmem:[#allocation7 + $0x78] sm:$0xff]
    %v3466 = vld [vmem:[%s7] sm:$0x1]
    %v3468 = vperm.slane %v3466, 0
    %3470 = vmatpush.msra.mxu0 %v3465
    %3471 = vmatpush.msra.mxu0 %v3464
    %3472 = vmatpush.msra.mxu0 %v3463
    %3473 = vmatpush.msra.mxu0 %v3462
    %3474 = vmatpush.msra.mxu0 %v3461
    %3475 = vmatpush.msra.mxu0 %v3460
    %3476 = vmatpush.msra.mxu0 %v3459
    %3477 = vmatpush.msra.mxu0 %v3458
    %3478 = vmatpush.msra.mxu0 %v3457
    %3479 = vmatpush.msra.mxu0 %v3456
    %3480 = vmatpush.msra.mxu0 %v3455
    %3481 = vmatpush.msra.mxu0 %v3454
    %3482 = vmatpush.msra.mxu0 %v3453
    %3483 = vmatpush.msra.mxu0 %v3452
    %3484 = vmatpush.msra.mxu0 %v3451
    %3485 = vmatpush.msra.mxu0 %v3450
    %3486 = vmatmul.f32.gmra.mxu0 %v3449
    %v3487 = vpop.f32.mrf.mxu0
    %v3488 = vadd.f32 %v3468, %v3487
    %3489 = vdwg.mxu0
    %3490 = vst [vmem:[#allocation8] sm:$0xff] %v3488
    // Predicated region
    $region46: #{tpu_custom_call.1} parent=1 // pred_check
      _
    $region47: #{tpu_custom_call.1} parent=1 // pred_check_branch
      %3492 = sbr.rel (0) target = $region49
    $region48: #{tpu_custom_call.1} parent=1 // pred_region
      %3494 = vsyncadd [#allocation4], 0
      %s3496 = sshll.u32 [#allocation8], 4
      %s3497 = int_to_ptr.vmem [resolvable:$true] %s3496
      %s3498 = sshll.u32 %s8, 4
      %s3499 = int_to_ptr.hbm [resolvable:$true] %s3498
      %3501 = dma.vmem_to_hbm [thread:$0]  %s3497, 128, %s3499, [#allocation4]
    $region49: #{tpu_custom_call.1} parent=1 // pred_fallthru
      _
    // Predicated region
    $region50: #{tpu_custom_call.1} parent=1 // pred_check
      _
    $region51: #{tpu_custom_call.1} parent=1 // pred_check_branch
      %3503 = sbr.rel (0) target = $region53
    $region52: #{tpu_custom_call.1} parent=1 // pred_region
      %3505 = dma.done [#allocation4], 128
    $region53: #{tpu_custom_call.1} parent=1 // pred_fallthru
      _
    %3506 = vsyncpa [#allocation3], 1
    %3507 = vsyncpa [#allocation6], 1
    %3508 = vsyncpa [#allocation4], 1

</llo_original>
